<compile_context>
chip_gen: v7x
topology: tpu7x:2x2x1
jax: 0.10.0
libtpu: 0.0.40
codegen_flags: <defaults>
</compile_context>

<pallas_src>
import math

import jax
import jax.numpy as jnp
from jax.experimental import pallas as pl
from jax.experimental.pallas import tpu as pltpu

# ----------------------------- synthetic config -----------------------------
BATCH = 2
SEQ = 8
HIDDEN = 128
NUM_HEADS = 2
HEAD_DIM = HIDDEN // NUM_HEADS          # 64
INTERMEDIATE = 256
NUM_LAYERS = 2
RMS_EPS = 1e-6
ROPE_THETA = 10000.0
USE_CACHE = True
NEG_INF = -1e30                         # large-but-finite additive mask value

BS = BATCH * SEQ                        # flattened token count


# ------------------------------- fused kernel -------------------------------
def lalama_fused_kernel(x_ref, cos_ref, sin_ref, mask_ref,
                        ln1_ref, wq_ref, wqr_ref, wk_ref, wkr_ref, wv_ref, wo_ref,
                        ln2_ref, wg_ref, wu_ref, wd_ref,
                        hid_ref, k_out_ref, v_out_ref):
    layer = pl.program_id(0)

    # Layer 0: seed the VMEM-resident output block (it carries the hidden state
    # across the layer grid axis; HBM writeback happens once at the end).
    @pl.when(layer == 0)
    def _():
        hid_ref[...] = x_ref[...]

    h = hid_ref[...]                                            # (BS, H) f32

    # ---- input RMSNorm (f32) ----
    var = jnp.mean(h * h, axis=-1, keepdims=True)
    xn = h * jax.lax.rsqrt(var + RMS_EPS) * ln1_ref[0]
    xn_b = xn.astype(jnp.bfloat16)

    # ---- Q/K/V projections (bf16 MXU, f32 accumulate); WqR/WkR = rotate_half folded ----
    q_c = jnp.dot(xn_b, wq_ref[0], preferred_element_type=jnp.float32)
    q_r = jnp.dot(xn_b, wqr_ref[0], preferred_element_type=jnp.float32)
    k_c = jnp.dot(xn_b, wk_ref[0], preferred_element_type=jnp.float32)
    k_r = jnp.dot(xn_b, wkr_ref[0], preferred_element_type=jnp.float32)
    v = jnp.dot(xn_b, wv_ref[0], preferred_element_type=jnp.float32)

    # ---- RoPE, lane-dense over the full (BS, H) tile ----
    cos = cos_ref[...]
    sin = sin_ref[...]
    q = q_c * cos + q_r * sin
    k = k_c * cos + k_r * sin

    # ---- present KV cache: lane-dense 128-wide stores (layout fixed in wrapper) ----
    k_out_ref[0] = k
    v_out_ref[0] = v

    # ---- causal attention: batched over batch dim, unrolled over 2 heads ----
    scale = 1.0 / math.sqrt(HEAD_DIM)
    mask = mask_ref[...]                                        # (S, S) additive mask
    wo = wo_ref[0]                                              # (H, H) bf16
    attn_out = jnp.zeros((BS, HIDDEN), jnp.float32)
    for hd in range(NUM_HEADS):
        sl = slice(hd * HEAD_DIM, (hd + 1) * HEAD_DIM)
        qh = q[:, sl].reshape(BATCH, SEQ, HEAD_DIM)
        kh = k[:, sl].reshape(BATCH, SEQ, HEAD_DIM)
        vh = v[:, sl].reshape(BATCH, SEQ, HEAD_DIM)
        # contraction on last dims (no explicit transpose)
        scores = jnp.einsum('bqd,bkd->bqk', qh, kh,
                            preferred_element_type=jnp.float32) * scale + mask
        probs = jax.nn.softmax(scores, axis=-1)
        ctx = jnp.einsum('bqk,bkd->bqd', probs, vh,
                         preferred_element_type=jnp.float32)
        ctx2 = ctx.reshape(BS, HEAD_DIM).astype(jnp.bfloat16)
        # fold the head concat into the O projection: sum_h ctx_h @ Wo[hd*HD:(hd+1)*HD, :]
        attn_out = attn_out + jnp.dot(ctx2, wo[sl, :],
                                      preferred_element_type=jnp.float32)

    # ---- residual + post-attention RMSNorm ----
    h1 = h + attn_out
    var2 = jnp.mean(h1 * h1, axis=-1, keepdims=True)
    h1n = h1 * jax.lax.rsqrt(var2 + RMS_EPS) * ln2_ref[0]
    h1n_b = h1n.astype(jnp.bfloat16)

    # ---- SwiGLU MLP ----
    g = jnp.dot(h1n_b, wg_ref[0], preferred_element_type=jnp.float32)
    u = jnp.dot(h1n_b, wu_ref[0], preferred_element_type=jnp.float32)
    act = (jax.nn.silu(g) * u).astype(jnp.bfloat16)
    mlp = jnp.dot(act, wd_ref[0], preferred_element_type=jnp.float32)

    # carry the hidden state to the next layer grid step
    hid_ref[...] = h1 + mlp


# ------------------------------ host-side glue -------------------------------
def _rope_tables(seq_len, past_len=0):
    """cos/sin tiled to (B*S, H) with heads packed along H and rows ordered b-major."""
    pos = jnp.arange(past_len, past_len + seq_len, dtype=jnp.float32)
    inv_freq = 1.0 / (ROPE_THETA ** (jnp.arange(0, HEAD_DIM, 2, dtype=jnp.float32) / HEAD_DIM))
    freqs = pos[:, None] * inv_freq[None, :]                    # (S, HD/2)
    emb = jnp.concatenate([freqs, freqs], axis=-1)              # (S, HD)
    cos = jnp.tile(jnp.tile(jnp.cos(emb), (1, NUM_HEADS)), (BATCH, 1))   # (B*S, H)
    sin = jnp.tile(jnp.tile(jnp.sin(emb), (1, NUM_HEADS)), (BATCH, 1))
    return cos, sin


def _causal_mask(seq_len, past_len=0):
    q_pos = jnp.arange(seq_len, dtype=jnp.int32)[:, None] + past_len
    k_pos = jnp.arange(past_len + seq_len, dtype=jnp.int32)[None, :]
    return jnp.where(k_pos <= q_pos, 0.0, NEG_INF).astype(jnp.float32)   # (S, S)


def _rotate_half_matrix():
    """R such that (x @ R) == rotate_half(x) for head-packed x of width HIDDEN."""
    half = HEAD_DIM // 2
    z = jnp.zeros((half, half), jnp.float32)
    eye = jnp.eye(half, dtype=jnp.float32)
    blk = jnp.block([[z, eye], [-eye, z]])                      # (HD, HD)
    return jnp.kron(jnp.eye(NUM_HEADS, dtype=jnp.float32), blk)  # (H, H)


def init_params(key):
    """Layer-stacked parameters; matmul weights bf16, rotate_half folded into WqR/WkR."""
    std = 0.02
    R = _rotate_half_matrix()
    per = {n: [] for n in ("ln1", "wq", "wqr", "wk", "wkr", "wv", "wo",
                           "ln2", "wg", "wu", "wd")}
    for _ in range(NUM_LAYERS):
        key, *ks = jax.random.split(key, 8)
        wq = std * jax.random.normal(ks[0], (HIDDEN, HIDDEN), jnp.float32)
        wk = std * jax.random.normal(ks[1], (HIDDEN, HIDDEN), jnp.float32)
        wv = std * jax.random.normal(ks[2], (HIDDEN, HIDDEN), jnp.float32)
        wo = std * jax.random.normal(ks[3], (HIDDEN, HIDDEN), jnp.float32)
        wg = std * jax.random.normal(ks[4], (HIDDEN, INTERMEDIATE), jnp.float32)
        wu = std * jax.random.normal(ks[5], (HIDDEN, INTERMEDIATE), jnp.float32)
        wd = std * jax.random.normal(ks[6], (INTERMEDIATE, HIDDEN), jnp.float32)
        per["ln1"].append(jnp.ones((1, HIDDEN), jnp.float32))
        per["ln2"].append(jnp.ones((1, HIDDEN), jnp.float32))
        per["wq"].append(wq)
        per["wqr"].append(wq @ R)      # exact signed column permutation of wq
        per["wk"].append(wk)
        per["wkr"].append(wk @ R)
        per["wv"].append(wv)
        per["wo"].append(wo)
        per["wg"].append(wg)
        per["wu"].append(wu)
        per["wd"].append(wd)
    params = {}
    for name, lst in per.items():
        arr = jnp.stack(lst)                                    # (L, ...)
        if name not in ("ln1", "ln2"):
            arr = arr.astype(jnp.bfloat16)
        params[name] = arr
    return params


def _fused_forward(x2, cos_full, sin_full, mask, params):
    L = NUM_LAYERS

    def wspec(d0, d1):
        return pl.BlockSpec((1, d0, d1), lambda l: (l, 0, 0))

    def const(d0, d1):
        return pl.BlockSpec((d0, d1), lambda l: (0, 0))

    out_shapes = (
        jax.ShapeDtypeStruct((BS, HIDDEN), jnp.float32),        # final hidden
        jax.ShapeDtypeStruct((L, BS, HIDDEN), jnp.float32),     # present K (lane-dense)
        jax.ShapeDtypeStruct((L, BS, HIDDEN), jnp.float32),     # present V (lane-dense)
    )
    return pl.pallas_call(
        lalama_fused_kernel,
        out_shape=out_shapes,
        grid=(L,),
        in_specs=[
            const(BS, HIDDEN),                 # x (flattened hidden)
            const(BS, HIDDEN),                 # cos
            const(BS, HIDDEN),                 # sin
            const(SEQ, SEQ),                   # causal mask
            wspec(1, HIDDEN),                  # ln1
            wspec(HIDDEN, HIDDEN),             # wq
            wspec(HIDDEN, HIDDEN),             # wq @ R
            wspec(HIDDEN, HIDDEN),             # wk
            wspec(HIDDEN, HIDDEN),             # wk @ R
            wspec(HIDDEN, HIDDEN),             # wv
            wspec(HIDDEN, HIDDEN),             # wo
            wspec(1, HIDDEN),                  # ln2
            wspec(HIDDEN, INTERMEDIATE),       # w_gate
            wspec(HIDDEN, INTERMEDIATE),       # w_up
            wspec(INTERMEDIATE, HIDDEN),       # w_down
        ],
        out_specs=(
            pl.BlockSpec((BS, HIDDEN), lambda l: (0, 0)),       # resident across layers
            pl.BlockSpec((1, BS, HIDDEN), lambda l: (l, 0, 0)),
            pl.BlockSpec((1, BS, HIDDEN), lambda l: (l, 0, 0)),
        ),
        compiler_params=pltpu.CompilerParams(dimension_semantics=("arbitrary",)),
    )(x2, cos_full, sin_full, mask,
      params["ln1"], params["wq"], params["wqr"], params["wk"], params["wkr"],
      params["wv"], params["wo"], params["ln2"], params["wg"], params["wu"], params["wd"])


@jax.jit
def _lalama_forward_jit(x, params):
    B, S, H = x.shape
    x2 = x.reshape(B * S, H)
    cos_full, sin_full = _rope_tables(S, past_len=0)
    mask = _causal_mask(S, past_len=0)
    hidden2, k_all, v_all = _fused_forward(x2, cos_full, sin_full, mask, params)
    hidden = hidden2.reshape(B, S, H)
    # layout plumbing outside the hot kernel: (L, B*S, H) -> (L, B, NH, S, HD)
    k_all = k_all.reshape(NUM_LAYERS, B, S, NUM_HEADS, HEAD_DIM).transpose(0, 1, 3, 2, 4)
    v_all = v_all.reshape(NUM_LAYERS, B, S, NUM_HEADS, HEAD_DIM).transpose(0, 1, 3, 2, 4)
    return hidden, k_all, v_all


def lalama_forward(x, params):
    """Mirrors Lalama.forward with past_key_values=None, eval mode (dropout = identity)."""
    hidden, k_all, v_all = _lalama_forward_jit(x, params)
    present_key_values = [(k_all[l], v_all[l]) for l in range(NUM_LAYERS)]
    if USE_CACHE:
        return hidden, present_key_values
    return (hidden,)


if __name__ == "__main__":
    key = jax.random.PRNGKey(0)
    kx, kp = jax.random.split(key)
    x = jax.random.normal(kx, (BATCH, SEQ, HIDDEN), jnp.float32)
    params = init_params(kp)

    hidden, present_kvs = lalama_forward(x, params)
    hidden = jax.block_until_ready(hidden)
    for (k_, v_) in present_kvs:
        jax.block_until_ready(k_)
        jax.block_until_ready(v_)

    assert hidden.shape == (BATCH, SEQ, HIDDEN)
    assert len(present_kvs) == NUM_LAYERS
    assert present_kvs[0][0].shape == (BATCH, NUM_HEADS, SEQ, HEAD_DIM)
    assert present_kvs[0][1].shape == (BATCH, NUM_HEADS, SEQ, HEAD_DIM)
    assert bool(jnp.all(jnp.isfinite(hidden)))
    print("KERNEL_OK")
</pallas_src>

<mosaic_0001>
module attributes {stable_mosaic.version = 11 : i64} {
  func.func @lalama_fused_kernel(%arg0: i32, %arg1: memref<16x128xf32, #tpu.memory_space<vmem>>, %arg2: memref<16x128xf32, #tpu.memory_space<vmem>>, %arg3: memref<16x128xf32, #tpu.memory_space<vmem>>, %arg4: memref<8x8xf32, #tpu.memory_space<vmem>>, %arg5: memref<1x1x128xf32, #tpu.memory_space<vmem>>, %arg6: memref<1x128x128xbf16, #tpu.memory_space<vmem>>, %arg7: memref<1x128x128xbf16, #tpu.memory_space<vmem>>, %arg8: memref<1x128x128xbf16, #tpu.memory_space<vmem>>, %arg9: memref<1x128x128xbf16, #tpu.memory_space<vmem>>, %arg10: memref<1x128x128xbf16, #tpu.memory_space<vmem>>, %arg11: memref<1x128x128xbf16, #tpu.memory_space<vmem>>, %arg12: memref<1x1x128xf32, #tpu.memory_space<vmem>>, %arg13: memref<1x128x256xbf16, #tpu.memory_space<vmem>>, %arg14: memref<1x128x256xbf16, #tpu.memory_space<vmem>>, %arg15: memref<1x256x128xbf16, #tpu.memory_space<vmem>>, %arg16: memref<16x128xf32, #tpu.memory_space<vmem>>, %arg17: memref<1x16x128xf32, #tpu.memory_space<vmem>>, %arg18: memref<1x16x128xf32, #tpu.memory_space<vmem>>) attributes {dimension_semantics = [#tpu.dimension_semantics<arbitrary>], iteration_bounds = array<i64: 2>, scalar_prefetch = 0 : i64, scratch_operands = 0 : i64, tpu.core_type = #tpu.core_type<tc>, window_params = [{pipeline_mode = #tpu.pipeline_mode<synchronous>, transform_indices = @transform_0, window_bounds = array<i64: 16, 128>}, {pipeline_mode = #tpu.pipeline_mode<synchronous>, transform_indices = @transform_1, window_bounds = array<i64: 16, 128>}, {pipeline_mode = #tpu.pipeline_mode<synchronous>, transform_indices = @transform_2, window_bounds = array<i64: 16, 128>}, {pipeline_mode = #tpu.pipeline_mode<synchronous>, transform_indices = @transform_3, window_bounds = array<i64: 8, 8>}, {transform_indices = @transform_4, window_bounds = array<i64: 1, 1, 128>}, {transform_indices = @transform_5, window_bounds = array<i64: 1, 128, 128>}, {transform_indices = @transform_6, window_bounds = array<i64: 1, 128, 128>}, {transform_indices = @transform_7, window_bounds = array<i64: 1, 128, 128>}, {transform_indices = @transform_8, window_bounds = array<i64: 1, 128, 128>}, {transform_indices = @transform_9, window_bounds = array<i64: 1, 128, 128>}, {transform_indices = @transform_10, window_bounds = array<i64: 1, 128, 128>}, {transform_indices = @transform_11, window_bounds = array<i64: 1, 1, 128>}, {transform_indices = @transform_12, window_bounds = array<i64: 1, 128, 256>}, {transform_indices = @transform_13, window_bounds = array<i64: 1, 128, 256>}, {transform_indices = @transform_14, window_bounds = array<i64: 1, 256, 128>}, {pipeline_mode = #tpu.pipeline_mode<synchronous>, transform_indices = @transform_15, window_bounds = array<i64: 16, 128>}, {transform_indices = @transform_16, window_bounds = array<i64: 1, 16, 128>}, {transform_indices = @transform_17, window_bounds = array<i64: 1, 16, 128>}]} {
    %c0_i32 = arith.constant 0 : i32
    %0 = arith.cmpi eq, %arg0, %c0_i32 : i32
    %1 = arith.extui %0 : i1 to i32
    %c0_i32_0 = arith.constant 0 : i32
    %2 = arith.cmpi ne, %1, %c0_i32_0 : i32
    scf.if %2 {
      %c0_78 = arith.constant 0 : index
      %c0_79 = arith.constant 0 : index
      %145 = vector.load %arg1[%c0_78, %c0_79] : memref<16x128xf32, #tpu.memory_space<vmem>>, vector<16x128xf32>
      %c0_80 = arith.constant 0 : index
      %c0_81 = arith.constant 0 : index
      %146 = vector.load %arg16[%c0_80, %c0_81] : memref<16x128xf32, #tpu.memory_space<vmem>>, vector<16x128xf32>
      tpu.vector_store %arg16[%c0_80, %c0_81], %145 {strides = array<i32>} : memref<16x128xf32, #tpu.memory_space<vmem>>, vector<16x128xf32>,
    } else {
    }
    %c0 = arith.constant 0 : index
    %c0_1 = arith.constant 0 : index
    %3 = vector.load %arg16[%c0, %c0_1] : memref<16x128xf32, #tpu.memory_space<vmem>>, vector<16x128xf32>
    %4 = arith.mulf %3, %3 : vector<16x128xf32>
    %cst = arith.constant dense<0.000000e+00> : vector<16xf32>
    %5 = vector.multi_reduction <add>, %4, %cst [1] : vector<16x128xf32> to vector<16xf32>
    %6 = vector.shape_cast %5 : vector<16xf32> to vector<16x1xf32>
    %cst_2 = arith.constant 1.280000e+02 : f32
    %7 = vector.broadcast %cst_2 : f32 to vector<16x1xf32>
    %8 = arith.divf %6, %7 : vector<16x1xf32>
    %cst_3 = arith.constant 9.99999997E-7 : f32
    %9 = vector.broadcast %cst_3 : f32 to vector<16x1xf32>
    %10 = arith.addf %8, %9 : vector<16x1xf32>
    %11 = math.rsqrt %10 : vector<16x1xf32>
    %12 = vector.broadcast %11 : vector<16x1xf32> to vector<16x128xf32>
    %13 = arith.mulf %3, %12 : vector<16x128xf32>
    %c0_4 = arith.constant 0 : index
    %c0_5 = arith.constant 0 : index
    %c0_6 = arith.constant 0 : index
    %14 = vector.load %arg5[%c0_4, %c0_5, %c0_6] : memref<1x1x128xf32, #tpu.memory_space<vmem>>, vector<1x1x128xf32>
    %15 = vector.shape_cast %14 : vector<1x1x128xf32> to vector<1x128xf32>
    %16 = vector.broadcast %15 : vector<1x128xf32> to vector<16x128xf32>
    %17 = arith.mulf %13, %16 : vector<16x128xf32>
    %18 = arith.truncf %17 : vector<16x128xf32> to vector<16x128xbf16>
    %c0_7 = arith.constant 0 : index
    %c0_8 = arith.constant 0 : index
    %c0_9 = arith.constant 0 : index
    %19 = vector.load %arg6[%c0_7, %c0_8, %c0_9] : memref<1x128x128xbf16, #tpu.memory_space<vmem>>, vector<1x128x128xbf16>
    %20 = vector.shape_cast %19 : vector<1x128x128xbf16> to vector<128x128xbf16>
    %cst_10 = arith.constant dense<0.000000e+00> : vector<16x128xf32>
    %21 = tpu.matmul %18, %20, %cst_10 {dimension_numbers = #tpu.dot_dimension_numbers<[1], [0], [0], [1], [0, 0, 1, 1], [], []>} : vector<16x128xbf16>, vector<128x128xbf16>, vector<16x128xf32> -> vector<16x128xf32>
    %c0_11 = arith.constant 0 : index
    %c0_12 = arith.constant 0 : index
    %c0_13 = arith.constant 0 : index
    %22 = vector.load %arg7[%c0_11, %c0_12, %c0_13] : memref<1x128x128xbf16, #tpu.memory_space<vmem>>, vector<1x128x128xbf16>
    %23 = vector.shape_cast %22 : vector<1x128x128xbf16> to vector<128x128xbf16>
    %cst_14 = arith.constant dense<0.000000e+00> : vector<16x128xf32>
    %24 = tpu.matmul %18, %23, %cst_14 {dimension_numbers = #tpu.dot_dimension_numbers<[1], [0], [0], [1], [0, 0, 1, 1], [], []>} : vector<16x128xbf16>, vector<128x128xbf16>, vector<16x128xf32> -> vector<16x128xf32>
    %c0_15 = arith.constant 0 : index
    %c0_16 = arith.constant 0 : index
    %c0_17 = arith.constant 0 : index
    %25 = vector.load %arg8[%c0_15, %c0_16, %c0_17] : memref<1x128x128xbf16, #tpu.memory_space<vmem>>, vector<1x128x128xbf16>
    %26 = vector.shape_cast %25 : vector<1x128x128xbf16> to vector<128x128xbf16>
    %cst_18 = arith.constant dense<0.000000e+00> : vector<16x128xf32>
    %27 = tpu.matmul %18, %26, %cst_18 {dimension_numbers = #tpu.dot_dimension_numbers<[1], [0], [0], [1], [0, 0, 1, 1], [], []>} : vector<16x128xbf16>, vector<128x128xbf16>, vector<16x128xf32> -> vector<16x128xf32>
    %c0_19 = arith.constant 0 : index
    %c0_20 = arith.constant 0 : index
    %c0_21 = arith.constant 0 : index
    %28 = vector.load %arg9[%c0_19, %c0_20, %c0_21] : memref<1x128x128xbf16, #tpu.memory_space<vmem>>, vector<1x128x128xbf16>
    %29 = vector.shape_cast %28 : vector<1x128x128xbf16> to vector<128x128xbf16>
    %cst_22 = arith.constant dense<0.000000e+00> : vector<16x128xf32>
    %30 = tpu.matmul %18, %29, %cst_22 {dimension_numbers = #tpu.dot_dimension_numbers<[1], [0], [0], [1], [0, 0, 1, 1], [], []>} : vector<16x128xbf16>, vector<128x128xbf16>, vector<16x128xf32> -> vector<16x128xf32>
    %c0_23 = arith.constant 0 : index
    %c0_24 = arith.constant 0 : index
    %c0_25 = arith.constant 0 : index
    %31 = vector.load %arg10[%c0_23, %c0_24, %c0_25] : memref<1x128x128xbf16, #tpu.memory_space<vmem>>, vector<1x128x128xbf16>
    %32 = vector.shape_cast %31 : vector<1x128x128xbf16> to vector<128x128xbf16>
    %cst_26 = arith.constant dense<0.000000e+00> : vector<16x128xf32>
    %33 = tpu.matmul %18, %32, %cst_26 {dimension_numbers = #tpu.dot_dimension_numbers<[1], [0], [0], [1], [0, 0, 1, 1], [], []>} : vector<16x128xbf16>, vector<128x128xbf16>, vector<16x128xf32> -> vector<16x128xf32>
    %c0_27 = arith.constant 0 : index
    %c0_28 = arith.constant 0 : index
    %34 = vector.load %arg2[%c0_27, %c0_28] : memref<16x128xf32, #tpu.memory_space<vmem>>, vector<16x128xf32>
    %c0_29 = arith.constant 0 : index
    %c0_30 = arith.constant 0 : index
    %35 = vector.load %arg3[%c0_29, %c0_30] : memref<16x128xf32, #tpu.memory_space<vmem>>, vector<16x128xf32>
    %36 = arith.mulf %21, %34 : vector<16x128xf32>
    %37 = arith.mulf %24, %35 : vector<16x128xf32>
    %38 = arith.addf %36, %37 : vector<16x128xf32>
    %39 = arith.mulf %27, %34 : vector<16x128xf32>
    %40 = arith.mulf %30, %35 : vector<16x128xf32>
    %41 = arith.addf %39, %40 : vector<16x128xf32>
    %c0_31 = arith.constant 0 : index
    %c0_32 = arith.constant 0 : index
    %c0_33 = arith.constant 0 : index
    %42 = vector.load %arg17[%c0_31, %c0_32, %c0_33] : memref<1x16x128xf32, #tpu.memory_space<vmem>>, vector<1x16x128xf32>
    %43 = vector.shape_cast %42 : vector<1x16x128xf32> to vector<16x128xf32>
    %44 = vector.shape_cast %41 : vector<16x128xf32> to vector<1x16x128xf32>
    tpu.vector_store %arg17[%c0_31, %c0_32, %c0_33], %44 {strides = array<i32>} : memref<1x16x128xf32, #tpu.memory_space<vmem>>, vector<1x16x128xf32>,
    %c0_34 = arith.constant 0 : index
    %c0_35 = arith.constant 0 : index
    %c0_36 = arith.constant 0 : index
    %45 = vector.load %arg18[%c0_34, %c0_35, %c0_36] : memref<1x16x128xf32, #tpu.memory_space<vmem>>, vector<1x16x128xf32>
    %46 = vector.shape_cast %45 : vector<1x16x128xf32> to vector<16x128xf32>
    %47 = vector.shape_cast %33 : vector<16x128xf32> to vector<1x16x128xf32>
    tpu.vector_store %arg18[%c0_34, %c0_35, %c0_36], %47 {strides = array<i32>} : memref<1x16x128xf32, #tpu.memory_space<vmem>>, vector<1x16x128xf32>,
    %c0_37 = arith.constant 0 : index
    %c0_38 = arith.constant 0 : index
    %48 = vector.load %arg4[%c0_37, %c0_38] : memref<8x8xf32, #tpu.memory_space<vmem>>, vector<8x8xf32>
    %c0_39 = arith.constant 0 : index
    %c0_40 = arith.constant 0 : index
    %c0_41 = arith.constant 0 : index
    %49 = vector.load %arg11[%c0_39, %c0_40, %c0_41] : memref<1x128x128xbf16, #tpu.memory_space<vmem>>, vector<1x128x128xbf16>
    %50 = vector.shape_cast %49 : vector<1x128x128xbf16> to vector<128x128xbf16>
    %cst_42 = arith.constant 0.000000e+00 : f32
    %51 = vector.broadcast %cst_42 : f32 to vector<16x128xf32>
    %52 = vector.extract_strided_slice %38 {offsets = [0, 0], sizes = [16, 64], strides = [1, 1]} : vector<16x128xf32> to vector<16x64xf32>
    %53 = vector.shape_cast %52 : vector<16x64xf32> to vector<2x8x64xf32>
    %54 = vector.extract_strided_slice %41 {offsets = [0, 0], sizes = [16, 64], strides = [1, 1]} : vector<16x128xf32> to vector<16x64xf32>
    %55 = vector.shape_cast %54 : vector<16x64xf32> to vector<2x8x64xf32>
    %56 = vector.extract_strided_slice %33 {offsets = [0, 0], sizes = [16, 64], strides = [1, 1]} : vector<16x128xf32> to vector<16x64xf32>
    %57 = vector.shape_cast %56 : vector<16x64xf32> to vector<2x8x64xf32>
    "tpu.trace_start"() <{level = 10 : i32, message = "bqd,bkd->bqk"}> : () -> ()
    %cst_43 = arith.constant dense<0.000000e+00> : vector<2x8x8xf32>
    %58 = tpu.matmul %53, %55, %cst_43 {dimension_numbers = #tpu.dot_dimension_numbers<[2], [2], [1], [1], [0, 0, 0, 1, 1, 1], [0], [0]>} : vector<2x8x64xf32>, vector<2x8x64xf32>, vector<2x8x8xf32> -> vector<2x8x8xf32>
    "tpu.trace_stop"() : () -> ()
    %cst_44 = arith.constant 1.250000e-01 : f32
    %59 = vector.broadcast %cst_44 : f32 to vector<2x8x8xf32>
    %60 = arith.mulf %58, %59 : vector<2x8x8xf32>
    %61 = vector.shape_cast %48 : vector<8x8xf32> to vector<1x8x8xf32>
    %62 = vector.broadcast %61 : vector<1x8x8xf32> to vector<2x8x8xf32>
    %63 = arith.addf %60, %62 : vector<2x8x8xf32>
    %cst_45 = arith.constant dense<0xFF800000> : vector<2x8xf32>
    %64 = vector.multi_reduction <maximumf>, %63, %cst_45 [2] : vector<2x8x8xf32> to vector<2x8xf32>
    %cst_46 = arith.constant 0xFF800000 : f32
    %65 = vector.broadcast %cst_46 : f32 to vector<2x8xf32>
    %66 = arith.maximumf %65, %64 : vector<2x8xf32>
    %67 = vector.shape_cast %66 : vector<2x8xf32> to vector<2x8x1xf32>
    %68 = vector.broadcast %67 : vector<2x8x1xf32> to vector<2x8x8xf32>
    %69 = arith.subf %63, %68 : vector<2x8x8xf32>
    %70 = math.exp %69 : vector<2x8x8xf32>
    %cst_47 = arith.constant dense<0.000000e+00> : vector<2x8xf32>
    %71 = vector.multi_reduction <add>, %70, %cst_47 [2] : vector<2x8x8xf32> to vector<2x8xf32>
    %72 = vector.shape_cast %71 : vector<2x8xf32> to vector<2x8x1xf32>
    %73 = vector.broadcast %72 : vector<2x8x1xf32> to vector<2x8x8xf32>
    %74 = arith.divf %70, %73 : vector<2x8x8xf32>
    "tpu.trace_start"() <{level = 10 : i32, message = "bqk,bkd->bqd"}> : () -> ()
    %cst_48 = arith.constant dense<0.000000e+00> : vector<2x8x64xf32>
    %75 = tpu.matmul %74, %57, %cst_48 {dimension_numbers = #tpu.dot_dimension_numbers<[2], [1], [1], [2], [0, 0, 0, 1, 1, 2], [0], [0]>} : vector<2x8x8xf32>, vector<2x8x64xf32>, vector<2x8x64xf32> -> vector<2x8x64xf32>
    "tpu.trace_stop"() : () -> ()
    %76 = vector.shape_cast %75 : vector<2x8x64xf32> to vector<16x64xf32>
    %77 = arith.truncf %76 : vector<16x64xf32> to vector<16x64xbf16>
    %78 = vector.extract_strided_slice %50 {offsets = [0, 0], sizes = [64, 128], strides = [1, 1]} : vector<128x128xbf16> to vector<64x128xbf16>
    %cst_49 = arith.constant dense<0.000000e+00> : vector<16x128xf32>
    %79 = tpu.matmul %77, %78, %cst_49 {dimension_numbers = #tpu.dot_dimension_numbers<[1], [0], [0], [1], [0, 0, 1, 1], [], []>} : vector<16x64xbf16>, vector<64x128xbf16>, vector<16x128xf32> -> vector<16x128xf32>
    %80 = arith.addf %51, %79 : vector<16x128xf32>
    %81 = vector.extract_strided_slice %38 {offsets = [0, 64], sizes = [16, 64], strides = [1, 1]} : vector<16x128xf32> to vector<16x64xf32>
    %82 = vector.shape_cast %81 : vector<16x64xf32> to vector<2x8x64xf32>
    %83 = vector.extract_strided_slice %41 {offsets = [0, 64], sizes = [16, 64], strides = [1, 1]} : vector<16x128xf32> to vector<16x64xf32>
    %84 = vector.shape_cast %83 : vector<16x64xf32> to vector<2x8x64xf32>
    %85 = vector.extract_strided_slice %33 {offsets = [0, 64], sizes = [16, 64], strides = [1, 1]} : vector<16x128xf32> to vector<16x64xf32>
    %86 = vector.shape_cast %85 : vector<16x64xf32> to vector<2x8x64xf32>
    "tpu.trace_start"() <{level = 10 : i32, message = "bqd,bkd->bqk"}> : () -> ()
    %cst_50 = arith.constant dense<0.000000e+00> : vector<2x8x8xf32>
    %87 = tpu.matmul %82, %84, %cst_50 {dimension_numbers = #tpu.dot_dimension_numbers<[2], [2], [1], [1], [0, 0, 0, 1, 1, 1], [0], [0]>} : vector<2x8x64xf32>, vector<2x8x64xf32>, vector<2x8x8xf32> -> vector<2x8x8xf32>
    "tpu.trace_stop"() : () -> ()
    %cst_51 = arith.constant 1.250000e-01 : f32
    %88 = vector.broadcast %cst_51 : f32 to vector<2x8x8xf32>
    %89 = arith.mulf %87, %88 : vector<2x8x8xf32>
    %90 = vector.shape_cast %48 : vector<8x8xf32> to vector<1x8x8xf32>
    %91 = vector.broadcast %90 : vector<1x8x8xf32> to vector<2x8x8xf32>
    %92 = arith.addf %89, %91 : vector<2x8x8xf32>
    %cst_52 = arith.constant dense<0xFF800000> : vector<2x8xf32>
    %93 = vector.multi_reduction <maximumf>, %92, %cst_52 [2] : vector<2x8x8xf32> to vector<2x8xf32>
    %cst_53 = arith.constant 0xFF800000 : f32
    %94 = vector.broadcast %cst_53 : f32 to vector<2x8xf32>
    %95 = arith.maximumf %94, %93 : vector<2x8xf32>
    %96 = vector.shape_cast %95 : vector<2x8xf32> to vector<2x8x1xf32>
    %97 = vector.broadcast %96 : vector<2x8x1xf32> to vector<2x8x8xf32>
    %98 = arith.subf %92, %97 : vector<2x8x8xf32>
    %99 = math.exp %98 : vector<2x8x8xf32>
    %cst_54 = arith.constant dense<0.000000e+00> : vector<2x8xf32>
    %100 = vector.multi_reduction <add>, %99, %cst_54 [2] : vector<2x8x8xf32> to vector<2x8xf32>
    %101 = vector.shape_cast %100 : vector<2x8xf32> to vector<2x8x1xf32>
    %102 = vector.broadcast %101 : vector<2x8x1xf32> to vector<2x8x8xf32>
    %103 = arith.divf %99, %102 : vector<2x8x8xf32>
    "tpu.trace_start"() <{level = 10 : i32, message = "bqk,bkd->bqd"}> : () -> ()
    %cst_55 = arith.constant dense<0.000000e+00> : vector<2x8x64xf32>
    %104 = tpu.matmul %103, %86, %cst_55 {dimension_numbers = #tpu.dot_dimension_numbers<[2], [1], [1], [2], [0, 0, 0, 1, 1, 2], [0], [0]>} : vector<2x8x8xf32>, vector<2x8x64xf32>, vector<2x8x64xf32> -> vector<2x8x64xf32>
    "tpu.trace_stop"() : () -> ()
    %105 = vector.shape_cast %104 : vector<2x8x64xf32> to vector<16x64xf32>
    %106 = arith.truncf %105 : vector<16x64xf32> to vector<16x64xbf16>
    %107 = vector.extract_strided_slice %50 {offsets = [64, 0], sizes = [64, 128], strides = [1, 1]} : vector<128x128xbf16> to vector<64x128xbf16>
    %cst_56 = arith.constant dense<0.000000e+00> : vector<16x128xf32>
    %108 = tpu.matmul %106, %107, %cst_56 {dimension_numbers = #tpu.dot_dimension_numbers<[1], [0], [0], [1], [0, 0, 1, 1], [], []>} : vector<16x64xbf16>, vector<64x128xbf16>, vector<16x128xf32> -> vector<16x128xf32>
    %109 = arith.addf %80, %108 : vector<16x128xf32>
    %110 = arith.addf %3, %109 : vector<16x128xf32>
    %111 = arith.mulf %110, %110 : vector<16x128xf32>
    %cst_57 = arith.constant dense<0.000000e+00> : vector<16xf32>
    %112 = vector.multi_reduction <add>, %111, %cst_57 [1] : vector<16x128xf32> to vector<16xf32>
    %113 = vector.shape_cast %112 : vector<16xf32> to vector<16x1xf32>
    %cst_58 = arith.constant 1.280000e+02 : f32
    %114 = vector.broadcast %cst_58 : f32 to vector<16x1xf32>
    %115 = arith.divf %113, %114 : vector<16x1xf32>
    %cst_59 = arith.constant 9.99999997E-7 : f32
    %116 = vector.broadcast %cst_59 : f32 to vector<16x1xf32>
    %117 = arith.addf %115, %116 : vector<16x1xf32>
    %118 = math.rsqrt %117 : vector<16x1xf32>
    %119 = vector.broadcast %118 : vector<16x1xf32> to vector<16x128xf32>
    %120 = arith.mulf %110, %119 : vector<16x128xf32>
    %c0_60 = arith.constant 0 : index
    %c0_61 = arith.constant 0 : index
    %c0_62 = arith.constant 0 : index
    %121 = vector.load %arg12[%c0_60, %c0_61, %c0_62] : memref<1x1x128xf32, #tpu.memory_space<vmem>>, vector<1x1x128xf32>
    %122 = vector.shape_cast %121 : vector<1x1x128xf32> to vector<1x128xf32>
    %123 = vector.broadcast %122 : vector<1x128xf32> to vector<16x128xf32>
    %124 = arith.mulf %120, %123 : vector<16x128xf32>
    %125 = arith.truncf %124 : vector<16x128xf32> to vector<16x128xbf16>
    %c0_63 = arith.constant 0 : index
    %c0_64 = arith.constant 0 : index
    %c0_65 = arith.constant 0 : index
    %126 = vector.load %arg13[%c0_63, %c0_64, %c0_65] : memref<1x128x256xbf16, #tpu.memory_space<vmem>>, vector<1x128x256xbf16>
    %127 = vector.shape_cast %126 : vector<1x128x256xbf16> to vector<128x256xbf16>
    %cst_66 = arith.constant dense<0.000000e+00> : vector<16x256xf32>
    %128 = tpu.matmul %125, %127, %cst_66 {dimension_numbers = #tpu.dot_dimension_numbers<[1], [0], [0], [1], [0, 0, 1, 1], [], []>} : vector<16x128xbf16>, vector<128x256xbf16>, vector<16x256xf32> -> vector<16x256xf32>
    %c0_67 = arith.constant 0 : index
    %c0_68 = arith.constant 0 : index
    %c0_69 = arith.constant 0 : index
    %129 = vector.load %arg14[%c0_67, %c0_68, %c0_69] : memref<1x128x256xbf16, #tpu.memory_space<vmem>>, vector<1x128x256xbf16>
    %130 = vector.shape_cast %129 : vector<1x128x256xbf16> to vector<128x256xbf16>
    %cst_70 = arith.constant dense<0.000000e+00> : vector<16x256xf32>
    %131 = tpu.matmul %125, %130, %cst_70 {dimension_numbers = #tpu.dot_dimension_numbers<[1], [0], [0], [1], [0, 0, 1, 1], [], []>} : vector<16x128xbf16>, vector<128x256xbf16>, vector<16x256xf32> -> vector<16x256xf32>
    %132 = arith.negf %128 : vector<16x256xf32>
    %133 = math.exp %132 : vector<16x256xf32>
    %cst_71 = arith.constant 1.000000e+00 : f32
    %134 = vector.broadcast %cst_71 : f32 to vector<16x256xf32>
    %135 = arith.addf %134, %133 : vector<16x256xf32>
    %136 = arith.divf %134, %135 : vector<16x256xf32>
    %137 = arith.mulf %128, %136 : vector<16x256xf32>
    %138 = arith.mulf %137, %131 : vector<16x256xf32>
    %139 = arith.truncf %138 : vector<16x256xf32> to vector<16x256xbf16>
    %c0_72 = arith.constant 0 : index
    %c0_73 = arith.constant 0 : index
    %c0_74 = arith.constant 0 : index
    %140 = vector.load %arg15[%c0_72, %c0_73, %c0_74] : memref<1x256x128xbf16, #tpu.memory_space<vmem>>, vector<1x256x128xbf16>
    %141 = vector.shape_cast %140 : vector<1x256x128xbf16> to vector<256x128xbf16>
    %cst_75 = arith.constant dense<0.000000e+00> : vector<16x128xf32>
    %142 = tpu.matmul %139, %141, %cst_75 {dimension_numbers = #tpu.dot_dimension_numbers<[1], [0], [0], [1], [0, 0, 1, 1], [], []>} : vector<16x256xbf16>, vector<256x128xbf16>, vector<16x128xf32> -> vector<16x128xf32>
    %143 = arith.addf %110, %142 : vector<16x128xf32>
    %c0_76 = arith.constant 0 : index
    %c0_77 = arith.constant 0 : index
    %144 = vector.load %arg16[%c0_76, %c0_77] : memref<16x128xf32, #tpu.memory_space<vmem>>, vector<16x128xf32>
    tpu.vector_store %arg16[%c0_76, %c0_77], %143 {strides = array<i32>} : memref<16x128xf32, #tpu.memory_space<vmem>>, vector<16x128xf32>,
    return
  }
  func.func @transform_0(%arg0: i32) -> (i32, i32) {
    %c0_i32 = arith.constant 0 : i32
    %c0_i32_0 = arith.constant 0 : i32
    %c0_i32_1 = arith.constant 0 : i32
    return %c0_i32, %c0_i32_0 : i32, i32
  }
  func.func @transform_1(%arg0: i32) -> (i32, i32) {
    %c0_i32 = arith.constant 0 : i32
    %c0_i32_0 = arith.constant 0 : i32
    %c0_i32_1 = arith.constant 0 : i32
    return %c0_i32, %c0_i32_0 : i32, i32
  }
  func.func @transform_2(%arg0: i32) -> (i32, i32) {
    %c0_i32 = arith.constant 0 : i32
    %c0_i32_0 = arith.constant 0 : i32
    %c0_i32_1 = arith.constant 0 : i32
    return %c0_i32, %c0_i32_0 : i32, i32
  }
  func.func @transform_3(%arg0: i32) -> (i32, i32) {
    %c0_i32 = arith.constant 0 : i32
    %c0_i32_0 = arith.constant 0 : i32
    %c0_i32_1 = arith.constant 0 : i32
    return %c0_i32, %c0_i32_0 : i32, i32
  }
  func.func @transform_4(%arg0: i32) -> (i32, i32, i32) {
    %c0_i32 = arith.constant 0 : i32
    %c0_i32_0 = arith.constant 0 : i32
    %c0_i32_1 = arith.constant 0 : i32
    return %arg0, %c0_i32, %c0_i32_0 : i32, i32, i32
  }
  func.func @transform_5(%arg0: i32) -> (i32, i32, i32) {
    %c0_i32 = arith.constant 0 : i32
    %c0_i32_0 = arith.constant 0 : i32
    %c0_i32_1 = arith.constant 0 : i32
    return %arg0, %c0_i32, %c0_i32_0 : i32, i32, i32
  }
  func.func @transform_6(%arg0: i32) -> (i32, i32, i32) {
    %c0_i32 = arith.constant 0 : i32
    %c0_i32_0 = arith.constant 0 : i32
    %c0_i32_1 = arith.constant 0 : i32
    return %arg0, %c0_i32, %c0_i32_0 : i32, i32, i32
  }
  func.func @transform_7(%arg0: i32) -> (i32, i32, i32) {
    %c0_i32 = arith.constant 0 : i32
    %c0_i32_0 = arith.constant 0 : i32
    %c0_i32_1 = arith.constant 0 : i32
    return %arg0, %c0_i32, %c0_i32_0 : i32, i32, i32
  }
  func.func @transform_8(%arg0: i32) -> (i32, i32, i32) {
    %c0_i32 = arith.constant 0 : i32
    %c0_i32_0 = arith.constant 0 : i32
    %c0_i32_1 = arith.constant 0 : i32
    return %arg0, %c0_i32, %c0_i32_0 : i32, i32, i32
  }
  func.func @transform_9(%arg0: i32) -> (i32, i32, i32) {
    %c0_i32 = arith.constant 0 : i32
    %c0_i32_0 = arith.constant 0 : i32
    %c0_i32_1 = arith.constant 0 : i32
    return %arg0, %c0_i32, %c0_i32_0 : i32, i32, i32
  }
  func.func @transform_10(%arg0: i32) -> (i32, i32, i32) {
    %c0_i32 = arith.constant 0 : i32
    %c0_i32_0 = arith.constant 0 : i32
    %c0_i32_1 = arith.constant 0 : i32
    return %arg0, %c0_i32, %c0_i32_0 : i32, i32, i32
  }
  func.func @transform_11(%arg0: i32) -> (i32, i32, i32) {
    %c0_i32 = arith.constant 0 : i32
    %c0_i32_0 = arith.constant 0 : i32
    %c0_i32_1 = arith.constant 0 : i32
    return %arg0, %c0_i32, %c0_i32_0 : i32, i32, i32
  }
  func.func @transform_12(%arg0: i32) -> (i32, i32, i32) {
    %c0_i32 = arith.constant 0 : i32
    %c0_i32_0 = arith.constant 0 : i32
    %c0_i32_1 = arith.constant 0 : i32
    return %arg0, %c0_i32, %c0_i32_0 : i32, i32, i32
  }
  func.func @transform_13(%arg0: i32) -> (i32, i32, i32) {
    %c0_i32 = arith.constant 0 : i32
    %c0_i32_0 = arith.constant 0 : i32
    %c0_i32_1 = arith.constant 0 : i32
    return %arg0, %c0_i32, %c0_i32_0 : i32, i32, i32
  }
  func.func @transform_14(%arg0: i32) -> (i32, i32, i32) {
    %c0_i32 = arith.constant 0 : i32
    %c0_i32_0 = arith.constant 0 : i32
    %c0_i32_1 = arith.constant 0 : i32
    return %arg0, %c0_i32, %c0_i32_0 : i32, i32, i32
  }
  func.func @transform_15(%arg0: i32) -> (i32, i32) {
    %c0_i32 = arith.constant 0 : i32
    %c0_i32_0 = arith.constant 0 : i32
    %c0_i32_1 = arith.constant 0 : i32
    return %c0_i32, %c0_i32_0 : i32, i32
  }
  func.func @transform_16(%arg0: i32) -> (i32, i32, i32) {
    %c0_i32 = arith.constant 0 : i32
    %c0_i32_0 = arith.constant 0 : i32
    %c0_i32_1 = arith.constant 0 : i32
    return %arg0, %c0_i32, %c0_i32_0 : i32, i32, i32
  }
  func.func @transform_17(%arg0: i32) -> (i32, i32, i32) {
    %c0_i32 = arith.constant 0 : i32
    %c0_i32_0 = arith.constant 0 : i32
    %c0_i32_1 = arith.constant 0 : i32
    return %arg0, %c0_i32, %c0_i32_0 : i32, i32, i32
  }
}

</mosaic_0001>

<llo_original>
// kernel: _lalama_forward_jit.1
$region0: #{_lalama_forward_jit.1}
  #allocation0 [shape = 'u32[]', space=smem, size = 0x4, offset = 0x4, fixed_abs, tag = 'smem constant byte address 0x4 - core index']
  #allocation1 [shape = 'u32[144,128]{1,0:T(1,128)}', space=vmem, size = 0x12000, scoped, tag = 'internal scratch']
  %s0 = inlined_call_operand.vmem [shape: f32[16,128], index: 0, kind: input, shape index: {}]
  %s1 = inlined_call_operand.vmem [shape: f32[16,128], index: 1, kind: input, shape index: {}]
  %s2 = inlined_call_operand.vmem [shape: f32[16,128], index: 2, kind: input, shape index: {}]
  %s3 = inlined_call_operand.vmem [shape: f32[8,8], index: 3, kind: input, shape index: {}]
  %s4 = inlined_call_operand.vmem [shape: f32[2,1,128], index: 4, kind: input, shape index: {}]
  %s5 = inlined_call_operand.vmem [shape: bf16[2,128,128], index: 5, kind: input, shape index: {}]
  %s6 = inlined_call_operand.hbm [shape: bf16[2,128,128], index: 6, kind: input, shape index: {}]
  %s7 = inlined_call_operand.hbm [shape: bf16[2,128,128], index: 7, kind: input, shape index: {}]
  %s8 = inlined_call_operand.hbm [shape: bf16[2,128,128], index: 8, kind: input, shape index: {}]
  %s9 = inlined_call_operand.hbm [shape: bf16[2,128,128], index: 9, kind: input, shape index: {}]
  %s10 = inlined_call_operand.hbm [shape: bf16[2,128,128], index: 10, kind: input, shape index: {}]
  %s11 = inlined_call_operand.vmem [shape: f32[2,1,128], index: 11, kind: input, shape index: {}]
  %s12 = inlined_call_operand.hbm [shape: bf16[2,128,256], index: 12, kind: input, shape index: {}]
  %s13 = inlined_call_operand.hbm [shape: bf16[2,128,256], index: 13, kind: input, shape index: {}]
  %s14 = inlined_call_operand.hbm [shape: bf16[2,256,128], index: 14, kind: input, shape index: {}]
  %s15 = inlined_call_operand.hbm [shape: f32[16,128], index: 15, kind: output, shape index: {0}]
  %s16 = inlined_call_operand.vmem [shape: f32[2,16,128], index: 16, kind: output, shape index: {1}]
  %s17 = inlined_call_operand.vmem [shape: f32[2,16,128], index: 17, kind: output, shape index: {2}]
  %18 = xla_tuple %s15, %s16, %s17
  %s19 = sld [smem:[#allocation0]]
  $region145: #{_lalama_forward_jit.1} parent=0
    _
  %s21 = ssub.s32 1, %s19
  %s22 = scalar_select 0, %s21, %s19
  $region1: #{_lalama_forward_jit.1} parent=0
    #allocation2 [shape = 'u8[65536]{0}', space=vmem, size = 0x10000, scoped, tag = 'input window, operand 6']
    #allocation3 [shape = 's32[2]{0}', space=sflag, size = 0x8, scoped, tag = 'scoped memory for _lalama_forward_jit.1']
    #allocation4 [shape = 's32[2]{0}', space=sflag, size = 0x8, scoped, tag = 'scoped memory for _lalama_forward_jit.1']
    #allocation5 [shape = 'u8[65536]{0}', space=vmem, size = 0x10000, scoped, tag = 'input window, operand 7']
    #allocation6 [shape = 's32[2]{0}', space=sflag, size = 0x8, scoped, tag = 'scoped memory for _lalama_forward_jit.1']
    #allocation7 [shape = 'u8[65536]{0}', space=vmem, size = 0x10000, scoped, tag = 'input window, operand 8']
    #allocation8 [shape = 'u8[65536]{0}', space=vmem, size = 0x10000, scoped, tag = 'input window, operand 9']
    #allocation9 [shape = 's32[2]{0}', space=sflag, size = 0x8, scoped, tag = 'scoped memory for _lalama_forward_jit.1']
    #allocation10 [shape = 'u8[65536]{0}', space=vmem, size = 0x10000, scoped, tag = 'input window, operand 10']
    #allocation11 [shape = 'u8[131072]{0}', space=vmem, size = 0x20000, scoped, tag = 'input window, operand 12']
    #allocation12 [shape = 's32[2]{0}', space=sflag, size = 0x8, scoped, tag = 'scoped memory for _lalama_forward_jit.1']
    #allocation13 [shape = 'u8[131072]{0}', space=vmem, size = 0x20000, scoped, tag = 'input window, operand 13']
    #allocation14 [shape = 'u8[131072]{0}', space=vmem, size = 0x20000, scoped, tag = 'input window, operand 14']
    #allocation15 [shape = 's32[2]{0}', space=sflag, size = 0x8, scoped, tag = 'scoped memory for _lalama_forward_jit.1']
    #allocation16 [shape = 'u8[8192]{0}', space=vmem, size = 0x2000, scoped, tag = 'output window, operand 0, single buffered']
    %23 = vsyncpa [#allocation3], 0
    %s24 = scalar_lea.sflag [#allocation3], 1
    %25 = vsyncpa %s24, 0
    %26 = vsyncpa [#allocation6], 0
    %s27 = scalar_lea.sflag [#allocation6], 1
    %28 = vsyncpa %s27, 0
    %29 = vsyncpa [#allocation9], 0
    %s30 = scalar_lea.sflag [#allocation9], 1
    %31 = vsyncpa %s30, 0
    %32 = vsyncpa [#allocation12], 0
    %s33 = scalar_lea.sflag [#allocation12], 1
    %34 = vsyncpa %s33, 0
    %35 = vsyncpa [#allocation15], 0
    %s36 = scalar_lea.sflag [#allocation15], 1
    %37 = vsyncpa %s36, 0
    %38 = vsyncpa [#allocation4], 0
    loop: start=0, step=1, limit=4
    $region2: #{_lalama_forward_jit.1} parent=1 // loop_pre_header
      _
    $region3: #{_lalama_forward_jit.1} parent=1 // loop_header
      %s40 = sphi 0, %s44
      %p41 = scmp.ge.s32.totalorder %s40, 4
      %s48 = sphi 0, %s48
      %s50 = sphi 0, %s48
      %s51 = sphi 0, %s50
      %s65 = sphi 0, %s51
      %s69 = sphi 0, %s69
      %s71 = sphi 0, %s69
      %s72 = sphi 0, %s71
      %s86 = sphi 0, %s72
      %s90 = sphi 0, %s90
      %s92 = sphi 0, %s90
      %s93 = sphi 0, %s92
      %s107 = sphi 0, %s93
      %s111 = sphi 0, %s111
      %s113 = sphi 0, %s111
      %s114 = sphi 0, %s113
      %s128 = sphi 0, %s114
      %s134 = sphi 0, %s136
      %s137 = sphi 0, %s134
      %s138 = sphi 0, %s137
      %s154 = sphi 0, %s138
      %s160 = sphi 0, %s162
      %s163 = sphi 0, %s160
      %s164 = sphi 0, %s163
      %s180 = sphi 0, %s164
      %s186 = sphi 0, %s188
      %s189 = sphi 0, %s186
      %s190 = sphi 0, %s189
      %s206 = sphi 0, %s190
      %s212 = sphi 0, %s214
      %s215 = sphi 0, %s212
      %s216 = sphi 0, %s215
      %s232 = sphi 0, %s216
      %s238 = sphi 0, %s240
      %s241 = sphi 0, %s238
      %s242 = sphi 0, %s241
      %s258 = sphi 0, %s242
      %s264 = sphi 0, %s266
      %s267 = sphi 0, %s264
      %s268 = sphi 0, %s267
      %s284 = sphi 0, %s268
      %s290 = sphi 0, %s292
      %s293 = sphi 0, %s290
      %s294 = sphi 0, %s293
      %s310 = sphi 0, %s294
      %s316 = sphi 0, %s318
      %s319 = sphi 0, %s316
      %s320 = sphi 0, %s319
      %s336 = sphi 0, %s320
      %s342 = sphi 0, %s344
      %s345 = sphi 0, %s342
      %s346 = sphi 0, %s345
      %s362 = sphi 0, %s346
      %s368 = sphi 0, %s370
      %s371 = sphi 0, %s368
      %s372 = sphi 0, %s371
      %s388 = sphi 0, %s372
      %s394 = sphi 0, %s396
      %s397 = sphi 0, %s394
      %s398 = sphi 0, %s397
      %s414 = sphi 0, %s398
      %s418 = sphi 0, %s418
      %s420 = sphi 0, %s418
      %s421 = sphi 0, %s420
      %s435 = sphi 0, %s421
      %s441 = sphi 0, %s443
      %s444 = sphi 0, %s441
      %s445 = sphi 0, %s444
      %s461 = sphi 0, %s445
      %s467 = sphi 0, %s469
      %s470 = sphi 0, %s467
      %s471 = sphi 0, %s470
      %s487 = sphi 0, %s471
    $region4: #{_lalama_forward_jit.1} parent=1 // loop_header_branch
      %43 = sbr.rel (%p41) target = $region8
    $region5: #{_lalama_forward_jit.1} parent=1 // loop_body
      %s45 = ssub.s32 %s40, 1
      %s46 = ssub.s32 %s40, 2
      %s47 = sadd.s32 %s40, 1
      %s49 = sadd.s32 %s48, 1
      %p52 = scmp.eq.s32.totalorder %s40, 1
      %p53 = scmp.ne.s32.totalorder %s48, %s50
      %p54 = scmp.eq.s32.totalorder %s40, 0
      %p55 = por %p53, %p54
      %p56 = scmp.ne.s32.totalorder %s48, %s50
      %p57 = scmp.eq.s32.totalorder %s45, 1
      %p58 = por %p56, %p57
      %p59 = scmp.ne.s32.totalorder %s50, %s51
      %p60 = scmp.eq.s32.totalorder %s45, 0
      %p61 = por %p59, %p60
      %p62 = scmp.ne.s32.totalorder %s50, %s51
      %p63 = scmp.eq.s32.totalorder %s46, 1
      %p64 = por %p62, %p63
      %p66 = scmp.ne.s32.totalorder %s51, %s65
      %p67 = scmp.eq.s32.totalorder %s46, 0
      %p68 = por %p66, %p67
      %s70 = sadd.s32 %s69, 1
      %p73 = scmp.eq.s32.totalorder %s40, 1
      %p74 = scmp.ne.s32.totalorder %s69, %s71
      %p75 = scmp.eq.s32.totalorder %s40, 0
      %p76 = por %p74, %p75
      %p77 = scmp.ne.s32.totalorder %s69, %s71
      %p78 = scmp.eq.s32.totalorder %s45, 1
      %p79 = por %p77, %p78
      %p80 = scmp.ne.s32.totalorder %s71, %s72
      %p81 = scmp.eq.s32.totalorder %s45, 0
      %p82 = por %p80, %p81
      %p83 = scmp.ne.s32.totalorder %s71, %s72
      %p84 = scmp.eq.s32.totalorder %s46, 1
      %p85 = por %p83, %p84
      %p87 = scmp.ne.s32.totalorder %s72, %s86
      %p88 = scmp.eq.s32.totalorder %s46, 0
      %p89 = por %p87, %p88
      %s91 = sadd.s32 %s90, 1
      %p94 = scmp.eq.s32.totalorder %s40, 1
      %p95 = scmp.ne.s32.totalorder %s90, %s92
      %p96 = scmp.eq.s32.totalorder %s40, 0
      %p97 = por %p95, %p96
      %p98 = scmp.ne.s32.totalorder %s90, %s92
      %p99 = scmp.eq.s32.totalorder %s45, 1
      %p100 = por %p98, %p99
      %p101 = scmp.ne.s32.totalorder %s92, %s93
      %p102 = scmp.eq.s32.totalorder %s45, 0
      %p103 = por %p101, %p102
      %p104 = scmp.ne.s32.totalorder %s92, %s93
      %p105 = scmp.eq.s32.totalorder %s46, 1
      %p106 = por %p104, %p105
      %p108 = scmp.ne.s32.totalorder %s93, %s107
      %p109 = scmp.eq.s32.totalorder %s46, 0
      %p110 = por %p108, %p109
      %s112 = sadd.s32 %s111, 1
      %p115 = scmp.eq.s32.totalorder %s40, 1
      %p116 = scmp.ne.s32.totalorder %s111, %s113
      %p117 = scmp.eq.s32.totalorder %s40, 0
      %p118 = por %p116, %p117
      %p119 = scmp.ne.s32.totalorder %s111, %s113
      %p120 = scmp.eq.s32.totalorder %s45, 1
      %p121 = por %p119, %p120
      %p122 = scmp.ne.s32.totalorder %s113, %s114
      %p123 = scmp.eq.s32.totalorder %s45, 0
      %p124 = por %p122, %p123
      %p125 = scmp.ne.s32.totalorder %s113, %s114
      %p126 = scmp.eq.s32.totalorder %s46, 1
      %p127 = por %p125, %p126
      %p129 = scmp.ne.s32.totalorder %s114, %s128
      %p130 = scmp.eq.s32.totalorder %s46, 0
      %p131 = por %p129, %p130
      %s132 = ssub.s32 %s40, %s47
      %p133 = scmp.eq.s32.totalorder %s132, 0
      %s135 = sadd.s32 %s134, 1
      %s136 = scalar_select %p133, %s134, %s135
      %p139 = pneg %p133
      %p140 = scmp.eq.s32.totalorder %s40, 1
      %p141 = por %p139, %p140
      %p142 = scmp.ne.s32.totalorder %s134, %s137
      %p143 = scmp.eq.s32.totalorder %s40, 0
      %p144 = por %p142, %p143
      %p145 = scmp.ne.s32.totalorder %s134, %s137
      %p146 = scmp.eq.s32.totalorder %s45, 1
      %p147 = por %p145, %p146
      %p148 = scmp.ne.s32.totalorder %s137, %s138
      %p149 = scmp.eq.s32.totalorder %s45, 0
      %p150 = por %p148, %p149
      %p151 = scmp.ne.s32.totalorder %s137, %s138
      %p152 = scmp.eq.s32.totalorder %s46, 1
      %p153 = por %p151, %p152
      %p155 = scmp.ne.s32.totalorder %s138, %s154
      %p156 = scmp.eq.s32.totalorder %s46, 0
      %p157 = por %p155, %p156
      %s158 = ssub.s32 %s40, %s47
      %p159 = scmp.eq.s32.totalorder %s158, 0
      %s161 = sadd.s32 %s160, 1
      %s162 = scalar_select %p159, %s160, %s161
      %p165 = pneg %p159
      %p166 = scmp.eq.s32.totalorder %s40, 1
      %p167 = por %p165, %p166
      %p168 = scmp.ne.s32.totalorder %s160, %s163
      %p169 = scmp.eq.s32.totalorder %s40, 0
      %p170 = por %p168, %p169
      %p171 = scmp.ne.s32.totalorder %s160, %s163
      %p172 = scmp.eq.s32.totalorder %s45, 1
      %p173 = por %p171, %p172
      %p174 = scmp.ne.s32.totalorder %s163, %s164
      %p175 = scmp.eq.s32.totalorder %s45, 0
      %p176 = por %p174, %p175
      %p177 = scmp.ne.s32.totalorder %s163, %s164
      %p178 = scmp.eq.s32.totalorder %s46, 1
      %p179 = por %p177, %p178
      %p181 = scmp.ne.s32.totalorder %s164, %s180
      %p182 = scmp.eq.s32.totalorder %s46, 0
      %p183 = por %p181, %p182
      %s184 = ssub.s32 %s40, %s47
      %p185 = scmp.eq.s32.totalorder %s184, 0
      %s187 = sadd.s32 %s186, 1
      %s188 = scalar_select %p185, %s186, %s187
      %p191 = pneg %p185
      %p192 = scmp.eq.s32.totalorder %s40, 1
      %p193 = por %p191, %p192
      %p194 = scmp.ne.s32.totalorder %s186, %s189
      %p195 = scmp.eq.s32.totalorder %s40, 0
      %p196 = por %p194, %p195
      %p197 = scmp.ne.s32.totalorder %s186, %s189
      %p198 = scmp.eq.s32.totalorder %s45, 1
      %p199 = por %p197, %p198
      %p200 = scmp.ne.s32.totalorder %s189, %s190
      %p201 = scmp.eq.s32.totalorder %s45, 0
      %p202 = por %p200, %p201
      %p203 = scmp.ne.s32.totalorder %s189, %s190
      %p204 = scmp.eq.s32.totalorder %s46, 1
      %p205 = por %p203, %p204
      %p207 = scmp.ne.s32.totalorder %s190, %s206
      %p208 = scmp.eq.s32.totalorder %s46, 0
      %p209 = por %p207, %p208
      %s210 = ssub.s32 %s40, %s47
      %p211 = scmp.eq.s32.totalorder %s210, 0
      %s213 = sadd.s32 %s212, 1
      %s214 = scalar_select %p211, %s212, %s213
      %p217 = pneg %p211
      %p218 = scmp.eq.s32.totalorder %s40, 1
      %p219 = por %p217, %p218
      %p220 = scmp.ne.s32.totalorder %s212, %s215
      %p221 = scmp.eq.s32.totalorder %s40, 0
      %p222 = por %p220, %p221
      %p223 = scmp.ne.s32.totalorder %s212, %s215
      %p224 = scmp.eq.s32.totalorder %s45, 1
      %p225 = por %p223, %p224
      %p226 = scmp.ne.s32.totalorder %s215, %s216
      %p227 = scmp.eq.s32.totalorder %s45, 0
      %p228 = por %p226, %p227
      %p229 = scmp.ne.s32.totalorder %s215, %s216
      %p230 = scmp.eq.s32.totalorder %s46, 1
      %p231 = por %p229, %p230
      %p233 = scmp.ne.s32.totalorder %s216, %s232
      %p234 = scmp.eq.s32.totalorder %s46, 0
      %p235 = por %p233, %p234
      %s236 = ssub.s32 %s40, %s47
      %p237 = scmp.eq.s32.totalorder %s236, 0
      %s239 = sadd.s32 %s238, 1
      %s240 = scalar_select %p237, %s238, %s239
      %p243 = pneg %p237
      %p244 = scmp.eq.s32.totalorder %s40, 1
      %p245 = por %p243, %p244
      %p246 = scmp.ne.s32.totalorder %s238, %s241
      %p247 = scmp.eq.s32.totalorder %s40, 0
      %p248 = por %p246, %p247
      %p249 = scmp.ne.s32.totalorder %s238, %s241
      %p250 = scmp.eq.s32.totalorder %s45, 1
      %p251 = por %p249, %p250
      %p252 = scmp.ne.s32.totalorder %s241, %s242
      %p253 = scmp.eq.s32.totalorder %s45, 0
      %p254 = por %p252, %p253
      %p255 = scmp.ne.s32.totalorder %s241, %s242
      %p256 = scmp.eq.s32.totalorder %s46, 1
      %p257 = por %p255, %p256
      %p259 = scmp.ne.s32.totalorder %s242, %s258
      %p260 = scmp.eq.s32.totalorder %s46, 0
      %p261 = por %p259, %p260
      %s262 = ssub.s32 %s40, %s47
      %p263 = scmp.eq.s32.totalorder %s262, 0
      %s265 = sadd.s32 %s264, 1
      %s266 = scalar_select %p263, %s264, %s265
      %p269 = pneg %p263
      %p270 = scmp.eq.s32.totalorder %s40, 1
      %p271 = por %p269, %p270
      %p272 = scmp.ne.s32.totalorder %s264, %s267
      %p273 = scmp.eq.s32.totalorder %s40, 0
      %p274 = por %p272, %p273
      %p275 = scmp.ne.s32.totalorder %s264, %s267
      %p276 = scmp.eq.s32.totalorder %s45, 1
      %p277 = por %p275, %p276
      %p278 = scmp.ne.s32.totalorder %s267, %s268
      %p279 = scmp.eq.s32.totalorder %s45, 0
      %p280 = por %p278, %p279
      %p281 = scmp.ne.s32.totalorder %s267, %s268
      %p282 = scmp.eq.s32.totalorder %s46, 1
      %p283 = por %p281, %p282
      %p285 = scmp.ne.s32.totalorder %s268, %s284
      %p286 = scmp.eq.s32.totalorder %s46, 0
      %p287 = por %p285, %p286
      %s288 = ssub.s32 %s40, %s47
      %p289 = scmp.eq.s32.totalorder %s288, 0
      %s291 = sadd.s32 %s290, 1
      %s292 = scalar_select %p289, %s290, %s291
      %p295 = pneg %p289
      %p296 = scmp.eq.s32.totalorder %s40, 1
      %p297 = por %p295, %p296
      %p298 = scmp.ne.s32.totalorder %s290, %s293
      %p299 = scmp.eq.s32.totalorder %s40, 0
      %p300 = por %p298, %p299
      %p301 = scmp.ne.s32.totalorder %s290, %s293
      %p302 = scmp.eq.s32.totalorder %s45, 1
      %p303 = por %p301, %p302
      %p304 = scmp.ne.s32.totalorder %s293, %s294
      %p305 = scmp.eq.s32.totalorder %s45, 0
      %p306 = por %p304, %p305
      %p307 = scmp.ne.s32.totalorder %s293, %s294
      %p308 = scmp.eq.s32.totalorder %s46, 1
      %p309 = por %p307, %p308
      %p311 = scmp.ne.s32.totalorder %s294, %s310
      %p312 = scmp.eq.s32.totalorder %s46, 0
      %p313 = por %p311, %p312
      %s314 = ssub.s32 %s40, %s47
      %p315 = scmp.eq.s32.totalorder %s314, 0
      %s317 = sadd.s32 %s316, 1
      %s318 = scalar_select %p315, %s316, %s317
      %p321 = pneg %p315
      %p322 = scmp.eq.s32.totalorder %s40, 1
      %p323 = por %p321, %p322
      %p324 = scmp.ne.s32.totalorder %s316, %s319
      %p325 = scmp.eq.s32.totalorder %s40, 0
      %p326 = por %p324, %p325
      %p327 = scmp.ne.s32.totalorder %s316, %s319
      %p328 = scmp.eq.s32.totalorder %s45, 1
      %p329 = por %p327, %p328
      %p330 = scmp.ne.s32.totalorder %s319, %s320
      %p331 = scmp.eq.s32.totalorder %s45, 0
      %p332 = por %p330, %p331
      %p333 = scmp.ne.s32.totalorder %s319, %s320
      %p334 = scmp.eq.s32.totalorder %s46, 1
      %p335 = por %p333, %p334
      %p337 = scmp.ne.s32.totalorder %s320, %s336
      %p338 = scmp.eq.s32.totalorder %s46, 0
      %p339 = por %p337, %p338
      %s340 = ssub.s32 %s40, %s47
      %p341 = scmp.eq.s32.totalorder %s340, 0
      %s343 = sadd.s32 %s342, 1
      %s344 = scalar_select %p341, %s342, %s343
      %p347 = pneg %p341
      %p348 = scmp.eq.s32.totalorder %s40, 1
      %p349 = por %p347, %p348
      %p350 = scmp.ne.s32.totalorder %s342, %s345
      %p351 = scmp.eq.s32.totalorder %s40, 0
      %p352 = por %p350, %p351
      %p353 = scmp.ne.s32.totalorder %s342, %s345
      %p354 = scmp.eq.s32.totalorder %s45, 1
      %p355 = por %p353, %p354
      %p356 = scmp.ne.s32.totalorder %s345, %s346
      %p357 = scmp.eq.s32.totalorder %s45, 0
      %p358 = por %p356, %p357
      %p359 = scmp.ne.s32.totalorder %s345, %s346
      %p360 = scmp.eq.s32.totalorder %s46, 1
      %p361 = por %p359, %p360
      %p363 = scmp.ne.s32.totalorder %s346, %s362
      %p364 = scmp.eq.s32.totalorder %s46, 0
      %p365 = por %p363, %p364
      %s366 = ssub.s32 %s40, %s47
      %p367 = scmp.eq.s32.totalorder %s366, 0
      %s369 = sadd.s32 %s368, 1
      %s370 = scalar_select %p367, %s368, %s369
      %p373 = pneg %p367
      %p374 = scmp.eq.s32.totalorder %s40, 1
      %p375 = por %p373, %p374
      %p376 = scmp.ne.s32.totalorder %s368, %s371
      %p377 = scmp.eq.s32.totalorder %s40, 0
      %p378 = por %p376, %p377
      %p379 = scmp.ne.s32.totalorder %s368, %s371
      %p380 = scmp.eq.s32.totalorder %s45, 1
      %p381 = por %p379, %p380
      %p382 = scmp.ne.s32.totalorder %s371, %s372
      %p383 = scmp.eq.s32.totalorder %s45, 0
      %p384 = por %p382, %p383
      %p385 = scmp.ne.s32.totalorder %s371, %s372
      %p386 = scmp.eq.s32.totalorder %s46, 1
      %p387 = por %p385, %p386
      %p389 = scmp.ne.s32.totalorder %s372, %s388
      %p390 = scmp.eq.s32.totalorder %s46, 0
      %p391 = por %p389, %p390
      %s392 = ssub.s32 %s40, %s47
      %p393 = scmp.eq.s32.totalorder %s392, 0
      %s395 = sadd.s32 %s394, 1
      %s396 = scalar_select %p393, %s394, %s395
      %p399 = pneg %p393
      %p400 = scmp.eq.s32.totalorder %s40, 1
      %p401 = por %p399, %p400
      %p402 = scmp.ne.s32.totalorder %s394, %s397
      %p403 = scmp.eq.s32.totalorder %s40, 0
      %p404 = por %p402, %p403
      %p405 = scmp.ne.s32.totalorder %s394, %s397
      %p406 = scmp.eq.s32.totalorder %s45, 1
      %p407 = por %p405, %p406
      %p408 = scmp.ne.s32.totalorder %s397, %s398
      %p409 = scmp.eq.s32.totalorder %s45, 0
      %p410 = por %p408, %p409
      %p411 = scmp.ne.s32.totalorder %s397, %s398
      %p412 = scmp.eq.s32.totalorder %s46, 1
      %p413 = por %p411, %p412
      %p415 = scmp.ne.s32.totalorder %s398, %s414
      %p416 = scmp.eq.s32.totalorder %s46, 0
      %p417 = por %p415, %p416
      %s419 = sadd.s32 %s418, 1
      %p422 = scmp.eq.s32.totalorder %s40, 1
      %p423 = scmp.ne.s32.totalorder %s418, %s420
      %p424 = scmp.eq.s32.totalorder %s40, 0
      %p425 = por %p423, %p424
      %p426 = scmp.ne.s32.totalorder %s418, %s420
      %p427 = scmp.eq.s32.totalorder %s45, 1
      %p428 = por %p426, %p427
      %p429 = scmp.ne.s32.totalorder %s420, %s421
      %p430 = scmp.eq.s32.totalorder %s45, 0
      %p431 = por %p429, %p430
      %p432 = scmp.ne.s32.totalorder %s420, %s421
      %p433 = scmp.eq.s32.totalorder %s46, 1
      %p434 = por %p432, %p433
      %p436 = scmp.ne.s32.totalorder %s421, %s435
      %p437 = scmp.eq.s32.totalorder %s46, 0
      %p438 = por %p436, %p437
      %s439 = ssub.s32 %s40, %s47
      %p440 = scmp.eq.s32.totalorder %s439, 0
      %s442 = sadd.s32 %s441, 1
      %s443 = scalar_select %p440, %s441, %s442
      %p446 = pneg %p440
      %p447 = scmp.eq.s32.totalorder %s40, 1
      %p448 = por %p446, %p447
      %p449 = scmp.ne.s32.totalorder %s441, %s444
      %p450 = scmp.eq.s32.totalorder %s40, 0
      %p451 = por %p449, %p450
      %p452 = scmp.ne.s32.totalorder %s441, %s444
      %p453 = scmp.eq.s32.totalorder %s45, 1
      %p454 = por %p452, %p453
      %p455 = scmp.ne.s32.totalorder %s444, %s445
      %p456 = scmp.eq.s32.totalorder %s45, 0
      %p457 = por %p455, %p456
      %p458 = scmp.ne.s32.totalorder %s444, %s445
      %p459 = scmp.eq.s32.totalorder %s46, 1
      %p460 = por %p458, %p459
      %p462 = scmp.ne.s32.totalorder %s445, %s461
      %p463 = scmp.eq.s32.totalorder %s46, 0
      %p464 = por %p462, %p463
      %s465 = ssub.s32 %s40, %s47
      %p466 = scmp.eq.s32.totalorder %s465, 0
      %s468 = sadd.s32 %s467, 1
      %s469 = scalar_select %p466, %s467, %s468
      %p472 = pneg %p466
      %p473 = scmp.eq.s32.totalorder %s40, 1
      %p474 = por %p472, %p473
      %p475 = scmp.ne.s32.totalorder %s467, %s470
      %p476 = scmp.eq.s32.totalorder %s40, 0
      %p477 = por %p475, %p476
      %p478 = scmp.ne.s32.totalorder %s467, %s470
      %p479 = scmp.eq.s32.totalorder %s45, 1
      %p480 = por %p478, %p479
      %p481 = scmp.ne.s32.totalorder %s470, %s471
      %p482 = scmp.eq.s32.totalorder %s45, 0
      %p483 = por %p481, %p482
      %p484 = scmp.ne.s32.totalorder %s470, %s471
      %p485 = scmp.eq.s32.totalorder %s46, 1
      %p486 = por %p484, %p485
      %p488 = scmp.ne.s32.totalorder %s471, %s487
      %p489 = scmp.eq.s32.totalorder %s46, 0
      %p490 = por %p488, %p489
      %p491 = scmp.le.s32.totalorder 1, %s40
      %p492 = scmp.lt.s32.totalorder %s40, 3
      %p493 = pnand %p491, %p492
      %p494 = pneg %p493
      // Predicated region
      $region9: #{_lalama_forward_jit.1} parent=5 // pred_check
        _
      $region10: #{_lalama_forward_jit.1} parent=5 // pred_check_branch
        %496 = sbr.rel (%p493) target = $region12
      $region11: #{_lalama_forward_jit.1} parent=5 // pred_region
        %s497 = ssub.s32 %s40, 1
        // Predicated region
        $region13: #{_lalama_forward_jit.1} parent=11 // pred_check
          %p498 = pneg %p61
        $region14: #{_lalama_forward_jit.1} parent=11 // pred_check_branch
          %500 = sbr.rel (%p498) target = $region16
        $region15: #{_lalama_forward_jit.1} parent=11 // pred_region
          _
        $region16: #{_lalama_forward_jit.1} parent=11 // pred_fallthru
          _
        // Predicated region
        $region17: #{_lalama_forward_jit.1} parent=11 // pred_check
          %p501 = pneg %p82
        $region18: #{_lalama_forward_jit.1} parent=11 // pred_check_branch
          %503 = sbr.rel (%p501) target = $region20
        $region19: #{_lalama_forward_jit.1} parent=11 // pred_region
          _
        $region20: #{_lalama_forward_jit.1} parent=11 // pred_fallthru
          _
        // Predicated region
        $region21: #{_lalama_forward_jit.1} parent=11 // pred_check
          %p504 = pneg %p103
        $region22: #{_lalama_forward_jit.1} parent=11 // pred_check_branch
          %506 = sbr.rel (%p504) target = $region24
        $region23: #{_lalama_forward_jit.1} parent=11 // pred_region
          _
        $region24: #{_lalama_forward_jit.1} parent=11 // pred_fallthru
          _
        // Predicated region
        $region25: #{_lalama_forward_jit.1} parent=11 // pred_check
          %p507 = pneg %p124
        $region26: #{_lalama_forward_jit.1} parent=11 // pred_check_branch
          %509 = sbr.rel (%p507) target = $region28
        $region27: #{_lalama_forward_jit.1} parent=11 // pred_region
          _
        $region28: #{_lalama_forward_jit.1} parent=11 // pred_fallthru
          _
      $region12: #{_lalama_forward_jit.1} parent=5 // pred_fallthru
        _
      %p510 = scmp.lt.s32.totalorder %s40, 2
      // Predicated region
      $region29: #{_lalama_forward_jit.1} parent=5 // pred_check
        %p511 = pneg %p510
      $region30: #{_lalama_forward_jit.1} parent=5 // pred_check_branch
        %513 = sbr.rel (%p511) target = $region32
      $region31: #{_lalama_forward_jit.1} parent=5 // pred_region
        // Predicated region
        $region33: #{_lalama_forward_jit.1} parent=31 // pred_check
          %p514 = pneg %p144
        $region34: #{_lalama_forward_jit.1} parent=31 // pred_check_branch
          %516 = sbr.rel (%p514) target = $region36
        $region35: #{_lalama_forward_jit.1} parent=31 // pred_region
          %p517 = scmp.lt.s32.totalorder %s40, 1
          %s518 = scalar_select %p517, %s40, 1
          %s519 = scalar_lea.vmem %s4, %s518
        $region36: #{_lalama_forward_jit.1} parent=31 // pred_fallthru
          _
        // Predicated region
        $region37: #{_lalama_forward_jit.1} parent=31 // pred_check
          %p520 = pneg %p170
        $region38: #{_lalama_forward_jit.1} parent=31 // pred_check_branch
          %522 = sbr.rel (%p520) target = $region40
        $region39: #{_lalama_forward_jit.1} parent=31 // pred_region
          %p523 = scmp.lt.s32.totalorder %s40, 1
          %s524 = scalar_select %p523, %s40, 1
          %s525 = smul.addr %s524, 16
          %s526 = smul.addr %s525, 4
          %s527 = scalar_lea.vmem %s5, %s526
        $region40: #{_lalama_forward_jit.1} parent=31 // pred_fallthru
          _
        // Predicated region
        $region41: #{_lalama_forward_jit.1} parent=31 // pred_check
          %p528 = pneg %p196
        $region42: #{_lalama_forward_jit.1} parent=31 // pred_check_branch
          %530 = sbr.rel (%p528) target = $region44
        $region43: #{_lalama_forward_jit.1} parent=31 // pred_region
          %s531 = sand.u32 %s186, 1
          %s532 = scalar_lea.sflag [#allocation3], %s531
          %s533 = sand.u32 %s186, 1
          %s534 = smul.addr %s533, 64
          %s535 = scalar_lea.vmem [#allocation2], %s534
          %s537 = ssub.s32 1024, 1024
          %538 = vsyncadd %s532, %s537
          %s539 = smul.addr %s40, 16
          %s540 = smul.addr %s539, 64
          %s541 = scalar_lea.hbm %s6, %s540
          %s542 = sshll.u32 %s535, 4
          %s543 = int_to_ptr.vmem [resolvable:$true] %s542
          %548 = dma.hbm_to_vmem [thread:$0]  %s541, 1024, %s543, %s532, 64, 64, 4
        $region44: #{_lalama_forward_jit.1} parent=31 // pred_fallthru
          _
        // Predicated region
        $region45: #{_lalama_forward_jit.1} parent=31 // pred_check
          %p549 = pneg %p222
        $region46: #{_lalama_forward_jit.1} parent=31 // pred_check_branch
          %551 = sbr.rel (%p549) target = $region48
        $region47: #{_lalama_forward_jit.1} parent=31 // pred_region
          %s552 = sand.u32 %s40, 1
          %s553 = scalar_lea.sflag [#allocation6], %s552
          %s554 = sand.u32 %s212, 1
          %s555 = smul.addr %s554, 64
          %s556 = scalar_lea.vmem [#allocation5], %s555
          %s558 = ssub.s32 1024, 1024
          %559 = vsyncadd %s553, %s558
          %s560 = smul.addr %s40, 16
          %s561 = smul.addr %s560, 64
          %s562 = scalar_lea.hbm %s7, %s561
          %s563 = sshll.u32 %s556, 4
          %s564 = int_to_ptr.vmem [resolvable:$true] %s563
          %569 = dma.hbm_to_vmem [thread:$0]  %s562, 1024, %s564, %s553, 64, 64, 4
        $region48: #{_lalama_forward_jit.1} parent=31 // pred_fallthru
          _
        // Predicated region
        $region49: #{_lalama_forward_jit.1} parent=31 // pred_check
          %p570 = pneg %p248
        $region50: #{_lalama_forward_jit.1} parent=31 // pred_check_branch
          %572 = sbr.rel (%p570) target = $region52
        $region51: #{_lalama_forward_jit.1} parent=31 // pred_region
          %s573 = sand.u32 %s40, 1
          %s574 = scalar_lea.sflag [#allocation6], %s573
          %s575 = sand.u32 %s238, 1
          %s576 = smul.addr %s575, 64
          %s577 = scalar_lea.vmem [#allocation7], %s576
          %s579 = ssub.s32 1024, 1024
          %580 = vsyncadd %s574, %s579
          %s581 = smul.addr %s40, 16
          %s582 = smul.addr %s581, 64
          %s583 = scalar_lea.hbm %s8, %s582
          %s584 = sshll.u32 %s577, 4
          %s585 = int_to_ptr.vmem [resolvable:$true] %s584
          %590 = dma.hbm_to_vmem [thread:$0]  %s583, 1024, %s585, %s574, 64, 64, 4
        $region52: #{_lalama_forward_jit.1} parent=31 // pred_fallthru
          _
        // Predicated region
        $region53: #{_lalama_forward_jit.1} parent=31 // pred_check
          %p591 = pneg %p274
        $region54: #{_lalama_forward_jit.1} parent=31 // pred_check_branch
          %593 = sbr.rel (%p591) target = $region56
        $region55: #{_lalama_forward_jit.1} parent=31 // pred_region
          %s594 = sand.u32 %s40, 1
          %s595 = scalar_lea.sflag [#allocation9], %s594
          %s596 = sand.u32 %s264, 1
          %s597 = smul.addr %s596, 64
          %s598 = scalar_lea.vmem [#allocation8], %s597
          %s600 = ssub.s32 1024, 1024
          %601 = vsyncadd %s595, %s600
          %s602 = smul.addr %s40, 16
          %s603 = smul.addr %s602, 64
          %s604 = scalar_lea.hbm %s9, %s603
          %s605 = sshll.u32 %s598, 4
          %s606 = int_to_ptr.vmem [resolvable:$true] %s605
          %611 = dma.hbm_to_vmem [thread:$0]  %s604, 1024, %s606, %s595, 64, 64, 4
        $region56: #{_lalama_forward_jit.1} parent=31 // pred_fallthru
          _
        // Predicated region
        $region57: #{_lalama_forward_jit.1} parent=31 // pred_check
          %p612 = pneg %p300
        $region58: #{_lalama_forward_jit.1} parent=31 // pred_check_branch
          %614 = sbr.rel (%p612) target = $region60
        $region59: #{_lalama_forward_jit.1} parent=31 // pred_region
          %s615 = sand.u32 %s40, 1
          %s616 = scalar_lea.sflag [#allocation9], %s615
          %s617 = sand.u32 %s290, 1
          %s618 = smul.addr %s617, 64
          %s619 = scalar_lea.vmem [#allocation10], %s618
          %s621 = ssub.s32 1024, 1024
          %622 = vsyncadd %s616, %s621
          %s623 = smul.addr %s40, 16
          %s624 = smul.addr %s623, 64
          %s625 = scalar_lea.hbm %s10, %s624
          %s626 = sshll.u32 %s619, 4
          %s627 = int_to_ptr.vmem [resolvable:$true] %s626
          %632 = dma.hbm_to_vmem [thread:$0]  %s625, 1024, %s627, %s616, 64, 64, 4
        $region60: #{_lalama_forward_jit.1} parent=31 // pred_fallthru
          _
        // Predicated region
        $region61: #{_lalama_forward_jit.1} parent=31 // pred_check
          %p633 = pneg %p326
        $region62: #{_lalama_forward_jit.1} parent=31 // pred_check_branch
          %635 = sbr.rel (%p633) target = $region64
        $region63: #{_lalama_forward_jit.1} parent=31 // pred_region
          %p636 = scmp.lt.s32.totalorder %s40, 1
          %s637 = scalar_select %p636, %s40, 1
          %s638 = scalar_lea.vmem %s11, %s637
        $region64: #{_lalama_forward_jit.1} parent=31 // pred_fallthru
          _
        // Predicated region
        $region65: #{_lalama_forward_jit.1} parent=31 // pred_check
          %p639 = pneg %p352
        $region66: #{_lalama_forward_jit.1} parent=31 // pred_check_branch
          %641 = sbr.rel (%p639) target = $region68
        $region67: #{_lalama_forward_jit.1} parent=31 // pred_region
          %s642 = sand.u32 %s40, 1
          %s643 = scalar_lea.sflag [#allocation12], %s642
          %s644 = sand.u32 %s342, 1
          %s645 = smul.addr %s644, 128
          %s646 = scalar_lea.vmem [#allocation11], %s645
          %s648 = ssub.s32 2048, 2048
          %649 = vsyncadd %s643, %s648
          %s650 = smul.addr %s40, 32
          %s651 = smul.addr %s650, 64
          %s652 = scalar_lea.hbm %s12, %s651
          %s653 = sshll.u32 %s646, 4
          %s654 = int_to_ptr.vmem [resolvable:$true] %s653
          %659 = dma.hbm_to_vmem [thread:$0]  %s652, 2048, %s654, %s643, 128, 128, 8
        $region68: #{_lalama_forward_jit.1} parent=31 // pred_fallthru
          _
        // Predicated region
        $region69: #{_lalama_forward_jit.1} parent=31 // pred_check
          %p660 = pneg %p378
        $region70: #{_lalama_forward_jit.1} parent=31 // pred_check_branch
          %662 = sbr.rel (%p660) target = $region72
        $region71: #{_lalama_forward_jit.1} parent=31 // pred_region
          %s663 = sand.u32 %s40, 1
          %s664 = scalar_lea.sflag [#allocation12], %s663
          %s665 = sand.u32 %s368, 1
          %s666 = smul.addr %s665, 128
          %s667 = scalar_lea.vmem [#allocation13], %s666
          %s669 = ssub.s32 2048, 2048
          %670 = vsyncadd %s664, %s669
          %s671 = smul.addr %s40, 32
          %s672 = smul.addr %s671, 64
          %s673 = scalar_lea.hbm %s13, %s672
          %s674 = sshll.u32 %s667, 4
          %s675 = int_to_ptr.vmem [resolvable:$true] %s674
          %680 = dma.hbm_to_vmem [thread:$0]  %s673, 2048, %s675, %s664, 128, 128, 8
        $region72: #{_lalama_forward_jit.1} parent=31 // pred_fallthru
          _
        // Predicated region
        $region73: #{_lalama_forward_jit.1} parent=31 // pred_check
          %p681 = pneg %p404
        $region74: #{_lalama_forward_jit.1} parent=31 // pred_check_branch
          %683 = sbr.rel (%p681) target = $region76
        $region75: #{_lalama_forward_jit.1} parent=31 // pred_region
          %s684 = sand.u32 %s394, 1
          %s685 = scalar_lea.sflag [#allocation15], %s684
          %s686 = sand.u32 %s394, 1
          %s687 = smul.addr %s686, 128
          %s688 = scalar_lea.vmem [#allocation14], %s687
          %s690 = ssub.s32 2048, 2048
          %691 = vsyncadd %s685, %s690
          %s692 = smul.addr %s40, 32
          %s693 = smul.addr %s692, 64
          %s694 = scalar_lea.hbm %s14, %s693
          %s695 = sshll.u32 %s688, 4
          %s696 = int_to_ptr.vmem [resolvable:$true] %s695
          %701 = dma.hbm_to_vmem [thread:$0]  %s694, 2048, %s696, %s685, 64, 64, 4
        $region76: #{_lalama_forward_jit.1} parent=31 // pred_fallthru
          _
      $region32: #{_lalama_forward_jit.1} parent=5 // pred_fallthru
        _
      %p702 = scmp.le.s32.totalorder 1, %s40
      %p703 = scmp.lt.s32.totalorder %s40, 3
      %p704 = pnand %p702, %p703
      %p705 = pneg %p704
      // Predicated region
      $region77: #{_lalama_forward_jit.1} parent=5 // pred_check
        _
      $region78: #{_lalama_forward_jit.1} parent=5 // pred_check_branch
        %707 = sbr.rel (%p704) target = $region80
      $region79: #{_lalama_forward_jit.1} parent=5 // pred_region
        %s708 = ssub.s32 %s40, 1
        %s709 = sand.u32 %s189, 1
        %s710 = scalar_lea.sflag [#allocation3], %s709
        %s711 = sand.u32 %s189, 1
        %s712 = smul.addr %s711, 64
        %s713 = scalar_lea.vmem [#allocation2], %s712
        // Predicated region
        $region81: #{_lalama_forward_jit.1} parent=79 // pred_check
          %p714 = pneg %p202
        $region82: #{_lalama_forward_jit.1} parent=79 // pred_check_branch
          %716 = sbr.rel (%p714) target = $region84
        $region83: #{_lalama_forward_jit.1} parent=79 // pred_region
          %717 = dma.done %s710, 1024
        $region84: #{_lalama_forward_jit.1} parent=79 // pred_fallthru
          _
        %s718 = sand.u32 %s45, 1
        %s719 = scalar_lea.sflag [#allocation6], %s718
        %s720 = sand.u32 %s215, 1
        %s721 = smul.addr %s720, 64
        %s722 = scalar_lea.vmem [#allocation5], %s721
        // Predicated region
        $region85: #{_lalama_forward_jit.1} parent=79 // pred_check
          %p723 = pneg %p228
        $region86: #{_lalama_forward_jit.1} parent=79 // pred_check_branch
          %725 = sbr.rel (%p723) target = $region88
        $region87: #{_lalama_forward_jit.1} parent=79 // pred_region
          %726 = dma.done %s719, 1024
        $region88: #{_lalama_forward_jit.1} parent=79 // pred_fallthru
          _
        %s727 = sand.u32 %s45, 1
        %s728 = scalar_lea.sflag [#allocation6], %s727
        %s729 = sand.u32 %s241, 1
        %s730 = smul.addr %s729, 64
        %s731 = scalar_lea.vmem [#allocation7], %s730
        // Predicated region
        $region89: #{_lalama_forward_jit.1} parent=79 // pred_check
          %p732 = pneg %p254
        $region90: #{_lalama_forward_jit.1} parent=79 // pred_check_branch
          %734 = sbr.rel (%p732) target = $region92
        $region91: #{_lalama_forward_jit.1} parent=79 // pred_region
          %735 = dma.done %s728, 1024
        $region92: #{_lalama_forward_jit.1} parent=79 // pred_fallthru
          _
        %s736 = sand.u32 %s45, 1
        %s737 = scalar_lea.sflag [#allocation9], %s736
        %s738 = sand.u32 %s267, 1
        %s739 = smul.addr %s738, 64
        %s740 = scalar_lea.vmem [#allocation8], %s739
        // Predicated region
        $region93: #{_lalama_forward_jit.1} parent=79 // pred_check
          %p741 = pneg %p280
        $region94: #{_lalama_forward_jit.1} parent=79 // pred_check_branch
          %743 = sbr.rel (%p741) target = $region96
        $region95: #{_lalama_forward_jit.1} parent=79 // pred_region
          %744 = dma.done %s737, 1024
        $region96: #{_lalama_forward_jit.1} parent=79 // pred_fallthru
          _
        %s745 = sand.u32 %s45, 1
        %s746 = scalar_lea.sflag [#allocation9], %s745
        %s747 = sand.u32 %s293, 1
        %s748 = smul.addr %s747, 64
        %s749 = scalar_lea.vmem [#allocation10], %s748
        // Predicated region
        $region97: #{_lalama_forward_jit.1} parent=79 // pred_check
          %p750 = pneg %p306
        $region98: #{_lalama_forward_jit.1} parent=79 // pred_check_branch
          %752 = sbr.rel (%p750) target = $region100
        $region99: #{_lalama_forward_jit.1} parent=79 // pred_region
          %753 = dma.done %s746, 1024
        $region100: #{_lalama_forward_jit.1} parent=79 // pred_fallthru
          _
        %s754 = sand.u32 %s45, 1
        %s755 = scalar_lea.sflag [#allocation12], %s754
        %s756 = sand.u32 %s345, 1
        %s757 = smul.addr %s756, 128
        %s758 = scalar_lea.vmem [#allocation11], %s757
        // Predicated region
        $region101: #{_lalama_forward_jit.1} parent=79 // pred_check
          %p759 = pneg %p358
        $region102: #{_lalama_forward_jit.1} parent=79 // pred_check_branch
          %761 = sbr.rel (%p759) target = $region104
        $region103: #{_lalama_forward_jit.1} parent=79 // pred_region
          %762 = dma.done %s755, 2048
        $region104: #{_lalama_forward_jit.1} parent=79 // pred_fallthru
          _
        %s763 = sand.u32 %s45, 1
        %s764 = scalar_lea.sflag [#allocation12], %s763
        %s765 = sand.u32 %s371, 1
        %s766 = smul.addr %s765, 128
        %s767 = scalar_lea.vmem [#allocation13], %s766
        // Predicated region
        $region105: #{_lalama_forward_jit.1} parent=79 // pred_check
          %p768 = pneg %p384
        $region106: #{_lalama_forward_jit.1} parent=79 // pred_check_branch
          %770 = sbr.rel (%p768) target = $region108
        $region107: #{_lalama_forward_jit.1} parent=79 // pred_region
          %771 = dma.done %s764, 2048
        $region108: #{_lalama_forward_jit.1} parent=79 // pred_fallthru
          _
        %s772 = sand.u32 %s397, 1
        %s773 = scalar_lea.sflag [#allocation15], %s772
        %s774 = sand.u32 %s397, 1
        %s775 = smul.addr %s774, 128
        %s776 = scalar_lea.vmem [#allocation14], %s775
        // Predicated region
        $region109: #{_lalama_forward_jit.1} parent=79 // pred_check
          %p777 = pneg %p410
        $region110: #{_lalama_forward_jit.1} parent=79 // pred_check_branch
          %779 = sbr.rel (%p777) target = $region112
        $region111: #{_lalama_forward_jit.1} parent=79 // pred_region
          %780 = dma.done %s773, 2048
        $region112: #{_lalama_forward_jit.1} parent=79 // pred_fallthru
          _
        %p781 = pneg %p61
        %p782 = pneg %p58
        %p783 = pneg %p82
        %p784 = pneg %p79
        %p785 = pneg %p103
        %p786 = pneg %p100
        %p787 = pneg %p124
        %p788 = pneg %p121
        %p789 = scmp.lt.s32.totalorder %s45, 1
        %s790 = scalar_select %p789, %s45, 1
        %s791 = scalar_lea.vmem %s4, %s790
        %p792 = pneg %p150
        %p793 = pneg %p147
        %p794 = scmp.lt.s32.totalorder %s45, 1
        %s795 = scalar_select %p794, %s45, 1
        %s796 = smul.addr %s795, 16
        %s797 = smul.addr %s796, 4
        %s798 = scalar_lea.vmem %s5, %s797
        %p799 = pneg %p176
        %p800 = pneg %p173
        %s801 = sand.u32 %s189, 1
        %s802 = scalar_lea.sflag [#allocation3], %s801
        %s803 = sand.u32 %s189, 1
        %s804 = smul.addr %s803, 64
        %s805 = scalar_lea.vmem [#allocation2], %s804
        %p806 = pneg %p202
        %p807 = pneg %p199
        %s808 = sand.u32 %s45, 1
        %s809 = scalar_lea.sflag [#allocation6], %s808
        %s810 = sand.u32 %s215, 1
        %s811 = smul.addr %s810, 64
        %s812 = scalar_lea.vmem [#allocation5], %s811
        %p813 = pneg %p228
        %p814 = pneg %p225
        %s815 = sand.u32 %s45, 1
        %s816 = scalar_lea.sflag [#allocation6], %s815
        %s817 = sand.u32 %s241, 1
        %s818 = smul.addr %s817, 64
        %s819 = scalar_lea.vmem [#allocation7], %s818
        %p820 = pneg %p254
        %p821 = pneg %p251
        %s822 = sand.u32 %s45, 1
        %s823 = scalar_lea.sflag [#allocation9], %s822
        %s824 = sand.u32 %s267, 1
        %s825 = smul.addr %s824, 64
        %s826 = scalar_lea.vmem [#allocation8], %s825
        %p827 = pneg %p280
        %p828 = pneg %p277
        %s829 = sand.u32 %s45, 1
        %s830 = scalar_lea.sflag [#allocation9], %s829
        %s831 = sand.u32 %s293, 1
        %s832 = smul.addr %s831, 64
        %s833 = scalar_lea.vmem [#allocation10], %s832
        %p834 = pneg %p306
        %p835 = pneg %p303
        %p836 = scmp.lt.s32.totalorder %s45, 1
        %s837 = scalar_select %p836, %s45, 1
        %s838 = scalar_lea.vmem %s11, %s837
        %p839 = pneg %p332
        %p840 = pneg %p329
        %s841 = sand.u32 %s45, 1
        %s842 = scalar_lea.sflag [#allocation12], %s841
        %s843 = sand.u32 %s345, 1
        %s844 = smul.addr %s843, 128
        %s845 = scalar_lea.vmem [#allocation11], %s844
        %p846 = pneg %p358
        %p847 = pneg %p355
        %s848 = sand.u32 %s45, 1
        %s849 = scalar_lea.sflag [#allocation12], %s848
        %s850 = sand.u32 %s371, 1
        %s851 = smul.addr %s850, 128
        %s852 = scalar_lea.vmem [#allocation13], %s851
        %p853 = pneg %p384
        %p854 = pneg %p381
        %s855 = sand.u32 %s397, 1
        %s856 = scalar_lea.sflag [#allocation15], %s855
        %s857 = sand.u32 %s397, 1
        %s858 = smul.addr %s857, 128
        %s859 = scalar_lea.vmem [#allocation14], %s858
        %p860 = pneg %p410
        %p861 = pneg %p407
        %p862 = pneg %p431
        %p863 = pneg %p428
        %p864 = pneg %p457
        %p865 = pneg %p454
        %p866 = scmp.lt.s32.totalorder %s45, 1
        %s867 = scalar_select %p866, %s45, 1
        %s868 = smul.addr %s867, 2
        %s869 = smul.addr %s868, 8
        %s870 = scalar_lea.vmem %s16, %s869
        %p871 = pneg %p483
        %p872 = pneg %p480
        %p873 = scmp.lt.s32.totalorder %s45, 1
        %s874 = scalar_select %p873, %s45, 1
        %s875 = smul.addr %s874, 2
        %s876 = smul.addr %s875, 8
        %s877 = scalar_lea.vmem %s17, %s876
        %p878 = scmp.lt.s32.totalorder %s45, 1
        %s879 = scalar_select %p878, %s45, 1
        %s880 = scalar_lea.vmem %s4, %s879
        %p881 = scmp.lt.s32.totalorder %s45, 1
        %s882 = scalar_select %p881, %s45, 1
        %s883 = smul.addr %s882, 16
        %s884 = smul.addr %s883, 4
        %s885 = scalar_lea.vmem %s5, %s884
        %p886 = scmp.lt.s32.totalorder %s45, 1
        %s887 = scalar_select %p886, %s45, 1
        %s888 = scalar_lea.vmem %s11, %s887
        %p889 = scmp.lt.s32.totalorder %s45, 1
        %s890 = scalar_select %p889, %s45, 1
        %s891 = smul.addr %s890, 2
        %s892 = smul.addr %s891, 8
        %s893 = scalar_lea.vmem %s16, %s892
        %p894 = scmp.lt.s32.totalorder %s45, 1
        %s895 = scalar_select %p894, %s45, 1
        %s896 = smul.addr %s895, 2
        %s897 = smul.addr %s896, 8
        %s898 = scalar_lea.vmem %s17, %s897
        %p900 = scmp.eq.s32.totalorder %s45, 0
        // Predicated region
        $region113: #{_lalama_forward_jit.1} parent=79 // pred_check
          %p901 = pneg %p900
        $region114: #{_lalama_forward_jit.1} parent=79 // pred_check_branch
          %903 = sbr.rel (%p901) target = $region116
        $region115: #{_lalama_forward_jit.1} parent=79 // pred_region
          %v904 = vld [vmem:[%s0] sm:$0xff]
          %v905 = vld [vmem:[%s0 + $0x8] sm:$0xff]
          %906 = vst [vmem:[#allocation16] sm:$0xff] %v904
          %907 = vst [vmem:[#allocation16 + $0x8] sm:$0xff] %v905
        $region116: #{_lalama_forward_jit.1} parent=79 // pred_fallthru
          _
        %v908 = vld [vmem:[#allocation16] sm:$0xff]
        %v909 = vld [vmem:[#allocation16 + $0x8] sm:$0xff]
        %v910 = vmul.f32 %v908, %v908
        %v911 = vmul.f32 %v909, %v909
        %912 = vadd.xlane.f32.xlu0 %v910
        %v913 = vpop.xlane.xlu0 %912
        %914 = vadd.xlane.f32.xlu0 %v911
        %v915 = vpop.xlane.xlu0 %914
        %v916 = vrcp.pop 128.0
        %v917 = vmul.f32 %v913, %v916
        %v918 = vmul.f32 %v915, %v916
        %v919 = vadd.f32 %v917, 1e-06
        %v920 = vadd.f32 %v918, 1e-06
        %v921 = vrsqrt.pop %v919
        %v922 = vrsqrt.pop %v920
        %v923 = vmul.f32 %v908, %v921
        %v924 = vmul.f32 %v909, %v922
        %v925 = vld [vmem:[%s880] sm:$0x1]
        %v927 = vlaneseq
        %v928 = vshrl.u32 %v927, 7
        %v929 = vsub.s32 0, %v928
        %v930 = vrot.slane %v925, %v929
        %v932 = vmul.f32 %v923, %v930
        %v933 = vmul.f32 %v924, %v930
        %v934 = vpack.c.bf16 %v933, %v932
        %v935 = vld [vmem:[%s885] sm:$0xf]
        %v936 = vld [vmem:[%s885 + $0x4] sm:$0xf]
        %v937 = vld [vmem:[%s885 + $0x8] sm:$0xf]
        %v938 = vld [vmem:[%s885 + $0xc] sm:$0xf]
        %v939 = vld [vmem:[%s885 + $0x10] sm:$0xf]
        %v940 = vld [vmem:[%s885 + $0x14] sm:$0xf]
        %v941 = vld [vmem:[%s885 + $0x18] sm:$0xf]
        %v942 = vld [vmem:[%s885 + $0x1c] sm:$0xf]
        %v943 = vld [vmem:[%s885 + $0x20] sm:$0xf]
        %v944 = vld [vmem:[%s885 + $0x24] sm:$0xf]
        %v945 = vld [vmem:[%s885 + $0x28] sm:$0xf]
        %v946 = vld [vmem:[%s885 + $0x2c] sm:$0xf]
        %v947 = vld [vmem:[%s885 + $0x30] sm:$0xf]
        %v948 = vld [vmem:[%s885 + $0x34] sm:$0xf]
        %v949 = vld [vmem:[%s885 + $0x38] sm:$0xf]
        %v950 = vld [vmem:[%s885 + $0x3c] sm:$0xf]
        %v967 = vunpack.c.l.b16 %v935
        %v968 = vunpack.c.l.b16 %v936
        %v969 = vunpack.c.l.b16 %v937
        %v970 = vunpack.c.l.b16 %v938
        %v971 = vunpack.c.l.b16 %v939
        %v972 = vunpack.c.l.b16 %v940
        %v973 = vunpack.c.l.b16 %v941
        %v974 = vunpack.c.l.b16 %v942
        %v975 = vunpack.c.l.b16 %v943
        %v976 = vunpack.c.l.b16 %v944
        %v977 = vunpack.c.l.b16 %v945
        %v978 = vunpack.c.l.b16 %v946
        %v979 = vunpack.c.l.b16 %v947
        %v980 = vunpack.c.l.b16 %v948
        %v981 = vunpack.c.l.b16 %v949
        %v982 = vunpack.c.l.b16 %v950
        %v983 = vpack.c.b16 %v968, %v967
        %v984 = vpack.c.b16 %v970, %v969
        %v985 = vpack.c.b16 %v972, %v971
        %v986 = vpack.c.b16 %v974, %v973
        %v987 = vpack.c.b16 %v976, %v975
        %v988 = vpack.c.b16 %v978, %v977
        %v989 = vpack.c.b16 %v980, %v979
        %v990 = vpack.c.b16 %v982, %v981
        %999 = vmatprep.subr.bf16.mxu0 0
        %1000 = vmatpush1.bf16.msra.mxu0 %v983
        %1001 = vmatprep.subr.bf16.mxu0 0
        %1002 = vmatpush1.bf16.msra.mxu0 %v984
        %1003 = vmatprep.subr.bf16.mxu0 0
        %1004 = vmatpush1.bf16.msra.mxu0 %v985
        %1005 = vmatprep.subr.bf16.mxu0 0
        %1006 = vmatpush1.bf16.msra.mxu0 %v986
        %1007 = vmatprep.subr.bf16.mxu0 0
        %1008 = vmatpush1.bf16.msra.mxu0 %v987
        %1009 = vmatprep.subr.bf16.mxu0 0
        %1010 = vmatpush1.bf16.msra.mxu0 %v988
        %1011 = vmatprep.subr.bf16.mxu0 0
        %1012 = vmatpush1.bf16.msra.mxu0 %v989
        %1013 = vmatprep.subr.bf16.mxu0 0
        %1014 = vmatpush1.bf16.msra.mxu0 %v990
        %1015 = vmatprep.subr.bf16.mxu0 0
        %1016 = vmatpush1.bf16.msra.mxu0 0
        %1017 = vmatprep.subr.bf16.mxu0 0
        %1018 = vmatpush1.bf16.msra.mxu0 0
        %1019 = vmatprep.subr.bf16.mxu0 0
        %1020 = vmatpush1.bf16.msra.mxu0 0
        %1021 = vmatprep.subr.bf16.mxu0 0
        %1022 = vmatpush1.bf16.msra.mxu0 0
        %1023 = vmatprep.subr.bf16.mxu0 0
        %1024 = vmatpush1.bf16.msra.mxu0 0
        %1025 = vmatprep.subr.bf16.mxu0 0
        %1026 = vmatpush1.bf16.msra.mxu0 0
        %1027 = vmatprep.subr.bf16.mxu0 0
        %1028 = vmatpush1.bf16.msra.mxu0 0
        %1029 = vmatprep.subr.bf16.mxu0 0
        %1030 = vmatpush1.bf16.msra.mxu0 0
        %1031 = vmatprep.mubr.bf16.mxu0 0
        %1032 = vmatmul.mubr.bf16.gmra.mrb[0].mxu0 %v934
        %v1033 = vpop.f32.mrb[0].mxu0
        %v1034 = vadd.f32 0.0, %v1033
        %v1035 = vpop.f32.mrb[0].mxu0
        %v1036 = vpop.f32.mrb[0].mxu0
        %v1037 = vadd.f32 0.0, %v1036
        %v1038 = vpop.f32.mrb[0].mxu0
        %1039 = vdwg.mxu0
        %v1040 = vld [vmem:[%s713] sm:$0xf]
        %v1041 = vld [vmem:[%s713 + $0x4] sm:$0xf]
        %v1042 = vld [vmem:[%s713 + $0x8] sm:$0xf]
        %v1043 = vld [vmem:[%s713 + $0xc] sm:$0xf]
        %v1044 = vld [vmem:[%s713 + $0x10] sm:$0xf]
        %v1045 = vld [vmem:[%s713 + $0x14] sm:$0xf]
        %v1046 = vld [vmem:[%s713 + $0x18] sm:$0xf]
        %v1047 = vld [vmem:[%s713 + $0x1c] sm:$0xf]
        %v1048 = vld [vmem:[%s713 + $0x20] sm:$0xf]
        %v1049 = vld [vmem:[%s713 + $0x24] sm:$0xf]
        %v1050 = vld [vmem:[%s713 + $0x28] sm:$0xf]
        %v1051 = vld [vmem:[%s713 + $0x2c] sm:$0xf]
        %v1052 = vld [vmem:[%s713 + $0x30] sm:$0xf]
        %v1053 = vld [vmem:[%s713 + $0x34] sm:$0xf]
        %v1054 = vld [vmem:[%s713 + $0x38] sm:$0xf]
        %v1055 = vld [vmem:[%s713 + $0x3c] sm:$0xf]
        %v1072 = vunpack.c.l.b16 %v1040
        %v1073 = vunpack.c.l.b16 %v1041
        %v1074 = vunpack.c.l.b16 %v1042
        %v1075 = vunpack.c.l.b16 %v1043
        %v1076 = vunpack.c.l.b16 %v1044
        %v1077 = vunpack.c.l.b16 %v1045
        %v1078 = vunpack.c.l.b16 %v1046
        %v1079 = vunpack.c.l.b16 %v1047
        %v1080 = vunpack.c.l.b16 %v1048
        %v1081 = vunpack.c.l.b16 %v1049
        %v1082 = vunpack.c.l.b16 %v1050
        %v1083 = vunpack.c.l.b16 %v1051
        %v1084 = vunpack.c.l.b16 %v1052
        %v1085 = vunpack.c.l.b16 %v1053
        %v1086 = vunpack.c.l.b16 %v1054
        %v1087 = vunpack.c.l.b16 %v1055
        %v1088 = vpack.c.b16 %v1073, %v1072
        %v1089 = vpack.c.b16 %v1075, %v1074
        %v1090 = vpack.c.b16 %v1077, %v1076
        %v1091 = vpack.c.b16 %v1079, %v1078
        %v1092 = vpack.c.b16 %v1081, %v1080
        %v1093 = vpack.c.b16 %v1083, %v1082
        %v1094 = vpack.c.b16 %v1085, %v1084
        %v1095 = vpack.c.b16 %v1087, %v1086
        %1104 = vmatprep.subr.bf16.mxu0 0
        %1105 = vmatpush1.bf16.msra.mxu0 %v1088
        %1106 = vmatprep.subr.bf16.mxu0 0
        %1107 = vmatpush1.bf16.msra.mxu0 %v1089
        %1108 = vmatprep.subr.bf16.mxu0 0
        %1109 = vmatpush1.bf16.msra.mxu0 %v1090
        %1110 = vmatprep.subr.bf16.mxu0 0
        %1111 = vmatpush1.bf16.msra.mxu0 %v1091
        %1112 = vmatprep.subr.bf16.mxu0 0
        %1113 = vmatpush1.bf16.msra.mxu0 %v1092
        %1114 = vmatprep.subr.bf16.mxu0 0
        %1115 = vmatpush1.bf16.msra.mxu0 %v1093
        %1116 = vmatprep.subr.bf16.mxu0 0
        %1117 = vmatpush1.bf16.msra.mxu0 %v1094
        %1118 = vmatprep.subr.bf16.mxu0 0
        %1119 = vmatpush1.bf16.msra.mxu0 %v1095
        %1120 = vmatprep.subr.bf16.mxu0 0
        %1121 = vmatpush1.bf16.msra.mxu0 0
        %1122 = vmatprep.subr.bf16.mxu0 0
        %1123 = vmatpush1.bf16.msra.mxu0 0
        %1124 = vmatprep.subr.bf16.mxu0 0
        %1125 = vmatpush1.bf16.msra.mxu0 0
        %1126 = vmatprep.subr.bf16.mxu0 0
        %1127 = vmatpush1.bf16.msra.mxu0 0
        %1128 = vmatprep.subr.bf16.mxu0 0
        %1129 = vmatpush1.bf16.msra.mxu0 0
        %1130 = vmatprep.subr.bf16.mxu0 0
        %1131 = vmatpush1.bf16.msra.mxu0 0
        %1132 = vmatprep.subr.bf16.mxu0 0
        %1133 = vmatpush1.bf16.msra.mxu0 0
        %1134 = vmatprep.subr.bf16.mxu0 0
        %1135 = vmatpush1.bf16.msra.mxu0 0
        %1136 = vmatprep.mubr.bf16.mxu0 0
        %1137 = vmatmul.mubr.bf16.gmra.mrb[0].mxu0 %v934
        %v1138 = vpop.f32.mrb[0].mxu0
        %v1139 = vadd.f32 0.0, %v1138
        %v1140 = vpop.f32.mrb[0].mxu0
        %v1141 = vpop.f32.mrb[0].mxu0
        %v1142 = vadd.f32 0.0, %v1141
        %v1143 = vpop.f32.mrb[0].mxu0
        %1144 = vdwg.mxu0
        %v1145 = vld [vmem:[%s722] sm:$0xf]
        %v1146 = vld [vmem:[%s722 + $0x4] sm:$0xf]
        %v1147 = vld [vmem:[%s722 + $0x8] sm:$0xf]
        %v1148 = vld [vmem:[%s722 + $0xc] sm:$0xf]
        %v1149 = vld [vmem:[%s722 + $0x10] sm:$0xf]
        %v1150 = vld [vmem:[%s722 + $0x14] sm:$0xf]
        %v1151 = vld [vmem:[%s722 + $0x18] sm:$0xf]
        %v1152 = vld [vmem:[%s722 + $0x1c] sm:$0xf]
        %v1153 = vld [vmem:[%s722 + $0x20] sm:$0xf]
        %v1154 = vld [vmem:[%s722 + $0x24] sm:$0xf]
        %v1155 = vld [vmem:[%s722 + $0x28] sm:$0xf]
        %v1156 = vld [vmem:[%s722 + $0x2c] sm:$0xf]
        %v1157 = vld [vmem:[%s722 + $0x30] sm:$0xf]
        %v1158 = vld [vmem:[%s722 + $0x34] sm:$0xf]
        %v1159 = vld [vmem:[%s722 + $0x38] sm:$0xf]
        %v1160 = vld [vmem:[%s722 + $0x3c] sm:$0xf]
        %v1177 = vunpack.c.l.b16 %v1145
        %v1178 = vunpack.c.l.b16 %v1146
        %v1179 = vunpack.c.l.b16 %v1147
        %v1180 = vunpack.c.l.b16 %v1148
        %v1181 = vunpack.c.l.b16 %v1149
        %v1182 = vunpack.c.l.b16 %v1150
        %v1183 = vunpack.c.l.b16 %v1151
        %v1184 = vunpack.c.l.b16 %v1152
        %v1185 = vunpack.c.l.b16 %v1153
        %v1186 = vunpack.c.l.b16 %v1154
        %v1187 = vunpack.c.l.b16 %v1155
        %v1188 = vunpack.c.l.b16 %v1156
        %v1189 = vunpack.c.l.b16 %v1157
        %v1190 = vunpack.c.l.b16 %v1158
        %v1191 = vunpack.c.l.b16 %v1159
        %v1192 = vunpack.c.l.b16 %v1160
        %v1193 = vpack.c.b16 %v1178, %v1177
        %v1194 = vpack.c.b16 %v1180, %v1179
        %v1195 = vpack.c.b16 %v1182, %v1181
        %v1196 = vpack.c.b16 %v1184, %v1183
        %v1197 = vpack.c.b16 %v1186, %v1185
        %v1198 = vpack.c.b16 %v1188, %v1187
        %v1199 = vpack.c.b16 %v1190, %v1189
        %v1200 = vpack.c.b16 %v1192, %v1191
        %1209 = vmatprep.subr.bf16.mxu0 0
        %1210 = vmatpush1.bf16.msra.mxu0 %v1193
        %1211 = vmatprep.subr.bf16.mxu0 0
        %1212 = vmatpush1.bf16.msra.mxu0 %v1194
        %1213 = vmatprep.subr.bf16.mxu0 0
        %1214 = vmatpush1.bf16.msra.mxu0 %v1195
        %1215 = vmatprep.subr.bf16.mxu0 0
        %1216 = vmatpush1.bf16.msra.mxu0 %v1196
        %1217 = vmatprep.subr.bf16.mxu0 0
        %1218 = vmatpush1.bf16.msra.mxu0 %v1197
        %1219 = vmatprep.subr.bf16.mxu0 0
        %1220 = vmatpush1.bf16.msra.mxu0 %v1198
        %1221 = vmatprep.subr.bf16.mxu0 0
        %1222 = vmatpush1.bf16.msra.mxu0 %v1199
        %1223 = vmatprep.subr.bf16.mxu0 0
        %1224 = vmatpush1.bf16.msra.mxu0 %v1200
        %1225 = vmatprep.subr.bf16.mxu0 0
        %1226 = vmatpush1.bf16.msra.mxu0 0
        %1227 = vmatprep.subr.bf16.mxu0 0
        %1228 = vmatpush1.bf16.msra.mxu0 0
        %1229 = vmatprep.subr.bf16.mxu0 0
        %1230 = vmatpush1.bf16.msra.mxu0 0
        %1231 = vmatprep.subr.bf16.mxu0 0
        %1232 = vmatpush1.bf16.msra.mxu0 0
        %1233 = vmatprep.subr.bf16.mxu0 0
        %1234 = vmatpush1.bf16.msra.mxu0 0
        %1235 = vmatprep.subr.bf16.mxu0 0
        %1236 = vmatpush1.bf16.msra.mxu0 0
        %1237 = vmatprep.subr.bf16.mxu0 0
        %1238 = vmatpush1.bf16.msra.mxu0 0
        %1239 = vmatprep.subr.bf16.mxu0 0
        %1240 = vmatpush1.bf16.msra.mxu0 0
        %1241 = vmatprep.mubr.bf16.mxu0 0
        %1242 = vmatmul.mubr.bf16.gmra.mrb[0].mxu0 %v934
        %v1243 = vpop.f32.mrb[0].mxu0
        %v1244 = vadd.f32 0.0, %v1243
        %v1245 = vpop.f32.mrb[0].mxu0
        %v1246 = vpop.f32.mrb[0].mxu0
        %v1247 = vadd.f32 0.0, %v1246
        %v1248 = vpop.f32.mrb[0].mxu0
        %1249 = vdwg.mxu0
        %v1250 = vld [vmem:[%s731] sm:$0xf]
        %v1251 = vld [vmem:[%s731 + $0x4] sm:$0xf]
        %v1252 = vld [vmem:[%s731 + $0x8] sm:$0xf]
        %v1253 = vld [vmem:[%s731 + $0xc] sm:$0xf]
        %v1254 = vld [vmem:[%s731 + $0x10] sm:$0xf]
        %v1255 = vld [vmem:[%s731 + $0x14] sm:$0xf]
        %v1256 = vld [vmem:[%s731 + $0x18] sm:$0xf]
        %v1257 = vld [vmem:[%s731 + $0x1c] sm:$0xf]
        %v1258 = vld [vmem:[%s731 + $0x20] sm:$0xf]
        %v1259 = vld [vmem:[%s731 + $0x24] sm:$0xf]
        %v1260 = vld [vmem:[%s731 + $0x28] sm:$0xf]
        %v1261 = vld [vmem:[%s731 + $0x2c] sm:$0xf]
        %v1262 = vld [vmem:[%s731 + $0x30] sm:$0xf]
        %v1263 = vld [vmem:[%s731 + $0x34] sm:$0xf]
        %v1264 = vld [vmem:[%s731 + $0x38] sm:$0xf]
        %v1265 = vld [vmem:[%s731 + $0x3c] sm:$0xf]
        %v1282 = vunpack.c.l.b16 %v1250
        %v1283 = vunpack.c.l.b16 %v1251
        %v1284 = vunpack.c.l.b16 %v1252
        %v1285 = vunpack.c.l.b16 %v1253
        %v1286 = vunpack.c.l.b16 %v1254
        %v1287 = vunpack.c.l.b16 %v1255
        %v1288 = vunpack.c.l.b16 %v1256
        %v1289 = vunpack.c.l.b16 %v1257
        %v1290 = vunpack.c.l.b16 %v1258
        %v1291 = vunpack.c.l.b16 %v1259
        %v1292 = vunpack.c.l.b16 %v1260
        %v1293 = vunpack.c.l.b16 %v1261
        %v1294 = vunpack.c.l.b16 %v1262
        %v1295 = vunpack.c.l.b16 %v1263
        %v1296 = vunpack.c.l.b16 %v1264
        %v1297 = vunpack.c.l.b16 %v1265
        %v1298 = vpack.c.b16 %v1283, %v1282
        %v1299 = vpack.c.b16 %v1285, %v1284
        %v1300 = vpack.c.b16 %v1287, %v1286
        %v1301 = vpack.c.b16 %v1289, %v1288
        %v1302 = vpack.c.b16 %v1291, %v1290
        %v1303 = vpack.c.b16 %v1293, %v1292
        %v1304 = vpack.c.b16 %v1295, %v1294
        %v1305 = vpack.c.b16 %v1297, %v1296
        %1314 = vmatprep.subr.bf16.mxu0 0
        %1315 = vmatpush1.bf16.msra.mxu0 %v1298
        %1316 = vmatprep.subr.bf16.mxu0 0
        %1317 = vmatpush1.bf16.msra.mxu0 %v1299
        %1318 = vmatprep.subr.bf16.mxu0 0
        %1319 = vmatpush1.bf16.msra.mxu0 %v1300
        %1320 = vmatprep.subr.bf16.mxu0 0
        %1321 = vmatpush1.bf16.msra.mxu0 %v1301
        %1322 = vmatprep.subr.bf16.mxu0 0
        %1323 = vmatpush1.bf16.msra.mxu0 %v1302
        %1324 = vmatprep.subr.bf16.mxu0 0
        %1325 = vmatpush1.bf16.msra.mxu0 %v1303
        %1326 = vmatprep.subr.bf16.mxu0 0
        %1327 = vmatpush1.bf16.msra.mxu0 %v1304
        %1328 = vmatprep.subr.bf16.mxu0 0
        %1329 = vmatpush1.bf16.msra.mxu0 %v1305
        %1330 = vmatprep.subr.bf16.mxu0 0
        %1331 = vmatpush1.bf16.msra.mxu0 0
        %1332 = vmatprep.subr.bf16.mxu0 0
        %1333 = vmatpush1.bf16.msra.mxu0 0
        %1334 = vmatprep.subr.bf16.mxu0 0
        %1335 = vmatpush1.bf16.msra.mxu0 0
        %1336 = vmatprep.subr.bf16.mxu0 0
        %1337 = vmatpush1.bf16.msra.mxu0 0
        %1338 = vmatprep.subr.bf16.mxu0 0
        %1339 = vmatpush1.bf16.msra.mxu0 0
        %1340 = vmatprep.subr.bf16.mxu0 0
        %1341 = vmatpush1.bf16.msra.mxu0 0
        %1342 = vmatprep.subr.bf16.mxu0 0
        %1343 = vmatpush1.bf16.msra.mxu0 0
        %1344 = vmatprep.subr.bf16.mxu0 0
        %1345 = vmatpush1.bf16.msra.mxu0 0
        %1346 = vmatprep.mubr.bf16.mxu0 0
        %1347 = vmatmul.mubr.bf16.gmra.mrb[0].mxu0 %v934
        %v1348 = vpop.f32.mrb[0].mxu0
        %v1349 = vadd.f32 0.0, %v1348
        %v1350 = vpop.f32.mrb[0].mxu0
        %v1351 = vpop.f32.mrb[0].mxu0
        %v1352 = vadd.f32 0.0, %v1351
        %v1353 = vpop.f32.mrb[0].mxu0
        %1354 = vdwg.mxu0
        %v1355 = vld [vmem:[%s740] sm:$0xf]
        %v1356 = vld [vmem:[%s740 + $0x4] sm:$0xf]
        %v1357 = vld [vmem:[%s740 + $0x8] sm:$0xf]
        %v1358 = vld [vmem:[%s740 + $0xc] sm:$0xf]
        %v1359 = vld [vmem:[%s740 + $0x10] sm:$0xf]
        %v1360 = vld [vmem:[%s740 + $0x14] sm:$0xf]
        %v1361 = vld [vmem:[%s740 + $0x18] sm:$0xf]
        %v1362 = vld [vmem:[%s740 + $0x1c] sm:$0xf]
        %v1363 = vld [vmem:[%s740 + $0x20] sm:$0xf]
        %v1364 = vld [vmem:[%s740 + $0x24] sm:$0xf]
        %v1365 = vld [vmem:[%s740 + $0x28] sm:$0xf]
        %v1366 = vld [vmem:[%s740 + $0x2c] sm:$0xf]
        %v1367 = vld [vmem:[%s740 + $0x30] sm:$0xf]
        %v1368 = vld [vmem:[%s740 + $0x34] sm:$0xf]
        %v1369 = vld [vmem:[%s740 + $0x38] sm:$0xf]
        %v1370 = vld [vmem:[%s740 + $0x3c] sm:$0xf]
        %v1387 = vunpack.c.l.b16 %v1355
        %v1388 = vunpack.c.l.b16 %v1356
        %v1389 = vunpack.c.l.b16 %v1357
        %v1390 = vunpack.c.l.b16 %v1358
        %v1391 = vunpack.c.l.b16 %v1359
        %v1392 = vunpack.c.l.b16 %v1360
        %v1393 = vunpack.c.l.b16 %v1361
        %v1394 = vunpack.c.l.b16 %v1362
        %v1395 = vunpack.c.l.b16 %v1363
        %v1396 = vunpack.c.l.b16 %v1364
        %v1397 = vunpack.c.l.b16 %v1365
        %v1398 = vunpack.c.l.b16 %v1366
        %v1399 = vunpack.c.l.b16 %v1367
        %v1400 = vunpack.c.l.b16 %v1368
        %v1401 = vunpack.c.l.b16 %v1369
        %v1402 = vunpack.c.l.b16 %v1370
        %v1403 = vpack.c.b16 %v1388, %v1387
        %v1404 = vpack.c.b16 %v1390, %v1389
        %v1405 = vpack.c.b16 %v1392, %v1391
        %v1406 = vpack.c.b16 %v1394, %v1393
        %v1407 = vpack.c.b16 %v1396, %v1395
        %v1408 = vpack.c.b16 %v1398, %v1397
        %v1409 = vpack.c.b16 %v1400, %v1399
        %v1410 = vpack.c.b16 %v1402, %v1401
        %1419 = vmatprep.subr.bf16.mxu0 0
        %1420 = vmatpush1.bf16.msra.mxu0 %v1403
        %1421 = vmatprep.subr.bf16.mxu0 0
        %1422 = vmatpush1.bf16.msra.mxu0 %v1404
        %1423 = vmatprep.subr.bf16.mxu0 0
        %1424 = vmatpush1.bf16.msra.mxu0 %v1405
        %1425 = vmatprep.subr.bf16.mxu0 0
        %1426 = vmatpush1.bf16.msra.mxu0 %v1406
        %1427 = vmatprep.subr.bf16.mxu0 0
        %1428 = vmatpush1.bf16.msra.mxu0 %v1407
        %1429 = vmatprep.subr.bf16.mxu0 0
        %1430 = vmatpush1.bf16.msra.mxu0 %v1408
        %1431 = vmatprep.subr.bf16.mxu0 0
        %1432 = vmatpush1.bf16.msra.mxu0 %v1409
        %1433 = vmatprep.subr.bf16.mxu0 0
        %1434 = vmatpush1.bf16.msra.mxu0 %v1410
        %1435 = vmatprep.subr.bf16.mxu0 0
        %1436 = vmatpush1.bf16.msra.mxu0 0
        %1437 = vmatprep.subr.bf16.mxu0 0
        %1438 = vmatpush1.bf16.msra.mxu0 0
        %1439 = vmatprep.subr.bf16.mxu0 0
        %1440 = vmatpush1.bf16.msra.mxu0 0
        %1441 = vmatprep.subr.bf16.mxu0 0
        %1442 = vmatpush1.bf16.msra.mxu0 0
        %1443 = vmatprep.subr.bf16.mxu0 0
        %1444 = vmatpush1.bf16.msra.mxu0 0
        %1445 = vmatprep.subr.bf16.mxu0 0
        %1446 = vmatpush1.bf16.msra.mxu0 0
        %1447 = vmatprep.subr.bf16.mxu0 0
        %1448 = vmatpush1.bf16.msra.mxu0 0
        %1449 = vmatprep.subr.bf16.mxu0 0
        %1450 = vmatpush1.bf16.msra.mxu0 0
        %1451 = vmatprep.mubr.bf16.mxu0 0
        %1452 = vmatmul.mubr.bf16.gmra.mrb[0].mxu0 %v934
        %v1453 = vpop.f32.mrb[0].mxu0
        %v1454 = vadd.f32 0.0, %v1453
        %v1455 = vpop.f32.mrb[0].mxu0
        %v1456 = vpop.f32.mrb[0].mxu0
        %v1457 = vadd.f32 0.0, %v1456
        %v1458 = vpop.f32.mrb[0].mxu0
        %1459 = vdwg.mxu0
        %v1460 = vld [vmem:[%s1] sm:$0xff]
        %v1461 = vld [vmem:[%s1 + $0x8] sm:$0xff]
        %v1462 = vld [vmem:[%s2] sm:$0xff]
        %v1463 = vld [vmem:[%s2 + $0x8] sm:$0xff]
        %v1464 = vmul.f32 %v1034, %v1460
        %v1465 = vmul.f32 %v1037, %v1461
        %v1466 = vmul.f32 %v1139, %v1462
        %v1467 = vmul.f32 %v1142, %v1463
        %v1468 = vadd.f32 %v1464, %v1466
        %v1469 = vadd.f32 %v1465, %v1467
        %v1470 = vmul.f32 %v1244, %v1460
        %v1471 = vmul.f32 %v1247, %v1461
        %v1472 = vmul.f32 %v1349, %v1462
        %v1473 = vmul.f32 %v1352, %v1463
        %v1474 = vadd.f32 %v1470, %v1472
        %v1475 = vadd.f32 %v1471, %v1473
        %1476 = vst [vmem:[%s893] sm:$0xff] %v1474
        %1477 = vst [vmem:[%s893 + $0x8] sm:$0xff] %v1475
        %1478 = vst [vmem:[%s898] sm:$0xff] %v1454
        %1479 = vst [vmem:[%s898 + $0x8] sm:$0xff] %v1457
        %v1480 = vld [vmem:[%s3] sm:$0xff]
        %v1481 = vld [vmem:[%s749] sm:$0xf]
        %v1482 = vld [vmem:[%s749 + $0x4] sm:$0xf]
        %v1483 = vld [vmem:[%s749 + $0x8] sm:$0xf]
        %v1484 = vld [vmem:[%s749 + $0xc] sm:$0xf]
        %v1485 = vld [vmem:[%s749 + $0x10] sm:$0xf]
        %v1486 = vld [vmem:[%s749 + $0x14] sm:$0xf]
        %v1487 = vld [vmem:[%s749 + $0x18] sm:$0xf]
        %v1488 = vld [vmem:[%s749 + $0x1c] sm:$0xf]
        %v1489 = vld [vmem:[%s749 + $0x20] sm:$0xf]
        %v1490 = vld [vmem:[%s749 + $0x24] sm:$0xf]
        %v1491 = vld [vmem:[%s749 + $0x28] sm:$0xf]
        %v1492 = vld [vmem:[%s749 + $0x2c] sm:$0xf]
        %v1493 = vld [vmem:[%s749 + $0x30] sm:$0xf]
        %v1494 = vld [vmem:[%s749 + $0x34] sm:$0xf]
        %v1495 = vld [vmem:[%s749 + $0x38] sm:$0xf]
        %v1496 = vld [vmem:[%s749 + $0x3c] sm:$0xf]
        %vm1497 = vcmask 523264
        %v1499 = vsel %vm1497, %v1468, 0
        %v1502 = vsel %vm1497, %v1474, 0
        %1504 = vmatprep.subr.mxu0 0.0
        %1505 = vmatpush1.xpose.msra.mxu0 %v1502
        %1506 = vmatprep.subr.mxu0 0.0
        %1507 = vmatpush1.xpose.msra.mxu0 0.0
        %1508 = vmatprep.subr.mxu0 0.0
        %1509 = vmatpush1.xpose.msra.mxu0 0.0
        %1510 = vmatprep.subr.mxu0 0.0
        %1511 = vmatpush1.xpose.msra.mxu0 0.0
        %1512 = vmatprep.subr.mxu0 0.0
        %1513 = vmatpush1.xpose.msra.mxu0 0.0
        %1514 = vmatprep.subr.mxu0 0.0
        %1515 = vmatpush1.xpose.msra.mxu0 0.0
        %1516 = vmatprep.subr.mxu0 0.0
        %1517 = vmatpush1.xpose.msra.mxu0 0.0
        %1518 = vmatprep.subr.mxu0 0.0
        %1519 = vmatpush1.xpose.msra.mxu0 0.0
        %1520 = vmatprep.subr.mxu0 0.0
        %1521 = vmatpush1.xpose.msra.mxu0 0.0
        %1522 = vmatprep.subr.mxu0 0.0
        %1523 = vmatpush1.xpose.msra.mxu0 0.0
        %1524 = vmatprep.subr.mxu0 0.0
        %1525 = vmatpush1.xpose.msra.mxu0 0.0
        %1526 = vmatprep.subr.mxu0 0.0
        %1527 = vmatpush1.xpose.msra.mxu0 0.0
        %1528 = vmatprep.subr.mxu0 0.0
        %1529 = vmatpush1.xpose.msra.mxu0 0.0
        %1530 = vmatprep.subr.mxu0 0.0
        %1531 = vmatpush1.xpose.msra.mxu0 0.0
        %1532 = vmatprep.subr.mxu0 0.0
        %1533 = vmatpush1.xpose.msra.mxu0 0.0
        %1534 = vmatprep.subr.mxu0 0.0
        %1535 = vmatpush1.xpose.msra.mxu0 0.0
        %1536 = vmatprep.subr.mxu0 0.0
        %1537 = vmatpush1.xpose.msra.mxu0 0.0
        %1538 = vmatprep.subr.mxu0 0.0
        %1539 = vmatpush1.xpose.msra.mxu0 0.0
        %1540 = vmatprep.subr.mxu0 0.0
        %1541 = vmatpush1.xpose.msra.mxu0 0.0
        %1542 = vmatprep.subr.mxu0 0.0
        %1543 = vmatpush1.xpose.msra.mxu0 0.0
        %1544 = vmatprep.subr.mxu0 0.0
        %1545 = vmatpush1.xpose.msra.mxu0 0.0
        %1546 = vmatprep.subr.mxu0 0.0
        %1547 = vmatpush1.xpose.msra.mxu0 0.0
        %1548 = vmatprep.subr.mxu0 0.0
        %1549 = vmatpush1.xpose.msra.mxu0 0.0
        %1550 = vmatprep.subr.mxu0 0.0
        %1551 = vmatpush1.xpose.msra.mxu0 0.0
        %1552 = vmatprep.subr.mxu0 0.0
        %1553 = vmatpush1.xpose.msra.mxu0 0.0
        %1554 = vmatprep.subr.mxu0 0.0
        %1555 = vmatpush1.xpose.msra.mxu0 0.0
        %1556 = vmatprep.subr.mxu0 0.0
        %1557 = vmatpush1.xpose.msra.mxu0 0.0
        %1558 = vmatprep.subr.mxu0 0.0
        %1559 = vmatpush1.xpose.msra.mxu0 0.0
        %1560 = vmatprep.subr.mxu0 0.0
        %1561 = vmatpush1.xpose.msra.mxu0 0.0
        %1562 = vmatprep.subr.mxu0 0.0
        %1563 = vmatpush1.xpose.msra.mxu0 0.0
        %1564 = vmatprep.subr.mxu0 0.0
        %1565 = vmatpush1.xpose.msra.mxu0 0.0
        %1566 = vmatprep.subr.mxu0 0.0
        %1567 = vmatpush1.xpose.msra.mxu0 0.0
        %1568 = vmatprep.mubr.f32.mxu0 0.0
        %1569 = vmatmul.mubr.f32.gmra.mrb[0].mxu0 %v1499
        %v1570 = vpop.f32.mrb[0].mxu0
        %v1571 = vadd.f32 0.0, %v1570
        %v1572 = vpop.f32.mrb[0].mxu0
        %1573 = vdwg.mxu0
        %v1575 = vsel %vm1497, %v1469, 0
        %v1578 = vsel %vm1497, %v1475, 0
        %1580 = vmatprep.subr.mxu0 0.0
        %1581 = vmatpush1.xpose.msra.mxu0 %v1578
        %1582 = vmatprep.subr.mxu0 0.0
        %1583 = vmatpush1.xpose.msra.mxu0 0.0
        %1584 = vmatprep.subr.mxu0 0.0
        %1585 = vmatpush1.xpose.msra.mxu0 0.0
        %1586 = vmatprep.subr.mxu0 0.0
        %1587 = vmatpush1.xpose.msra.mxu0 0.0
        %1588 = vmatprep.subr.mxu0 0.0
        %1589 = vmatpush1.xpose.msra.mxu0 0.0
        %1590 = vmatprep.subr.mxu0 0.0
        %1591 = vmatpush1.xpose.msra.mxu0 0.0
        %1592 = vmatprep.subr.mxu0 0.0
        %1593 = vmatpush1.xpose.msra.mxu0 0.0
        %1594 = vmatprep.subr.mxu0 0.0
        %1595 = vmatpush1.xpose.msra.mxu0 0.0
        %1596 = vmatprep.subr.mxu0 0.0
        %1597 = vmatpush1.xpose.msra.mxu0 0.0
        %1598 = vmatprep.subr.mxu0 0.0
        %1599 = vmatpush1.xpose.msra.mxu0 0.0
        %1600 = vmatprep.subr.mxu0 0.0
        %1601 = vmatpush1.xpose.msra.mxu0 0.0
        %1602 = vmatprep.subr.mxu0 0.0
        %1603 = vmatpush1.xpose.msra.mxu0 0.0
        %1604 = vmatprep.subr.mxu0 0.0
        %1605 = vmatpush1.xpose.msra.mxu0 0.0
        %1606 = vmatprep.subr.mxu0 0.0
        %1607 = vmatpush1.xpose.msra.mxu0 0.0
        %1608 = vmatprep.subr.mxu0 0.0
        %1609 = vmatpush1.xpose.msra.mxu0 0.0
        %1610 = vmatprep.subr.mxu0 0.0
        %1611 = vmatpush1.xpose.msra.mxu0 0.0
        %1612 = vmatprep.subr.mxu0 0.0
        %1613 = vmatpush1.xpose.msra.mxu0 0.0
        %1614 = vmatprep.subr.mxu0 0.0
        %1615 = vmatpush1.xpose.msra.mxu0 0.0
        %1616 = vmatprep.subr.mxu0 0.0
        %1617 = vmatpush1.xpose.msra.mxu0 0.0
        %1618 = vmatprep.subr.mxu0 0.0
        %1619 = vmatpush1.xpose.msra.mxu0 0.0
        %1620 = vmatprep.subr.mxu0 0.0
        %1621 = vmatpush1.xpose.msra.mxu0 0.0
        %1622 = vmatprep.subr.mxu0 0.0
        %1623 = vmatpush1.xpose.msra.mxu0 0.0
        %1624 = vmatprep.subr.mxu0 0.0
        %1625 = vmatpush1.xpose.msra.mxu0 0.0
        %1626 = vmatprep.subr.mxu0 0.0
        %1627 = vmatpush1.xpose.msra.mxu0 0.0
        %1628 = vmatprep.subr.mxu0 0.0
        %1629 = vmatpush1.xpose.msra.mxu0 0.0
        %1630 = vmatprep.subr.mxu0 0.0
        %1631 = vmatpush1.xpose.msra.mxu0 0.0
        %1632 = vmatprep.subr.mxu0 0.0
        %1633 = vmatpush1.xpose.msra.mxu0 0.0
        %1634 = vmatprep.subr.mxu0 0.0
        %1635 = vmatpush1.xpose.msra.mxu0 0.0
        %1636 = vmatprep.subr.mxu0 0.0
        %1637 = vmatpush1.xpose.msra.mxu0 0.0
        %1638 = vmatprep.subr.mxu0 0.0
        %1639 = vmatpush1.xpose.msra.mxu0 0.0
        %1640 = vmatprep.subr.mxu0 0.0
        %1641 = vmatpush1.xpose.msra.mxu0 0.0
        %1642 = vmatprep.subr.mxu0 0.0
        %1643 = vmatpush1.xpose.msra.mxu0 0.0
        %1644 = vmatprep.mubr.f32.mxu0 0.0
        %1645 = vmatmul.mubr.f32.gmra.mrb[0].mxu0 %v1575
        %v1646 = vpop.f32.mrb[0].mxu0
        %v1647 = vadd.f32 0.0, %v1646
        %v1648 = vpop.f32.mrb[0].mxu0
        %1649 = vdwg.mxu0
        %v1650 = vmul.f32 %v1571, 0.125
        %v1651 = vmul.f32 %v1647, 0.125
        %v1652 = vadd.f32 %v1650, %v1480
        %v1653 = vadd.f32 %v1651, %v1480
        %vm1654 = vcmask 64512
        %v1655 = vsel %vm1654, %v1652, -inf
        %1656 = vmax.xlane.f32.xlu0 %v1655
        %v1657 = vpop.xlane.xlu0 %1656
        %v1658 = vsel %vm1654, %v1653, -inf
        %1659 = vmax.xlane.f32.xlu0 %v1658
        %v1660 = vpop.xlane.xlu0 %1659
        %v1661 = vsub.f32 %v1652, %v1657
        %v1662 = vsub.f32 %v1653, %v1660
        %v1663 = vmul.f32 %v1661, 1.442695
        %v1664 = vpow.pop %v1663
        %v1665 = vmul.f32 %v1662, 1.442695
        %v1666 = vpow.pop %v1665
        %v1667 = vsel %vm1654, %v1664, 0.0
        %1668 = vadd.xlane.f32.xlu0 %v1667
        %v1669 = vpop.xlane.xlu0 %1668
        %v1670 = vsel %vm1654, %v1666, 0.0
        %1671 = vadd.xlane.f32.xlu0 %v1670
        %v1672 = vpop.xlane.xlu0 %1671
        %v1673 = vrcp.pop %v1669
        %v1674 = vmul.f32 %v1664, %v1673
        %v1675 = vrcp.pop %v1672
        %v1676 = vmul.f32 %v1666, %v1675
        %v1678 = vsel %vm1654, %v1674, 0
        %1680 = vmatprep.subr.mxu0 0.0
        %1681 = vmatpush1.msra.mxu0 %v1454
        %1682 = vmatprep.subr.mxu0 0.0
        %1683 = vmatpush1.msra.mxu0 0.0
        %1684 = vmatprep.subr.mxu0 0.0
        %1685 = vmatpush1.msra.mxu0 0.0
        %1686 = vmatprep.subr.mxu0 0.0
        %1687 = vmatpush1.msra.mxu0 0.0
        %1688 = vmatprep.subr.mxu0 0.0
        %1689 = vmatpush1.msra.mxu0 0.0
        %1690 = vmatprep.subr.mxu0 0.0
        %1691 = vmatpush1.msra.mxu0 0.0
        %1692 = vmatprep.subr.mxu0 0.0
        %1693 = vmatpush1.msra.mxu0 0.0
        %1694 = vmatprep.subr.mxu0 0.0
        %1695 = vmatpush1.msra.mxu0 0.0
        %1696 = vmatprep.subr.mxu0 0.0
        %1697 = vmatpush1.msra.mxu0 0.0
        %1698 = vmatprep.subr.mxu0 0.0
        %1699 = vmatpush1.msra.mxu0 0.0
        %1700 = vmatprep.subr.mxu0 0.0
        %1701 = vmatpush1.msra.mxu0 0.0
        %1702 = vmatprep.subr.mxu0 0.0
        %1703 = vmatpush1.msra.mxu0 0.0
        %1704 = vmatprep.subr.mxu0 0.0
        %1705 = vmatpush1.msra.mxu0 0.0
        %1706 = vmatprep.subr.mxu0 0.0
        %1707 = vmatpush1.msra.mxu0 0.0
        %1708 = vmatprep.subr.mxu0 0.0
        %1709 = vmatpush1.msra.mxu0 0.0
        %1710 = vmatprep.subr.mxu0 0.0
        %1711 = vmatpush1.msra.mxu0 0.0
        %1712 = vmatprep.subr.mxu0 0.0
        %1713 = vmatpush1.msra.mxu0 0.0
        %1714 = vmatprep.subr.mxu0 0.0
        %1715 = vmatpush1.msra.mxu0 0.0
        %1716 = vmatprep.subr.mxu0 0.0
        %1717 = vmatpush1.msra.mxu0 0.0
        %1718 = vmatprep.subr.mxu0 0.0
        %1719 = vmatpush1.msra.mxu0 0.0
        %1720 = vmatprep.subr.mxu0 0.0
        %1721 = vmatpush1.msra.mxu0 0.0
        %1722 = vmatprep.subr.mxu0 0.0
        %1723 = vmatpush1.msra.mxu0 0.0
        %1724 = vmatprep.subr.mxu0 0.0
        %1725 = vmatpush1.msra.mxu0 0.0
        %1726 = vmatprep.subr.mxu0 0.0
        %1727 = vmatpush1.msra.mxu0 0.0
        %1728 = vmatprep.subr.mxu0 0.0
        %1729 = vmatpush1.msra.mxu0 0.0
        %1730 = vmatprep.subr.mxu0 0.0
        %1731 = vmatpush1.msra.mxu0 0.0
        %1732 = vmatprep.subr.mxu0 0.0
        %1733 = vmatpush1.msra.mxu0 0.0
        %1734 = vmatprep.subr.mxu0 0.0
        %1735 = vmatpush1.msra.mxu0 0.0
        %1736 = vmatprep.subr.mxu0 0.0
        %1737 = vmatpush1.msra.mxu0 0.0
        %1738 = vmatprep.subr.mxu0 0.0
        %1739 = vmatpush1.msra.mxu0 0.0
        %1740 = vmatprep.subr.mxu0 0.0
        %1741 = vmatpush1.msra.mxu0 0.0
        %1742 = vmatprep.subr.mxu0 0.0
        %1743 = vmatpush1.msra.mxu0 0.0
        %1744 = vmatprep.mubr.f32.mxu0 0.0
        %1745 = vmatmul.mubr.f32.gmra.mrb[0].mxu0 %v1678
        %v1746 = vpop.f32.mrb[0].mxu0
        %v1747 = vadd.f32 0.0, %v1746
        %v1748 = vpop.f32.mrb[0].mxu0
        %1749 = vdwg.mxu0
        %v1751 = vsel %vm1654, %v1676, 0
        %1753 = vmatprep.subr.mxu0 0.0
        %1754 = vmatpush1.msra.mxu0 %v1457
        %1755 = vmatprep.subr.mxu0 0.0
        %1756 = vmatpush1.msra.mxu0 0.0
        %1757 = vmatprep.subr.mxu0 0.0
        %1758 = vmatpush1.msra.mxu0 0.0
        %1759 = vmatprep.subr.mxu0 0.0
        %1760 = vmatpush1.msra.mxu0 0.0
        %1761 = vmatprep.subr.mxu0 0.0
        %1762 = vmatpush1.msra.mxu0 0.0
        %1763 = vmatprep.subr.mxu0 0.0
        %1764 = vmatpush1.msra.mxu0 0.0
        %1765 = vmatprep.subr.mxu0 0.0
        %1766 = vmatpush1.msra.mxu0 0.0
        %1767 = vmatprep.subr.mxu0 0.0
        %1768 = vmatpush1.msra.mxu0 0.0
        %1769 = vmatprep.subr.mxu0 0.0
        %1770 = vmatpush1.msra.mxu0 0.0
        %1771 = vmatprep.subr.mxu0 0.0
        %1772 = vmatpush1.msra.mxu0 0.0
        %1773 = vmatprep.subr.mxu0 0.0
        %1774 = vmatpush1.msra.mxu0 0.0
        %1775 = vmatprep.subr.mxu0 0.0
        %1776 = vmatpush1.msra.mxu0 0.0
        %1777 = vmatprep.subr.mxu0 0.0
        %1778 = vmatpush1.msra.mxu0 0.0
        %1779 = vmatprep.subr.mxu0 0.0
        %1780 = vmatpush1.msra.mxu0 0.0
        %1781 = vmatprep.subr.mxu0 0.0
        %1782 = vmatpush1.msra.mxu0 0.0
        %1783 = vmatprep.subr.mxu0 0.0
        %1784 = vmatpush1.msra.mxu0 0.0
        %1785 = vmatprep.subr.mxu0 0.0
        %1786 = vmatpush1.msra.mxu0 0.0
        %1787 = vmatprep.subr.mxu0 0.0
        %1788 = vmatpush1.msra.mxu0 0.0
        %1789 = vmatprep.subr.mxu0 0.0
        %1790 = vmatpush1.msra.mxu0 0.0
        %1791 = vmatprep.subr.mxu0 0.0
        %1792 = vmatpush1.msra.mxu0 0.0
        %1793 = vmatprep.subr.mxu0 0.0
        %1794 = vmatpush1.msra.mxu0 0.0
        %1795 = vmatprep.subr.mxu0 0.0
        %1796 = vmatpush1.msra.mxu0 0.0
        %1797 = vmatprep.subr.mxu0 0.0
        %1798 = vmatpush1.msra.mxu0 0.0
        %1799 = vmatprep.subr.mxu0 0.0
        %1800 = vmatpush1.msra.mxu0 0.0
        %1801 = vmatprep.subr.mxu0 0.0
        %1802 = vmatpush1.msra.mxu0 0.0
        %1803 = vmatprep.subr.mxu0 0.0
        %1804 = vmatpush1.msra.mxu0 0.0
        %1805 = vmatprep.subr.mxu0 0.0
        %1806 = vmatpush1.msra.mxu0 0.0
        %1807 = vmatprep.subr.mxu0 0.0
        %1808 = vmatpush1.msra.mxu0 0.0
        %1809 = vmatprep.subr.mxu0 0.0
        %1810 = vmatpush1.msra.mxu0 0.0
        %1811 = vmatprep.subr.mxu0 0.0
        %1812 = vmatpush1.msra.mxu0 0.0
        %1813 = vmatprep.subr.mxu0 0.0
        %1814 = vmatpush1.msra.mxu0 0.0
        %1815 = vmatprep.subr.mxu0 0.0
        %1816 = vmatpush1.msra.mxu0 0.0
        %1817 = vmatprep.mubr.f32.mxu0 0.0
        %1818 = vmatmul.mubr.f32.gmra.mrb[0].mxu0 %v1751
        %v1819 = vpop.f32.mrb[0].mxu0
        %v1820 = vadd.f32 0.0, %v1819
        %v1821 = vpop.f32.mrb[0].mxu0
        %1822 = vdwg.mxu0
        %v1823 = vpack.c.bf16 %v1820, %v1747
        %1824 = vrot.lane.b32.xlu0 %v1468, 64
        %v1825 = vpop.permute.xlu0 %1824
        %1826 = vrot.lane.b32.xlu0 %v1474, 64
        %v1827 = vpop.permute.xlu0 %1826
        %v1828 = vsel %vm1497, %v1825, 0
        %v1830 = vsel %vm1497, %v1827, 0
        %1832 = vmatprep.subr.mxu0 0.0
        %1833 = vmatpush1.xpose.msra.mxu0 %v1830
        %1834 = vmatprep.subr.mxu0 0.0
        %1835 = vmatpush1.xpose.msra.mxu0 0.0
        %1836 = vmatprep.subr.mxu0 0.0
        %1837 = vmatpush1.xpose.msra.mxu0 0.0
        %1838 = vmatprep.subr.mxu0 0.0
        %1839 = vmatpush1.xpose.msra.mxu0 0.0
        %1840 = vmatprep.subr.mxu0 0.0
        %1841 = vmatpush1.xpose.msra.mxu0 0.0
        %1842 = vmatprep.subr.mxu0 0.0
        %1843 = vmatpush1.xpose.msra.mxu0 0.0
        %1844 = vmatprep.subr.mxu0 0.0
        %1845 = vmatpush1.xpose.msra.mxu0 0.0
        %1846 = vmatprep.subr.mxu0 0.0
        %1847 = vmatpush1.xpose.msra.mxu0 0.0
        %1848 = vmatprep.subr.mxu0 0.0
        %1849 = vmatpush1.xpose.msra.mxu0 0.0
        %1850 = vmatprep.subr.mxu0 0.0
        %1851 = vmatpush1.xpose.msra.mxu0 0.0
        %1852 = vmatprep.subr.mxu0 0.0
        %1853 = vmatpush1.xpose.msra.mxu0 0.0
        %1854 = vmatprep.subr.mxu0 0.0
        %1855 = vmatpush1.xpose.msra.mxu0 0.0
        %1856 = vmatprep.subr.mxu0 0.0
        %1857 = vmatpush1.xpose.msra.mxu0 0.0
        %1858 = vmatprep.subr.mxu0 0.0
        %1859 = vmatpush1.xpose.msra.mxu0 0.0
        %1860 = vmatprep.subr.mxu0 0.0
        %1861 = vmatpush1.xpose.msra.mxu0 0.0
        %1862 = vmatprep.subr.mxu0 0.0
        %1863 = vmatpush1.xpose.msra.mxu0 0.0
        %1864 = vmatprep.subr.mxu0 0.0
        %1865 = vmatpush1.xpose.msra.mxu0 0.0
        %1866 = vmatprep.subr.mxu0 0.0
        %1867 = vmatpush1.xpose.msra.mxu0 0.0
        %1868 = vmatprep.subr.mxu0 0.0
        %1869 = vmatpush1.xpose.msra.mxu0 0.0
        %1870 = vmatprep.subr.mxu0 0.0
        %1871 = vmatpush1.xpose.msra.mxu0 0.0
        %1872 = vmatprep.subr.mxu0 0.0
        %1873 = vmatpush1.xpose.msra.mxu0 0.0
        %1874 = vmatprep.subr.mxu0 0.0
        %1875 = vmatpush1.xpose.msra.mxu0 0.0
        %1876 = vmatprep.subr.mxu0 0.0
        %1877 = vmatpush1.xpose.msra.mxu0 0.0
        %1878 = vmatprep.subr.mxu0 0.0
        %1879 = vmatpush1.xpose.msra.mxu0 0.0
        %1880 = vmatprep.subr.mxu0 0.0
        %1881 = vmatpush1.xpose.msra.mxu0 0.0
        %1882 = vmatprep.subr.mxu0 0.0
        %1883 = vmatpush1.xpose.msra.mxu0 0.0
        %1884 = vmatprep.subr.mxu0 0.0
        %1885 = vmatpush1.xpose.msra.mxu0 0.0
        %1886 = vmatprep.subr.mxu0 0.0
        %1887 = vmatpush1.xpose.msra.mxu0 0.0
        %1888 = vmatprep.subr.mxu0 0.0
        %1889 = vmatpush1.xpose.msra.mxu0 0.0
        %1890 = vmatprep.subr.mxu0 0.0
        %1891 = vmatpush1.xpose.msra.mxu0 0.0
        %1892 = vmatprep.subr.mxu0 0.0
        %1893 = vmatpush1.xpose.msra.mxu0 0.0
        %1894 = vmatprep.subr.mxu0 0.0
        %1895 = vmatpush1.xpose.msra.mxu0 0.0
        %1896 = vmatprep.mubr.f32.mxu0 0.0
        %1897 = vmatmul.mubr.f32.gmra.mrb[0].mxu0 %v1828
        %v1898 = vpop.f32.mrb[0].mxu0
        %v1899 = vadd.f32 0.0, %v1898
        %v1900 = vpop.f32.mrb[0].mxu0
        %1901 = vdwg.mxu0
        %1902 = vrot.lane.b32.xlu0 %v1469, 64
        %v1903 = vpop.permute.xlu0 %1902
        %1904 = vrot.lane.b32.xlu0 %v1475, 64
        %v1905 = vpop.permute.xlu0 %1904
        %v1906 = vsel %vm1497, %v1903, 0
        %v1908 = vsel %vm1497, %v1905, 0
        %1910 = vmatprep.subr.mxu0 0.0
        %1911 = vmatpush1.xpose.msra.mxu0 %v1908
        %1912 = vmatprep.subr.mxu0 0.0
        %1913 = vmatpush1.xpose.msra.mxu0 0.0
        %1914 = vmatprep.subr.mxu0 0.0
        %1915 = vmatpush1.xpose.msra.mxu0 0.0
        %1916 = vmatprep.subr.mxu0 0.0
        %1917 = vmatpush1.xpose.msra.mxu0 0.0
        %1918 = vmatprep.subr.mxu0 0.0
        %1919 = vmatpush1.xpose.msra.mxu0 0.0
        %1920 = vmatprep.subr.mxu0 0.0
        %1921 = vmatpush1.xpose.msra.mxu0 0.0
        %1922 = vmatprep.subr.mxu0 0.0
        %1923 = vmatpush1.xpose.msra.mxu0 0.0
        %1924 = vmatprep.subr.mxu0 0.0
        %1925 = vmatpush1.xpose.msra.mxu0 0.0
        %1926 = vmatprep.subr.mxu0 0.0
        %1927 = vmatpush1.xpose.msra.mxu0 0.0
        %1928 = vmatprep.subr.mxu0 0.0
        %1929 = vmatpush1.xpose.msra.mxu0 0.0
        %1930 = vmatprep.subr.mxu0 0.0
        %1931 = vmatpush1.xpose.msra.mxu0 0.0
        %1932 = vmatprep.subr.mxu0 0.0
        %1933 = vmatpush1.xpose.msra.mxu0 0.0
        %1934 = vmatprep.subr.mxu0 0.0
        %1935 = vmatpush1.xpose.msra.mxu0 0.0
        %1936 = vmatprep.subr.mxu0 0.0
        %1937 = vmatpush1.xpose.msra.mxu0 0.0
        %1938 = vmatprep.subr.mxu0 0.0
        %1939 = vmatpush1.xpose.msra.mxu0 0.0
        %1940 = vmatprep.subr.mxu0 0.0
        %1941 = vmatpush1.xpose.msra.mxu0 0.0
        %1942 = vmatprep.subr.mxu0 0.0
        %1943 = vmatpush1.xpose.msra.mxu0 0.0
        %1944 = vmatprep.subr.mxu0 0.0
        %1945 = vmatpush1.xpose.msra.mxu0 0.0
        %1946 = vmatprep.subr.mxu0 0.0
        %1947 = vmatpush1.xpose.msra.mxu0 0.0
        %1948 = vmatprep.subr.mxu0 0.0
        %1949 = vmatpush1.xpose.msra.mxu0 0.0
        %1950 = vmatprep.subr.mxu0 0.0
        %1951 = vmatpush1.xpose.msra.mxu0 0.0
        %1952 = vmatprep.subr.mxu0 0.0
        %1953 = vmatpush1.xpose.msra.mxu0 0.0
        %1954 = vmatprep.subr.mxu0 0.0
        %1955 = vmatpush1.xpose.msra.mxu0 0.0
        %1956 = vmatprep.subr.mxu0 0.0
        %1957 = vmatpush1.xpose.msra.mxu0 0.0
        %1958 = vmatprep.subr.mxu0 0.0
        %1959 = vmatpush1.xpose.msra.mxu0 0.0
        %1960 = vmatprep.subr.mxu0 0.0
        %1961 = vmatpush1.xpose.msra.mxu0 0.0
        %1962 = vmatprep.subr.mxu0 0.0
        %1963 = vmatpush1.xpose.msra.mxu0 0.0
        %1964 = vmatprep.subr.mxu0 0.0
        %1965 = vmatpush1.xpose.msra.mxu0 0.0
        %1966 = vmatprep.subr.mxu0 0.0
        %1967 = vmatpush1.xpose.msra.mxu0 0.0
        %1968 = vmatprep.subr.mxu0 0.0
        %1969 = vmatpush1.xpose.msra.mxu0 0.0
        %1970 = vmatprep.subr.mxu0 0.0
        %1971 = vmatpush1.xpose.msra.mxu0 0.0
        %1972 = vmatprep.subr.mxu0 0.0
        %1973 = vmatpush1.xpose.msra.mxu0 0.0
        %1974 = vmatprep.mubr.f32.mxu0 0.0
        %1975 = vmatmul.mubr.f32.gmra.mrb[0].mxu0 %v1906
        %v1976 = vpop.f32.mrb[0].mxu0
        %v1977 = vadd.f32 0.0, %v1976
        %v1978 = vpop.f32.mrb[0].mxu0
        %1979 = vdwg.mxu0
        %v1980 = vmul.f32 %v1899, 0.125
        %v1981 = vmul.f32 %v1977, 0.125
        %v1982 = vadd.f32 %v1980, %v1480
        %v1983 = vadd.f32 %v1981, %v1480
        %v1984 = vsel %vm1654, %v1982, -inf
        %1985 = vmax.xlane.f32.xlu0 %v1984
        %v1986 = vpop.xlane.xlu0 %1985
        %v1987 = vsel %vm1654, %v1983, -inf
        %1988 = vmax.xlane.f32.xlu0 %v1987
        %v1989 = vpop.xlane.xlu0 %1988
        %v1990 = vsub.f32 %v1982, %v1986
        %v1991 = vsub.f32 %v1983, %v1989
        %v1992 = vmul.f32 %v1990, 1.442695
        %v1993 = vpow.pop %v1992
        %v1994 = vmul.f32 %v1991, 1.442695
        %v1995 = vpow.pop %v1994
        %v1996 = vsel %vm1654, %v1993, 0.0
        %1997 = vadd.xlane.f32.xlu0 %v1996
        %v1998 = vpop.xlane.xlu0 %1997
        %v1999 = vsel %vm1654, %v1995, 0.0
        %2000 = vadd.xlane.f32.xlu0 %v1999
        %v2001 = vpop.xlane.xlu0 %2000
        %v2002 = vrcp.pop %v1998
        %v2003 = vmul.f32 %v1993, %v2002
        %v2004 = vrcp.pop %v2001
        %v2005 = vmul.f32 %v1995, %v2004
        %2007 = vrot.lane.b32.xlu0 %v1454, 64
        %v2008 = vpop.permute.xlu0 %2007
        %v2011 = vsel %vm1654, %v2003, 0
        %2013 = vmatprep.subr.mxu0 0.0
        %2014 = vmatpush1.msra.mxu0 %v2008
        %2015 = vmatprep.subr.mxu0 0.0
        %2016 = vmatpush1.msra.mxu0 0.0
        %2017 = vmatprep.subr.mxu0 0.0
        %2018 = vmatpush1.msra.mxu0 0.0
        %2019 = vmatprep.subr.mxu0 0.0
        %2020 = vmatpush1.msra.mxu0 0.0
        %2021 = vmatprep.subr.mxu0 0.0
        %2022 = vmatpush1.msra.mxu0 0.0
        %2023 = vmatprep.subr.mxu0 0.0
        %2024 = vmatpush1.msra.mxu0 0.0
        %2025 = vmatprep.subr.mxu0 0.0
        %2026 = vmatpush1.msra.mxu0 0.0
        %2027 = vmatprep.subr.mxu0 0.0
        %2028 = vmatpush1.msra.mxu0 0.0
        %2029 = vmatprep.subr.mxu0 0.0
        %2030 = vmatpush1.msra.mxu0 0.0
        %2031 = vmatprep.subr.mxu0 0.0
        %2032 = vmatpush1.msra.mxu0 0.0
        %2033 = vmatprep.subr.mxu0 0.0
        %2034 = vmatpush1.msra.mxu0 0.0
        %2035 = vmatprep.subr.mxu0 0.0
        %2036 = vmatpush1.msra.mxu0 0.0
        %2037 = vmatprep.subr.mxu0 0.0
        %2038 = vmatpush1.msra.mxu0 0.0
        %2039 = vmatprep.subr.mxu0 0.0
        %2040 = vmatpush1.msra.mxu0 0.0
        %2041 = vmatprep.subr.mxu0 0.0
        %2042 = vmatpush1.msra.mxu0 0.0
        %2043 = vmatprep.subr.mxu0 0.0
        %2044 = vmatpush1.msra.mxu0 0.0
        %2045 = vmatprep.subr.mxu0 0.0
        %2046 = vmatpush1.msra.mxu0 0.0
        %2047 = vmatprep.subr.mxu0 0.0
        %2048 = vmatpush1.msra.mxu0 0.0
        %2049 = vmatprep.subr.mxu0 0.0
        %2050 = vmatpush1.msra.mxu0 0.0
        %2051 = vmatprep.subr.mxu0 0.0
        %2052 = vmatpush1.msra.mxu0 0.0
        %2053 = vmatprep.subr.mxu0 0.0
        %2054 = vmatpush1.msra.mxu0 0.0
        %2055 = vmatprep.subr.mxu0 0.0
        %2056 = vmatpush1.msra.mxu0 0.0
        %2057 = vmatprep.subr.mxu0 0.0
        %2058 = vmatpush1.msra.mxu0 0.0
        %2059 = vmatprep.subr.mxu0 0.0
        %2060 = vmatpush1.msra.mxu0 0.0
        %2061 = vmatprep.subr.mxu0 0.0
        %2062 = vmatpush1.msra.mxu0 0.0
        %2063 = vmatprep.subr.mxu0 0.0
        %2064 = vmatpush1.msra.mxu0 0.0
        %2065 = vmatprep.subr.mxu0 0.0
        %2066 = vmatpush1.msra.mxu0 0.0
        %2067 = vmatprep.subr.mxu0 0.0
        %2068 = vmatpush1.msra.mxu0 0.0
        %2069 = vmatprep.subr.mxu0 0.0
        %2070 = vmatpush1.msra.mxu0 0.0
        %2071 = vmatprep.subr.mxu0 0.0
        %2072 = vmatpush1.msra.mxu0 0.0
        %2073 = vmatprep.subr.mxu0 0.0
        %2074 = vmatpush1.msra.mxu0 0.0
        %2075 = vmatprep.subr.mxu0 0.0
        %2076 = vmatpush1.msra.mxu0 0.0
        %2077 = vmatprep.mubr.f32.mxu0 0.0
        %2078 = vmatmul.mubr.f32.gmra.mrb[0].mxu0 %v2011
        %v2079 = vpop.f32.mrb[0].mxu0
        %v2080 = vadd.f32 0.0, %v2079
        %v2081 = vpop.f32.mrb[0].mxu0
        %2082 = vdwg.mxu0
        %2084 = vrot.lane.b32.xlu0 %v1457, 64
        %v2085 = vpop.permute.xlu0 %2084
        %v2088 = vsel %vm1654, %v2005, 0
        %2090 = vmatprep.subr.mxu0 0.0
        %2091 = vmatpush1.msra.mxu0 %v2085
        %2092 = vmatprep.subr.mxu0 0.0
        %2093 = vmatpush1.msra.mxu0 0.0
        %2094 = vmatprep.subr.mxu0 0.0
        %2095 = vmatpush1.msra.mxu0 0.0
        %2096 = vmatprep.subr.mxu0 0.0
        %2097 = vmatpush1.msra.mxu0 0.0
        %2098 = vmatprep.subr.mxu0 0.0
        %2099 = vmatpush1.msra.mxu0 0.0
        %2100 = vmatprep.subr.mxu0 0.0
        %2101 = vmatpush1.msra.mxu0 0.0
        %2102 = vmatprep.subr.mxu0 0.0
        %2103 = vmatpush1.msra.mxu0 0.0
        %2104 = vmatprep.subr.mxu0 0.0
        %2105 = vmatpush1.msra.mxu0 0.0
        %2106 = vmatprep.subr.mxu0 0.0
        %2107 = vmatpush1.msra.mxu0 0.0
        %2108 = vmatprep.subr.mxu0 0.0
        %2109 = vmatpush1.msra.mxu0 0.0
        %2110 = vmatprep.subr.mxu0 0.0
        %2111 = vmatpush1.msra.mxu0 0.0
        %2112 = vmatprep.subr.mxu0 0.0
        %2113 = vmatpush1.msra.mxu0 0.0
        %2114 = vmatprep.subr.mxu0 0.0
        %2115 = vmatpush1.msra.mxu0 0.0
        %2116 = vmatprep.subr.mxu0 0.0
        %2117 = vmatpush1.msra.mxu0 0.0
        %2118 = vmatprep.subr.mxu0 0.0
        %2119 = vmatpush1.msra.mxu0 0.0
        %2120 = vmatprep.subr.mxu0 0.0
        %2121 = vmatpush1.msra.mxu0 0.0
        %2122 = vmatprep.subr.mxu0 0.0
        %2123 = vmatpush1.msra.mxu0 0.0
        %2124 = vmatprep.subr.mxu0 0.0
        %2125 = vmatpush1.msra.mxu0 0.0
        %2126 = vmatprep.subr.mxu0 0.0
        %2127 = vmatpush1.msra.mxu0 0.0
        %2128 = vmatprep.subr.mxu0 0.0
        %2129 = vmatpush1.msra.mxu0 0.0
        %2130 = vmatprep.subr.mxu0 0.0
        %2131 = vmatpush1.msra.mxu0 0.0
        %2132 = vmatprep.subr.mxu0 0.0
        %2133 = vmatpush1.msra.mxu0 0.0
        %2134 = vmatprep.subr.mxu0 0.0
        %2135 = vmatpush1.msra.mxu0 0.0
        %2136 = vmatprep.subr.mxu0 0.0
        %2137 = vmatpush1.msra.mxu0 0.0
        %2138 = vmatprep.subr.mxu0 0.0
        %2139 = vmatpush1.msra.mxu0 0.0
        %2140 = vmatprep.subr.mxu0 0.0
        %2141 = vmatpush1.msra.mxu0 0.0
        %2142 = vmatprep.subr.mxu0 0.0
        %2143 = vmatpush1.msra.mxu0 0.0
        %2144 = vmatprep.subr.mxu0 0.0
        %2145 = vmatpush1.msra.mxu0 0.0
        %2146 = vmatprep.subr.mxu0 0.0
        %2147 = vmatpush1.msra.mxu0 0.0
        %2148 = vmatprep.subr.mxu0 0.0
        %2149 = vmatpush1.msra.mxu0 0.0
        %2150 = vmatprep.subr.mxu0 0.0
        %2151 = vmatpush1.msra.mxu0 0.0
        %2152 = vmatprep.subr.mxu0 0.0
        %2153 = vmatpush1.msra.mxu0 0.0
        %2154 = vmatprep.mubr.f32.mxu0 0.0
        %2155 = vmatmul.mubr.f32.gmra.mrb[0].mxu0 %v2088
        %v2156 = vpop.f32.mrb[0].mxu0
        %v2157 = vadd.f32 0.0, %v2156
        %v2158 = vpop.f32.mrb[0].mxu0
        %2159 = vdwg.mxu0
        %v2160 = vpack.c.bf16 %v2157, %v2080
        %v2169 = vunpack.c.l.b16 %v1489
        %v2170 = vunpack.c.l.b16 %v1490
        %v2171 = vunpack.c.l.b16 %v1491
        %v2172 = vunpack.c.l.b16 %v1492
        %v2173 = vunpack.c.l.b16 %v1493
        %v2174 = vunpack.c.l.b16 %v1494
        %v2175 = vunpack.c.l.b16 %v1495
        %v2176 = vunpack.c.l.b16 %v1496
        %v2177 = vpack.c.b16 %v2170, %v2169
        %v2178 = vpack.c.b16 %v2172, %v2171
        %v2179 = vpack.c.b16 %v2174, %v2173
        %v2180 = vpack.c.b16 %v2176, %v2175
        %v2186 = vsel %vm1497, %v2160, 0
        %2188 = vmatprep.subr.bf16.mxu0 0
        %2189 = vmatpush1.bf16.msra.mxu0 %v2177
        %2190 = vmatprep.subr.bf16.mxu0 0
        %2191 = vmatpush1.bf16.msra.mxu0 %v2178
        %2192 = vmatprep.subr.bf16.mxu0 0
        %2193 = vmatpush1.bf16.msra.mxu0 %v2179
        %2194 = vmatprep.subr.bf16.mxu0 0
        %2195 = vmatpush1.bf16.msra.mxu0 %v2180
        %2196 = vmatprep.subr.bf16.mxu0 0
        %2197 = vmatpush1.bf16.msra.mxu0 0
        %2198 = vmatprep.subr.bf16.mxu0 0
        %2199 = vmatpush1.bf16.msra.mxu0 0
        %2200 = vmatprep.subr.bf16.mxu0 0
        %2201 = vmatpush1.bf16.msra.mxu0 0
        %2202 = vmatprep.subr.bf16.mxu0 0
        %2203 = vmatpush1.bf16.msra.mxu0 0
        %2204 = vmatprep.subr.bf16.mxu0 0
        %2205 = vmatpush1.bf16.msra.mxu0 0
        %2206 = vmatprep.subr.bf16.mxu0 0
        %2207 = vmatpush1.bf16.msra.mxu0 0
        %2208 = vmatprep.subr.bf16.mxu0 0
        %2209 = vmatpush1.bf16.msra.mxu0 0
        %2210 = vmatprep.subr.bf16.mxu0 0
        %2211 = vmatpush1.bf16.msra.mxu0 0
        %2212 = vmatprep.subr.bf16.mxu0 0
        %2213 = vmatpush1.bf16.msra.mxu0 0
        %2214 = vmatprep.subr.bf16.mxu0 0
        %2215 = vmatpush1.bf16.msra.mxu0 0
        %2216 = vmatprep.subr.bf16.mxu0 0
        %2217 = vmatpush1.bf16.msra.mxu0 0
        %2218 = vmatprep.subr.bf16.mxu0 0
        %2219 = vmatpush1.bf16.msra.mxu0 0
        %2220 = vmatprep.mubr.bf16.mxu0 0
        %2221 = vmatmul.mubr.bf16.gmra.mrb[0].mxu0 %v2186
        %v2222 = vpop.f32.mrb[0].mxu0
        %v2223 = vadd.f32 0.0, %v2222
        %v2224 = vpop.f32.mrb[0].mxu0
        %v2225 = vpop.f32.mrb[0].mxu0
        %v2226 = vadd.f32 0.0, %v2225
        %v2227 = vpop.f32.mrb[0].mxu0
        %2228 = vdwg.mxu0
        %v2237 = vunpack.c.l.b16 %v1481
        %v2238 = vunpack.c.l.b16 %v1482
        %v2239 = vunpack.c.l.b16 %v1483
        %v2240 = vunpack.c.l.b16 %v1484
        %v2241 = vunpack.c.l.b16 %v1485
        %v2242 = vunpack.c.l.b16 %v1486
        %v2243 = vunpack.c.l.b16 %v1487
        %v2244 = vunpack.c.l.b16 %v1488
        %v2245 = vpack.c.b16 %v2238, %v2237
        %v2246 = vpack.c.b16 %v2240, %v2239
        %v2247 = vpack.c.b16 %v2242, %v2241
        %v2248 = vpack.c.b16 %v2244, %v2243
        %v2254 = vsel %vm1497, %v1823, 0
        %2256 = vmatprep.subr.bf16.mxu0 0
        %2257 = vmatpush1.bf16.msra.mxu0 %v2245
        %2258 = vmatprep.subr.bf16.mxu0 0
        %2259 = vmatpush1.bf16.msra.mxu0 %v2246
        %2260 = vmatprep.subr.bf16.mxu0 0
        %2261 = vmatpush1.bf16.msra.mxu0 %v2247
        %2262 = vmatprep.subr.bf16.mxu0 0
        %2263 = vmatpush1.bf16.msra.mxu0 %v2248
        %2264 = vmatprep.subr.bf16.mxu0 0
        %2265 = vmatpush1.bf16.msra.mxu0 0
        %2266 = vmatprep.subr.bf16.mxu0 0
        %2267 = vmatpush1.bf16.msra.mxu0 0
        %2268 = vmatprep.subr.bf16.mxu0 0
        %2269 = vmatpush1.bf16.msra.mxu0 0
        %2270 = vmatprep.subr.bf16.mxu0 0
        %2271 = vmatpush1.bf16.msra.mxu0 0
        %2272 = vmatprep.subr.bf16.mxu0 0
        %2273 = vmatpush1.bf16.msra.mxu0 0
        %2274 = vmatprep.subr.bf16.mxu0 0
        %2275 = vmatpush1.bf16.msra.mxu0 0
        %2276 = vmatprep.subr.bf16.mxu0 0
        %2277 = vmatpush1.bf16.msra.mxu0 0
        %2278 = vmatprep.subr.bf16.mxu0 0
        %2279 = vmatpush1.bf16.msra.mxu0 0
        %2280 = vmatprep.subr.bf16.mxu0 0
        %2281 = vmatpush1.bf16.msra.mxu0 0
        %2282 = vmatprep.subr.bf16.mxu0 0
        %2283 = vmatpush1.bf16.msra.mxu0 0
        %2284 = vmatprep.subr.bf16.mxu0 0
        %2285 = vmatpush1.bf16.msra.mxu0 0
        %2286 = vmatprep.subr.bf16.mxu0 0
        %2287 = vmatpush1.bf16.msra.mxu0 0
        %2288 = vmatprep.mubr.bf16.mxu0 0
        %2289 = vmatmul.mubr.bf16.gmra.mrb[0].mxu0 %v2254
        %v2290 = vpop.f32.mrb[0].mxu0
        %v2291 = vadd.f32 %v2223, %v2290
        %v2292 = vpop.f32.mrb[0].mxu0
        %v2293 = vpop.f32.mrb[0].mxu0
        %v2294 = vadd.f32 %v2226, %v2293
        %v2295 = vpop.f32.mrb[0].mxu0
        %2296 = vdwg.mxu0
        %v2297 = vadd.f32 %v908, %v2291
        %v2298 = vadd.f32 %v909, %v2294
        %v2299 = vmul.f32 %v2297, %v2297
        %v2300 = vmul.f32 %v2298, %v2298
        %2301 = vadd.xlane.f32.xlu0 %v2299
        %v2302 = vpop.xlane.xlu0 %2301
        %2303 = vadd.xlane.f32.xlu0 %v2300
        %v2304 = vpop.xlane.xlu0 %2303
        %v2305 = vmul.f32 %v2302, %v916
        %v2306 = vmul.f32 %v2304, %v916
        %v2307 = vadd.f32 %v2305, 1e-06
        %v2308 = vadd.f32 %v2306, 1e-06
        %v2309 = vrsqrt.pop %v2307
        %v2310 = vrsqrt.pop %v2308
        %v2311 = vmul.f32 %v2297, %v2309
        %v2312 = vmul.f32 %v2298, %v2310
        %v2313 = vld [vmem:[%s888] sm:$0x1]
        %v2315 = vlaneseq
        %v2316 = vshrl.u32 %v2315, 7
        %v2317 = vsub.s32 0, %v2316
        %v2318 = vrot.slane %v2313, %v2317
        %v2320 = vmul.f32 %v2311, %v2318
        %v2321 = vmul.f32 %v2312, %v2318
        %v2322 = vpack.c.bf16 %v2321, %v2320
        %v2323 = vld [vmem:[%s758] sm:$0xff]
        %v2324 = vld [vmem:[%s758 + $0x8] sm:$0xff]
        %v2325 = vld [vmem:[%s758 + $0x10] sm:$0xff]
        %v2326 = vld [vmem:[%s758 + $0x18] sm:$0xff]
        %v2327 = vld [vmem:[%s758 + $0x20] sm:$0xff]
        %v2328 = vld [vmem:[%s758 + $0x28] sm:$0xff]
        %v2329 = vld [vmem:[%s758 + $0x30] sm:$0xff]
        %v2330 = vld [vmem:[%s758 + $0x38] sm:$0xff]
        %v2331 = vld [vmem:[%s758 + $0x40] sm:$0xff]
        %v2332 = vld [vmem:[%s758 + $0x48] sm:$0xff]
        %v2333 = vld [vmem:[%s758 + $0x50] sm:$0xff]
        %v2334 = vld [vmem:[%s758 + $0x58] sm:$0xff]
        %v2335 = vld [vmem:[%s758 + $0x60] sm:$0xff]
        %v2336 = vld [vmem:[%s758 + $0x68] sm:$0xff]
        %v2337 = vld [vmem:[%s758 + $0x70] sm:$0xff]
        %v2338 = vld [vmem:[%s758 + $0x78] sm:$0xff]
        %v2355 = vunpack.c.l.b16 %v2323
        %v2356 = vunpack.c.h.b16 %v2323
        %v2357 = vunpack.c.l.b16 %v2324
        %v2358 = vunpack.c.h.b16 %v2324
        %v2359 = vunpack.c.l.b16 %v2325
        %v2360 = vunpack.c.h.b16 %v2325
        %v2361 = vunpack.c.l.b16 %v2326
        %v2362 = vunpack.c.h.b16 %v2326
        %v2363 = vunpack.c.l.b16 %v2327
        %v2364 = vunpack.c.h.b16 %v2327
        %v2365 = vunpack.c.l.b16 %v2328
        %v2366 = vunpack.c.h.b16 %v2328
        %v2367 = vunpack.c.l.b16 %v2329
        %v2368 = vunpack.c.h.b16 %v2329
        %v2369 = vunpack.c.l.b16 %v2330
        %v2370 = vunpack.c.h.b16 %v2330
        %v2371 = vunpack.c.l.b16 %v2331
        %v2372 = vunpack.c.h.b16 %v2331
        %v2373 = vunpack.c.l.b16 %v2332
        %v2374 = vunpack.c.h.b16 %v2332
        %v2375 = vunpack.c.l.b16 %v2333
        %v2376 = vunpack.c.h.b16 %v2333
        %v2377 = vunpack.c.l.b16 %v2334
        %v2378 = vunpack.c.h.b16 %v2334
        %v2379 = vunpack.c.l.b16 %v2335
        %v2380 = vunpack.c.h.b16 %v2335
        %v2381 = vunpack.c.l.b16 %v2336
        %v2382 = vunpack.c.h.b16 %v2336
        %v2383 = vunpack.c.l.b16 %v2337
        %v2384 = vunpack.c.h.b16 %v2337
        %v2385 = vunpack.c.l.b16 %v2338
        %v2386 = vunpack.c.h.b16 %v2338
        %v2387 = vpack.c.b16 %v2357, %v2355
        %v2388 = vpack.c.b16 %v2358, %v2356
        %v2389 = vpack.c.b16 %v2361, %v2359
        %v2390 = vpack.c.b16 %v2362, %v2360
        %v2391 = vpack.c.b16 %v2365, %v2363
        %v2392 = vpack.c.b16 %v2366, %v2364
        %v2393 = vpack.c.b16 %v2369, %v2367
        %v2394 = vpack.c.b16 %v2370, %v2368
        %v2395 = vpack.c.b16 %v2373, %v2371
        %v2396 = vpack.c.b16 %v2374, %v2372
        %v2397 = vpack.c.b16 %v2377, %v2375
        %v2398 = vpack.c.b16 %v2378, %v2376
        %v2399 = vpack.c.b16 %v2381, %v2379
        %v2400 = vpack.c.b16 %v2382, %v2380
        %v2401 = vpack.c.b16 %v2385, %v2383
        %v2402 = vpack.c.b16 %v2386, %v2384
        %2419 = vmatprep.subr.bf16.mxu0 %v2388
        %2420 = vmatpush1.bf16.msra.mxu0 %v2387
        %2421 = vmatprep.subr.bf16.mxu0 %v2390
        %2422 = vmatpush1.bf16.msra.mxu0 %v2389
        %2423 = vmatprep.subr.bf16.mxu0 %v2392
        %2424 = vmatpush1.bf16.msra.mxu0 %v2391
        %2425 = vmatprep.subr.bf16.mxu0 %v2394
        %2426 = vmatpush1.bf16.msra.mxu0 %v2393
        %2427 = vmatprep.subr.bf16.mxu0 %v2396
        %2428 = vmatpush1.bf16.msra.mxu0 %v2395
        %2429 = vmatprep.subr.bf16.mxu0 %v2398
        %2430 = vmatpush1.bf16.msra.mxu0 %v2397
        %2431 = vmatprep.subr.bf16.mxu0 %v2400
        %2432 = vmatpush1.bf16.msra.mxu0 %v2399
        %2433 = vmatprep.subr.bf16.mxu0 %v2402
        %2434 = vmatpush1.bf16.msra.mxu0 %v2401
        %2435 = vmatprep.subr.bf16.mxu0 0
        %2436 = vmatpush1.bf16.msra.mxu0 0
        %2437 = vmatprep.subr.bf16.mxu0 0
        %2438 = vmatpush1.bf16.msra.mxu0 0
        %2439 = vmatprep.subr.bf16.mxu0 0
        %2440 = vmatpush1.bf16.msra.mxu0 0
        %2441 = vmatprep.subr.bf16.mxu0 0
        %2442 = vmatpush1.bf16.msra.mxu0 0
        %2443 = vmatprep.subr.bf16.mxu0 0
        %2444 = vmatpush1.bf16.msra.mxu0 0
        %2445 = vmatprep.subr.bf16.mxu0 0
        %2446 = vmatpush1.bf16.msra.mxu0 0
        %2447 = vmatprep.subr.bf16.mxu0 0
        %2448 = vmatpush1.bf16.msra.mxu0 0
        %2449 = vmatprep.subr.bf16.mxu0 0
        %2450 = vmatpush1.bf16.msra.mxu0 0
        %2451 = vmatprep.mubr.bf16.mxu0 0
        %2452 = vmatmul.mubr.bf16.gmra.mrb[0].mxu0 %v2322
        %v2453 = vpop.f32.mrb[0].mxu0
        %v2454 = vadd.f32 0.0, %v2453
        %v2455 = vpop.f32.mrb[0].mxu0
        %v2456 = vadd.f32 0.0, %v2455
        %v2457 = vpop.f32.mrb[0].mxu0
        %v2458 = vadd.f32 0.0, %v2457
        %v2459 = vpop.f32.mrb[0].mxu0
        %v2460 = vadd.f32 0.0, %v2459
        %2461 = vdwg.mxu0
        %v2462 = vld [vmem:[%s767] sm:$0xff]
        %v2463 = vld [vmem:[%s767 + $0x8] sm:$0xff]
        %v2464 = vld [vmem:[%s767 + $0x10] sm:$0xff]
        %v2465 = vld [vmem:[%s767 + $0x18] sm:$0xff]
        %v2466 = vld [vmem:[%s767 + $0x20] sm:$0xff]
        %v2467 = vld [vmem:[%s767 + $0x28] sm:$0xff]
        %v2468 = vld [vmem:[%s767 + $0x30] sm:$0xff]
        %v2469 = vld [vmem:[%s767 + $0x38] sm:$0xff]
        %v2470 = vld [vmem:[%s767 + $0x40] sm:$0xff]
        %v2471 = vld [vmem:[%s767 + $0x48] sm:$0xff]
        %v2472 = vld [vmem:[%s767 + $0x50] sm:$0xff]
        %v2473 = vld [vmem:[%s767 + $0x58] sm:$0xff]
        %v2474 = vld [vmem:[%s767 + $0x60] sm:$0xff]
        %v2475 = vld [vmem:[%s767 + $0x68] sm:$0xff]
        %v2476 = vld [vmem:[%s767 + $0x70] sm:$0xff]
        %v2477 = vld [vmem:[%s767 + $0x78] sm:$0xff]
        %v2494 = vunpack.c.l.b16 %v2462
        %v2495 = vunpack.c.h.b16 %v2462
        %v2496 = vunpack.c.l.b16 %v2463
        %v2497 = vunpack.c.h.b16 %v2463
        %v2498 = vunpack.c.l.b16 %v2464
        %v2499 = vunpack.c.h.b16 %v2464
        %v2500 = vunpack.c.l.b16 %v2465
        %v2501 = vunpack.c.h.b16 %v2465
        %v2502 = vunpack.c.l.b16 %v2466
        %v2503 = vunpack.c.h.b16 %v2466
        %v2504 = vunpack.c.l.b16 %v2467
        %v2505 = vunpack.c.h.b16 %v2467
        %v2506 = vunpack.c.l.b16 %v2468
        %v2507 = vunpack.c.h.b16 %v2468
        %v2508 = vunpack.c.l.b16 %v2469
        %v2509 = vunpack.c.h.b16 %v2469
        %v2510 = vunpack.c.l.b16 %v2470
        %v2511 = vunpack.c.h.b16 %v2470
        %v2512 = vunpack.c.l.b16 %v2471
        %v2513 = vunpack.c.h.b16 %v2471
        %v2514 = vunpack.c.l.b16 %v2472
        %v2515 = vunpack.c.h.b16 %v2472
        %v2516 = vunpack.c.l.b16 %v2473
        %v2517 = vunpack.c.h.b16 %v2473
        %v2518 = vunpack.c.l.b16 %v2474
        %v2519 = vunpack.c.h.b16 %v2474
        %v2520 = vunpack.c.l.b16 %v2475
        %v2521 = vunpack.c.h.b16 %v2475
        %v2522 = vunpack.c.l.b16 %v2476
        %v2523 = vunpack.c.h.b16 %v2476
        %v2524 = vunpack.c.l.b16 %v2477
        %v2525 = vunpack.c.h.b16 %v2477
        %v2526 = vpack.c.b16 %v2496, %v2494
        %v2527 = vpack.c.b16 %v2497, %v2495
        %v2528 = vpack.c.b16 %v2500, %v2498
        %v2529 = vpack.c.b16 %v2501, %v2499
        %v2530 = vpack.c.b16 %v2504, %v2502
        %v2531 = vpack.c.b16 %v2505, %v2503
        %v2532 = vpack.c.b16 %v2508, %v2506
        %v2533 = vpack.c.b16 %v2509, %v2507
        %v2534 = vpack.c.b16 %v2512, %v2510
        %v2535 = vpack.c.b16 %v2513, %v2511
        %v2536 = vpack.c.b16 %v2516, %v2514
        %v2537 = vpack.c.b16 %v2517, %v2515
        %v2538 = vpack.c.b16 %v2520, %v2518
        %v2539 = vpack.c.b16 %v2521, %v2519
        %v2540 = vpack.c.b16 %v2524, %v2522
        %v2541 = vpack.c.b16 %v2525, %v2523
        %2558 = vmatprep.subr.bf16.mxu0 %v2527
        %2559 = vmatpush1.bf16.msra.mxu0 %v2526
        %2560 = vmatprep.subr.bf16.mxu0 %v2529
        %2561 = vmatpush1.bf16.msra.mxu0 %v2528
        %2562 = vmatprep.subr.bf16.mxu0 %v2531
        %2563 = vmatpush1.bf16.msra.mxu0 %v2530
        %2564 = vmatprep.subr.bf16.mxu0 %v2533
        %2565 = vmatpush1.bf16.msra.mxu0 %v2532
        %2566 = vmatprep.subr.bf16.mxu0 %v2535
        %2567 = vmatpush1.bf16.msra.mxu0 %v2534
        %2568 = vmatprep.subr.bf16.mxu0 %v2537
        %2569 = vmatpush1.bf16.msra.mxu0 %v2536
        %2570 = vmatprep.subr.bf16.mxu0 %v2539
        %2571 = vmatpush1.bf16.msra.mxu0 %v2538
        %2572 = vmatprep.subr.bf16.mxu0 %v2541
        %2573 = vmatpush1.bf16.msra.mxu0 %v2540
        %2574 = vmatprep.subr.bf16.mxu0 0
        %2575 = vmatpush1.bf16.msra.mxu0 0
        %2576 = vmatprep.subr.bf16.mxu0 0
        %2577 = vmatpush1.bf16.msra.mxu0 0
        %2578 = vmatprep.subr.bf16.mxu0 0
        %2579 = vmatpush1.bf16.msra.mxu0 0
        %2580 = vmatprep.subr.bf16.mxu0 0
        %2581 = vmatpush1.bf16.msra.mxu0 0
        %2582 = vmatprep.subr.bf16.mxu0 0
        %2583 = vmatpush1.bf16.msra.mxu0 0
        %2584 = vmatprep.subr.bf16.mxu0 0
        %2585 = vmatpush1.bf16.msra.mxu0 0
        %2586 = vmatprep.subr.bf16.mxu0 0
        %2587 = vmatpush1.bf16.msra.mxu0 0
        %2588 = vmatprep.subr.bf16.mxu0 0
        %2589 = vmatpush1.bf16.msra.mxu0 0
        %2590 = vmatprep.mubr.bf16.mxu0 0
        %2591 = vmatmul.mubr.bf16.gmra.mrb[0].mxu0 %v2322
        %v2592 = vpop.f32.mrb[0].mxu0
        %v2593 = vadd.f32 0.0, %v2592
        %v2594 = vpop.f32.mrb[0].mxu0
        %v2595 = vadd.f32 0.0, %v2594
        %v2596 = vpop.f32.mrb[0].mxu0
        %v2597 = vadd.f32 0.0, %v2596
        %v2598 = vpop.f32.mrb[0].mxu0
        %v2599 = vadd.f32 0.0, %v2598
        %2600 = vdwg.mxu0
        %v2601 = vxor.u32 %v2454, 2147483648
        %v2602 = vxor.u32 %v2456, 2147483648
        %v2603 = vxor.u32 %v2458, 2147483648
        %v2604 = vxor.u32 %v2460, 2147483648
        %v2605 = vmul.f32 %v2601, 1.442695
        %v2606 = vpow.pop %v2605
        %v2607 = vmul.f32 %v2602, 1.442695
        %v2608 = vpow.pop %v2607
        %v2609 = vmul.f32 %v2603, 1.442695
        %v2610 = vpow.pop %v2609
        %v2611 = vmul.f32 %v2604, 1.442695
        %v2612 = vpow.pop %v2611
        %v2613 = vadd.f32 %v2606, 1.0
        %v2614 = vadd.f32 %v2608, 1.0
        %v2615 = vadd.f32 %v2610, 1.0
        %v2616 = vadd.f32 %v2612, 1.0
        %v2617 = vrcp.pop %v2613
        %v2618 = vmul.f32 1.0, %v2617
        %v2619 = vrcp.pop %v2614
        %v2620 = vmul.f32 1.0, %v2619
        %v2621 = vrcp.pop %v2615
        %v2622 = vmul.f32 1.0, %v2621
        %v2623 = vrcp.pop %v2616
        %v2624 = vmul.f32 1.0, %v2623
        %v2625 = vmul.f32 %v2454, %v2618
        %v2626 = vmul.f32 %v2456, %v2620
        %v2627 = vmul.f32 %v2458, %v2622
        %v2628 = vmul.f32 %v2460, %v2624
        %v2629 = vmul.f32 %v2625, %v2593
        %v2630 = vmul.f32 %v2626, %v2595
        %v2631 = vmul.f32 %v2627, %v2597
        %v2632 = vmul.f32 %v2628, %v2599
        %v2633 = vpack.c.bf16 %v2631, %v2629
        %v2634 = vpack.c.bf16 %v2632, %v2630
        %v2635 = vld [vmem:[%s776] sm:$0xf]
        %v2636 = vld [vmem:[%s776 + $0x4] sm:$0xf]
        %v2637 = vld [vmem:[%s776 + $0x8] sm:$0xf]
        %v2638 = vld [vmem:[%s776 + $0xc] sm:$0xf]
        %v2639 = vld [vmem:[%s776 + $0x10] sm:$0xf]
        %v2640 = vld [vmem:[%s776 + $0x14] sm:$0xf]
        %v2641 = vld [vmem:[%s776 + $0x18] sm:$0xf]
        %v2642 = vld [vmem:[%s776 + $0x1c] sm:$0xf]
        %v2643 = vld [vmem:[%s776 + $0x20] sm:$0xf]
        %v2644 = vld [vmem:[%s776 + $0x24] sm:$0xf]
        %v2645 = vld [vmem:[%s776 + $0x28] sm:$0xf]
        %v2646 = vld [vmem:[%s776 + $0x2c] sm:$0xf]
        %v2647 = vld [vmem:[%s776 + $0x30] sm:$0xf]
        %v2648 = vld [vmem:[%s776 + $0x34] sm:$0xf]
        %v2649 = vld [vmem:[%s776 + $0x38] sm:$0xf]
        %v2650 = vld [vmem:[%s776 + $0x3c] sm:$0xf]
        %v2651 = vld [vmem:[%s776 + $0x40] sm:$0xf]
        %v2652 = vld [vmem:[%s776 + $0x44] sm:$0xf]
        %v2653 = vld [vmem:[%s776 + $0x48] sm:$0xf]
        %v2654 = vld [vmem:[%s776 + $0x4c] sm:$0xf]
        %v2655 = vld [vmem:[%s776 + $0x50] sm:$0xf]
        %v2656 = vld [vmem:[%s776 + $0x54] sm:$0xf]
        %v2657 = vld [vmem:[%s776 + $0x58] sm:$0xf]
        %v2658 = vld [vmem:[%s776 + $0x5c] sm:$0xf]
        %v2659 = vld [vmem:[%s776 + $0x60] sm:$0xf]
        %v2660 = vld [vmem:[%s776 + $0x64] sm:$0xf]
        %v2661 = vld [vmem:[%s776 + $0x68] sm:$0xf]
        %v2662 = vld [vmem:[%s776 + $0x6c] sm:$0xf]
        %v2663 = vld [vmem:[%s776 + $0x70] sm:$0xf]
        %v2664 = vld [vmem:[%s776 + $0x74] sm:$0xf]
        %v2665 = vld [vmem:[%s776 + $0x78] sm:$0xf]
        %v2666 = vld [vmem:[%s776 + $0x7c] sm:$0xf]
        %v2699 = vunpack.c.l.b16 %v2635
        %v2700 = vunpack.c.l.b16 %v2636
        %v2701 = vunpack.c.l.b16 %v2637
        %v2702 = vunpack.c.l.b16 %v2638
        %v2703 = vunpack.c.l.b16 %v2639
        %v2704 = vunpack.c.l.b16 %v2640
        %v2705 = vunpack.c.l.b16 %v2641
        %v2706 = vunpack.c.l.b16 %v2642
        %v2707 = vunpack.c.l.b16 %v2643
        %v2708 = vunpack.c.l.b16 %v2644
        %v2709 = vunpack.c.l.b16 %v2645
        %v2710 = vunpack.c.l.b16 %v2646
        %v2711 = vunpack.c.l.b16 %v2647
        %v2712 = vunpack.c.l.b16 %v2648
        %v2713 = vunpack.c.l.b16 %v2649
        %v2714 = vunpack.c.l.b16 %v2650
        %v2715 = vunpack.c.l.b16 %v2651
        %v2716 = vunpack.c.l.b16 %v2652
        %v2717 = vunpack.c.l.b16 %v2653
        %v2718 = vunpack.c.l.b16 %v2654
        %v2719 = vunpack.c.l.b16 %v2655
        %v2720 = vunpack.c.l.b16 %v2656
        %v2721 = vunpack.c.l.b16 %v2657
        %v2722 = vunpack.c.l.b16 %v2658
        %v2723 = vunpack.c.l.b16 %v2659
        %v2724 = vunpack.c.l.b16 %v2660
        %v2725 = vunpack.c.l.b16 %v2661
        %v2726 = vunpack.c.l.b16 %v2662
        %v2727 = vunpack.c.l.b16 %v2663
        %v2728 = vunpack.c.l.b16 %v2664
        %v2729 = vunpack.c.l.b16 %v2665
        %v2730 = vunpack.c.l.b16 %v2666
        %v2731 = vpack.c.b16 %v2700, %v2699
        %v2732 = vpack.c.b16 %v2702, %v2701
        %v2733 = vpack.c.b16 %v2704, %v2703
        %v2734 = vpack.c.b16 %v2706, %v2705
        %v2735 = vpack.c.b16 %v2708, %v2707
        %v2736 = vpack.c.b16 %v2710, %v2709
        %v2737 = vpack.c.b16 %v2712, %v2711
        %v2738 = vpack.c.b16 %v2714, %v2713
        %v2739 = vpack.c.b16 %v2716, %v2715
        %v2740 = vpack.c.b16 %v2718, %v2717
        %v2741 = vpack.c.b16 %v2720, %v2719
        %v2742 = vpack.c.b16 %v2722, %v2721
        %v2743 = vpack.c.b16 %v2724, %v2723
        %v2744 = vpack.c.b16 %v2726, %v2725
        %v2745 = vpack.c.b16 %v2728, %v2727
        %v2746 = vpack.c.b16 %v2730, %v2729
        %2763 = vmatprep.subr.bf16.mxu0 0
        %2764 = vmatpush1.bf16.msra.mxu0 %v2731
        %2765 = vmatprep.subr.bf16.mxu0 0
        %2766 = vmatpush1.bf16.msra.mxu0 %v2732
        %2767 = vmatprep.subr.bf16.mxu0 0
        %2768 = vmatpush1.bf16.msra.mxu0 %v2733
        %2769 = vmatprep.subr.bf16.mxu0 0
        %2770 = vmatpush1.bf16.msra.mxu0 %v2734
        %2771 = vmatprep.subr.bf16.mxu0 0
        %2772 = vmatpush1.bf16.msra.mxu0 %v2735
        %2773 = vmatprep.subr.bf16.mxu0 0
        %2774 = vmatpush1.bf16.msra.mxu0 %v2736
        %2775 = vmatprep.subr.bf16.mxu0 0
        %2776 = vmatpush1.bf16.msra.mxu0 %v2737
        %2777 = vmatprep.subr.bf16.mxu0 0
        %2778 = vmatpush1.bf16.msra.mxu0 %v2738
        %2779 = vmatprep.subr.bf16.mxu0 0
        %2780 = vmatpush1.bf16.msra.mxu0 %v2739
        %2781 = vmatprep.subr.bf16.mxu0 0
        %2782 = vmatpush1.bf16.msra.mxu0 %v2740
        %2783 = vmatprep.subr.bf16.mxu0 0
        %2784 = vmatpush1.bf16.msra.mxu0 %v2741
        %2785 = vmatprep.subr.bf16.mxu0 0
        %2786 = vmatpush1.bf16.msra.mxu0 %v2742
        %2787 = vmatprep.subr.bf16.mxu0 0
        %2788 = vmatpush1.bf16.msra.mxu0 %v2743
        %2789 = vmatprep.subr.bf16.mxu0 0
        %2790 = vmatpush1.bf16.msra.mxu0 %v2744
        %2791 = vmatprep.subr.bf16.mxu0 0
        %2792 = vmatpush1.bf16.msra.mxu0 %v2745
        %2793 = vmatprep.subr.bf16.mxu0 0
        %2794 = vmatpush1.bf16.msra.mxu0 %v2746
        %2795 = vmatprep.mubr.bf16.mxu0 %v2634
        %2796 = vmatmul.mubr.bf16.gmra.mrb[0].mxu0 %v2633
        %v2797 = vpop.f32.mrb[0].mxu0
        %v2798 = vadd.f32 0.0, %v2797
        %v2799 = vpop.f32.mrb[0].mxu0
        %v2800 = vpop.f32.mrb[0].mxu0
        %v2801 = vadd.f32 0.0, %v2800
        %v2802 = vpop.f32.mrb[0].mxu0
        %2803 = vdwg.mxu0
        %v2804 = vadd.f32 %v2297, %v2798
        %v2805 = vadd.f32 %v2298, %v2801
        %2806 = vst [vmem:[#allocation16] sm:$0xff] %v2804
        %2807 = vst [vmem:[#allocation16 + $0x8] sm:$0xff] %v2805
        %p2808 = scmp.lt.s32.totalorder %s45, 1
        %s2809 = scalar_select %p2808, %s45, 1
        %s2810 = smul.addr %s2809, 2
        %s2811 = smul.addr %s2810, 8
        %s2812 = scalar_lea.vmem %s16, %s2811
        %p2813 = scmp.lt.s32.totalorder %s45, 1
        %s2814 = scalar_select %p2813, %s45, 1
        %s2815 = smul.addr %s2814, 2
        %s2816 = smul.addr %s2815, 8
        %s2817 = scalar_lea.vmem %s17, %s2816
        // Predicated region
        $region117: #{_lalama_forward_jit.1} parent=79 // pred_check
          %p2818 = pneg %p428
        $region118: #{_lalama_forward_jit.1} parent=79 // pred_check_branch
          %2820 = sbr.rel (%p2818) target = $region120
        $region119: #{_lalama_forward_jit.1} parent=79 // pred_region
          %s2822 = ssub.s32 256, 256
          %2823 = vsyncadd [#allocation4], %s2822
          %s2824 = sshll.u32 [#allocation16], 4
          %s2825 = int_to_ptr.vmem [resolvable:$true] %s2824
          %2830 = dma.vmem_to_hbm [thread:$0]  %s2825, 256, %s15, [#allocation4], 128, 128, 8
        $region120: #{_lalama_forward_jit.1} parent=79 // pred_fallthru
          _
        // Predicated region
        $region121: #{_lalama_forward_jit.1} parent=79 // pred_check
          %p2831 = pneg %p454
        $region122: #{_lalama_forward_jit.1} parent=79 // pred_check_branch
          %2833 = sbr.rel (%p2831) target = $region124
        $region123: #{_lalama_forward_jit.1} parent=79 // pred_region
          _
        $region124: #{_lalama_forward_jit.1} parent=79 // pred_fallthru
          _
        // Predicated region
        $region125: #{_lalama_forward_jit.1} parent=79 // pred_check
          %p2834 = pneg %p480
        $region126: #{_lalama_forward_jit.1} parent=79 // pred_check_branch
          %2836 = sbr.rel (%p2834) target = $region128
        $region127: #{_lalama_forward_jit.1} parent=79 // pred_region
          _
        $region128: #{_lalama_forward_jit.1} parent=79 // pred_fallthru
          _
        // Predicated region
        $region129: #{_lalama_forward_jit.1} parent=79 // pred_check
          %p2837 = pneg %p428
        $region130: #{_lalama_forward_jit.1} parent=79 // pred_check_branch
          %2839 = sbr.rel (%p2837) target = $region132
        $region131: #{_lalama_forward_jit.1} parent=79 // pred_region
          %2840 = dma.done [#allocation4], 256
        $region132: #{_lalama_forward_jit.1} parent=79 // pred_fallthru
          _
      $region80: #{_lalama_forward_jit.1} parent=5 // pred_fallthru
        _
      %p2841 = scmp.le.s32.totalorder 2, %s40
      // Predicated region
      $region133: #{_lalama_forward_jit.1} parent=5 // pred_check
        %p2842 = pneg %p2841
      $region134: #{_lalama_forward_jit.1} parent=5 // pred_check_branch
        %2844 = sbr.rel (%p2842) target = $region136
      $region135: #{_lalama_forward_jit.1} parent=5 // pred_region
        %s2845 = ssub.s32 %s40, 2
        // Predicated region
        $region137: #{_lalama_forward_jit.1} parent=135 // pred_check
          %p2846 = pneg %p460
        $region138: #{_lalama_forward_jit.1} parent=135 // pred_check_branch
          %2848 = sbr.rel (%p2846) target = $region140
        $region139: #{_lalama_forward_jit.1} parent=135 // pred_region
          %p2849 = scmp.lt.s32.totalorder %s46, 1
          %s2850 = scalar_select %p2849, %s46, 1
          %s2851 = smul.addr %s2850, 2
          %s2852 = smul.addr %s2851, 8
          %s2853 = scalar_lea.vmem %s16, %s2852
        $region140: #{_lalama_forward_jit.1} parent=135 // pred_fallthru
          _
        // Predicated region
        $region141: #{_lalama_forward_jit.1} parent=135 // pred_check
          %p2854 = pneg %p486
        $region142: #{_lalama_forward_jit.1} parent=135 // pred_check_branch
          %2856 = sbr.rel (%p2854) target = $region144
        $region143: #{_lalama_forward_jit.1} parent=135 // pred_region
          %p2857 = scmp.lt.s32.totalorder %s46, 1
          %s2858 = scalar_select %p2857, %s46, 1
          %s2859 = smul.addr %s2858, 2
          %s2860 = smul.addr %s2859, 8
          %s2861 = scalar_lea.vmem %s17, %s2860
        $region144: #{_lalama_forward_jit.1} parent=135 // pred_fallthru
          _
      $region136: #{_lalama_forward_jit.1} parent=5 // pred_fallthru
        _
    $region6: #{_lalama_forward_jit.1} parent=1 // loop_footer
      %s44 = sadd.s32 1, %s40
    $region7: #{_lalama_forward_jit.1} parent=1 // loop_footer_branch
      %39 = sbr.rel target = $region3
    $region8: #{_lalama_forward_jit.1} parent=1 // loop_exit
      _
    %2862 = vsyncpa [#allocation3], 1
    %s2863 = scalar_lea.sflag [#allocation3], 1
    %2864 = vsyncpa %s2863, 1
    %2865 = vsyncpa [#allocation6], 1
    %s2866 = scalar_lea.sflag [#allocation6], 1
    %2867 = vsyncpa %s2866, 1
    %2868 = vsyncpa [#allocation9], 1
    %s2869 = scalar_lea.sflag [#allocation9], 1
    %2870 = vsyncpa %s2869, 1
    %2871 = vsyncpa [#allocation12], 1
    %s2872 = scalar_lea.sflag [#allocation12], 1
    %2873 = vsyncpa %s2872, 1
    %2874 = vsyncpa [#allocation15], 1
    %s2875 = scalar_lea.sflag [#allocation15], 1
    %2876 = vsyncpa %s2875, 1
    %2877 = vsyncpa [#allocation4], 1
    %s2878 = scalar_lea.sflag [#allocation4], 1
    %2879 = vsyncpa %s2878, 1

</llo_original>
